<compile_context>
chip_gen: v6e
topology: v6e:2x2x1
jax: 0.10.0
libtpu: 0.0.40
codegen_flags: <defaults>
</compile_context>

<pallas_src>
import functools
import numpy as np
import jax
import jax.numpy as jnp
from jax import lax
from jax.experimental import pallas as pl
from jax.experimental.pallas import tpu as pltpu


def _conv3x3_kernel(x_ref, scale_ref, shift_ref, w_ref, o_ref, y_pad, *,
                    stride, H, W, H_out, W_out, Wd, precision):
    """One (batch element, C_out tile) grid step.

    x_ref:     (H, W, C_in)        raw NHWC input slice (batch squeezed)
    scale_ref: (1, C_in)           folded BN scale = gamma / sqrt(var + eps)
    shift_ref: (1, C_in)           folded BN shift = beta - mean * scale
    w_ref:     (9*C_in, TCO)       conv weights, row index = (kh*3+kw)*C_in+ci
    o_ref:     (H_out, W_out, TCO) output tile
    y_pad:     (S, S, Hh, Wh, C_in) persistent scratch: ReLU+BN'd activation,
               zero-padded and polyphase split so y_pad[pr, pc, r, c, :] ==
               padded[S*r + pr, S*c + pc, :].  Every conv tap (any stride) is a
               unit-stride slice of one parity plane.
    """
    S = stride
    C_in = x_ref.shape[-1]
    TCO = o_ref.shape[-1]
    cdt = y_pad.dtype
    j = pl.program_id(1)

    # ---- build the padded activation once per batch element (j == 0) --------
    # The halo ring / slack cells are never written and stay zero, which
    # restores Conv2d's zero padding applied AFTER ReLU+BN.
    @pl.when(j == 0)
    def _():
        y_pad[...] = jnp.zeros_like(y_pad)
        scale = scale_ref[...].reshape(1, 1, C_in)
        shift = shift_ref[...].reshape(1, 1, C_in)
        for qc in range(S):                        # input column parity
            n_c = (W - qc + S - 1) // S
            if n_c <= 0:
                continue
            pc, c0 = (qc + 1) % S, (qc + 1) // S
            if S == 1:
                cols = x_ref[...]                  # (H, W, C_in)
            else:                                  # strided (de-interleaving) load
                cols = x_ref[:, pl.ds(qc, n_c, stride=S), :]
            act = (jnp.maximum(cols, 0.0) * scale + shift).astype(cdt)
            for qr in range(S):                    # input row parity
                n_r = (H - qr + S - 1) // S
                if n_r <= 0:
                    continue
                pr, r0 = (qr + 1) % S, (qr + 1) // S
                rows = act if S == 1 else act[qr::S]   # leading-dim slab select
                y_pad[pr, pc, r0:r0 + n_r, c0:c0 + n_c, :] = rows

    # ---- im2col + single MXU matmul (K = 9*C_in) -----------------------------
    taps = []
    for kh in range(3):
        pr, r0 = kh % S, kh // S
        for kw in range(3):
            pc, c0 = kw % S, kw // S
            taps.append(y_pad[pr, pc, r0:r0 + H_out, c0:c0 + Wd, :])
    patch = jnp.concatenate(taps, axis=-1)                 # (H_out, Wd, 9*C_in)
    patch = patch.reshape(H_out * Wd, 9 * C_in)            # Wd % 8 == 0: free

    res = jnp.dot(patch, w_ref[...],
                  preferred_element_type=jnp.float32,
                  precision=precision)                     # (H_out*Wd, TCO) f32
    res = res.reshape(H_out, Wd, TCO)[:, :W_out, :]
    o_ref[...] = res.astype(o_ref.dtype)


def _plane_extent(L_in, L_out, S):
    """Rows/cols needed per parity plane of the padded, polyphase scratch."""
    need_read = L_out + 2 // S
    need_write = max(((q + 1) // S) + ((L_in - q + S - 1) // S)
                     for q in range(min(S, L_in)))
    return max(need_read, need_write)


def conv3x3_forward(x, conv_w, gamma, beta, running_mean, running_var, *,
                    stride=1, eps=1e-5, use_bf16=False, precision=None):
    """x: (N, C_in, H, W) f32 NCHW; conv_w: (C_out, C_in, 3, 3) OIHW (PyTorch)."""
    N, C_in, H, W = x.shape
    C_out = conv_w.shape[0]
    S = int(stride)
    H_out = (H - 1) // S + 1               # k=3, pad=1
    W_out = (W - 1) // S + 1
    Wd = -(-W_out // 8) * 8                # matmul M-dim rounding (free reshape)
    Hh = _plane_extent(H, H_out, S)
    Wh = _plane_extent(W, Wd, S)

    cdt = jnp.bfloat16 if use_bf16 else jnp.float32
    itemsize = 2 if use_bf16 else 4

    # Fold eval-mode BatchNorm into a per-channel affine applied after ReLU.
    scale1 = gamma / jnp.sqrt(running_var + eps)
    shift1 = beta - running_mean * scale1
    scale = scale1.astype(jnp.float32).reshape(1, C_in)
    shift = shift1.astype(jnp.float32).reshape(1, C_in)

    # NCHW -> NHWC (channels on the 128-lane axis). No wrapper-side padding —
    # the kernel assembles the zero-padded halo inside a VMEM scratch.
    x_nhwc = jnp.transpose(x, (0, 2, 3, 1))

    # OIHW -> (9*C_in, C_out): the whole 3x3 conv becomes one matmul with
    # contraction depth 9*C_in. bf16 cast happens here (once), not per tap.
    w_mat = jnp.transpose(conv_w, (2, 3, 1, 0)).reshape(9 * C_in, C_out).astype(cdt)

    if C_out % 256 == 0:
        TCO = 256           # fills v6e/v7x 2x256 MXU; v5e handles it as 2x128
    elif C_out % 128 == 0:
        TCO = 128
    else:
        TCO = C_out         # TODO(synk): pad C_out to a lane multiple for speed
    n_co = C_out // TCO

    kernel = functools.partial(_conv3x3_kernel, stride=S, H=H, W=W,
                               H_out=H_out, W_out=W_out, Wd=Wd,
                               precision=precision)

    flops = 2 * N * H_out * Wd * 9 * C_in * C_out
    bytes_accessed = (4 * x.size + itemsize * w_mat.size
                      + 4 * N * H_out * W_out * C_out + 8 * C_in)

    block_bytes = (2 * 4 * H * W * C_in                   # input (double buffered)
                   + 2 * itemsize * 9 * C_in * TCO        # weights (double buffered)
                   + 2 * 4 * H_out * W_out * TCO          # output (double buffered)
                   + itemsize * S * S * Hh * Wh * C_in    # padded activation scratch
                   + itemsize * H_out * Wd * 9 * C_in     # im2col patch
                   + 4 * H_out * Wd * TCO)                # f32 matmul result
    # Leave headroom on v7x (64 MiB/TC): never request more than 48 MiB.
    vmem_limit = int(min(max(int(1.5 * block_bytes), 32 * 2**20), 48 * 2**20))

    out_nhwc = pl.pallas_call(
        kernel,
        out_shape=jax.ShapeDtypeStruct((N, H_out, W_out, C_out), x.dtype),
        grid_spec=pltpu.PrefetchScalarGridSpec(
            num_scalar_prefetch=0,
            grid=(N, n_co),
            in_specs=[
                pl.BlockSpec((None, H, W, C_in), lambda n, j: (n, 0, 0, 0)),
                pl.BlockSpec((1, C_in), lambda n, j: (0, 0)),
                pl.BlockSpec((1, C_in), lambda n, j: (0, 0)),
                pl.BlockSpec((9 * C_in, TCO), lambda n, j: (0, j)),
            ],
            out_specs=pl.BlockSpec((None, H_out, W_out, TCO),
                                   lambda n, j: (n, 0, 0, j)),
            scratch_shapes=[pltpu.VMEM((S, S, Hh, Wh, C_in), cdt)],
        ),
        compiler_params=pltpu.CompilerParams(
            # The C_out-tile axis must stay "arbitrary": the activation scratch
            # is built at j == 0 and reused by the remaining tiles of the same
            # batch element. The batch axis is safe to core-split.
            dimension_semantics=("parallel", "arbitrary"),
            vmem_limit_bytes=vmem_limit),
        cost_estimate=pl.CostEstimate(flops=flops, transcendentals=0,
                                      bytes_accessed=bytes_accessed),
    )(x_nhwc, scale, shift, w_mat)

    # Back to the PyTorch NCHW layout.
    return jnp.transpose(out_nhwc, (0, 3, 1, 2))


def reference_forward(x, conv_w, gamma, beta, running_mean, running_var, *,
                      stride=1, eps=1e-5):
    """Pure-JAX reference: ReLU -> BatchNorm2d (eval) -> Conv2d(3x3, pad=1)."""
    y = jnp.maximum(x, 0.0)
    inv = 1.0 / jnp.sqrt(running_var + eps)
    y = (y - running_mean[None, :, None, None]) * inv[None, :, None, None]
    y = y * gamma[None, :, None, None] + beta[None, :, None, None]
    return lax.conv_general_dilated(
        y, conv_w, window_strides=(stride, stride),
        padding=((1, 1), (1, 1)),
        dimension_numbers=("NCHW", "OIHW", "NCHW"),
        precision=lax.Precision.HIGHEST)


if __name__ == "__main__":
    key = jax.random.PRNGKey(0)

    configs = [
        # (N, C_in, C_out, H, W, stride, use_bf16, precision, rtol, atol)
        # Exact-precision configs validate the im2col / polyphase indexing.
        (2, 32, 128, 15, 15, 1, False, lax.Precision.HIGHEST, 2e-4, 2e-4),
        (2, 64, 384, 15, 15, 2, False, lax.Precision.HIGHEST, 2e-4, 2e-4),
        # Production paths: single-pass MXU (default precision) and bf16.
        (2, 32, 256, 16, 16, 1, False, None, 2e-2, 2e-2),
        (2, 64, 256, 16, 16, 2, True, None, 1e-1, 1e-1),
    ]
    for idx, (N, C_in, C_out, H, W, stride, use_bf16, prec, rtol, atol) \
            in enumerate(configs):
        ks = jax.random.split(jax.random.fold_in(key, idx), 6)
        x = jax.random.normal(ks[0], (N, C_in, H, W), jnp.float32)
        w = jax.random.normal(ks[1], (C_out, C_in, 3, 3), jnp.float32) * 0.1
        gamma = 1.0 + 0.1 * jax.random.normal(ks[2], (C_in,), jnp.float32)
        beta = 0.1 * jax.random.normal(ks[3], (C_in,), jnp.float32)
        mean = 0.1 * jax.random.normal(ks[4], (C_in,), jnp.float32)
        var = jax.random.uniform(ks[5], (C_in,), jnp.float32,
                                 minval=0.5, maxval=1.5)

        out = jax.block_until_ready(
            conv3x3_forward(x, w, gamma, beta, mean, var, stride=stride,
                            use_bf16=use_bf16, precision=prec))
        ref = jax.block_until_ready(
            reference_forward(x, w, gamma, beta, mean, var, stride=stride))
        assert out.shape == ref.shape, (out.shape, ref.shape)
        np.testing.assert_allclose(np.asarray(out), np.asarray(ref),
                                   rtol=rtol, atol=atol)

    print("KERNEL_OK")
</pallas_src>

<mosaic_0001>
module attributes {stable_mosaic.version = 11 : i64} {
  func.func @_conv3x3_kernel(%arg0: i32, %arg1: i32, %arg2: memref<1x15x15x32xf32, #tpu.memory_space<vmem>>, %arg3: memref<1x32xf32, #tpu.memory_space<vmem>>, %arg4: memref<1x32xf32, #tpu.memory_space<vmem>>, %arg5: memref<288x128xf32, #tpu.memory_space<vmem>>, %arg6: memref<1x15x15x128xf32, #tpu.memory_space<vmem>>, %arg7: memref<1x1x17x18x32xf32, #tpu.memory_space<vmem>>) attributes {dimension_semantics = [#tpu.dimension_semantics<parallel>, #tpu.dimension_semantics<arbitrary>], iteration_bounds = array<i64: 2, 1>, scalar_prefetch = 0 : i64, scratch_operands = 1 : i64, tpu.core_type = #tpu.core_type<tc>, window_params = [{transform_indices = @transform_0, window_bounds = array<i64: 1, 15, 15, 32>}, {pipeline_mode = #tpu.pipeline_mode<synchronous>, transform_indices = @transform_1, window_bounds = array<i64: 1, 32>}, {pipeline_mode = #tpu.pipeline_mode<synchronous>, transform_indices = @transform_2, window_bounds = array<i64: 1, 32>}, {transform_indices = @transform_3, window_bounds = array<i64: 288, 128>}, {transform_indices = @transform_4, window_bounds = array<i64: 1, 15, 15, 128>}]} {
    %c0_i32 = arith.constant 0 : i32
    %0 = arith.cmpi eq, %arg1, %c0_i32 : i32
    %1 = arith.extui %0 : i1 to i32
    %c0_i32_0 = arith.constant 0 : i32
    %2 = arith.cmpi ne, %1, %c0_i32_0 : i32
    scf.if %2 {
      %cst_49 = arith.constant 0.000000e+00 : f32
      %30 = vector.broadcast %cst_49 : f32 to vector<1x1x17x18x32xf32>
      %c0_50 = arith.constant 0 : index
      %c0_51 = arith.constant 0 : index
      %c0_52 = arith.constant 0 : index
      %c0_53 = arith.constant 0 : index
      %c0_54 = arith.constant 0 : index
      %31 = vector.load %arg7[%c0_50, %c0_51, %c0_52, %c0_53, %c0_54] : memref<1x1x17x18x32xf32, #tpu.memory_space<vmem>>, vector<1x1x17x18x32xf32>
      tpu.vector_store %arg7[%c0_50, %c0_51, %c0_52, %c0_53, %c0_54], %30 {strides = array<i32>} : memref<1x1x17x18x32xf32, #tpu.memory_space<vmem>>, vector<1x1x17x18x32xf32>,
      %c0_55 = arith.constant 0 : index
      %c0_56 = arith.constant 0 : index
      %32 = vector.load %arg3[%c0_55, %c0_56] : memref<1x32xf32, #tpu.memory_space<vmem>>, vector<1x32xf32>
      %33 = vector.shape_cast %32 : vector<1x32xf32> to vector<1x1x32xf32>
      %c0_57 = arith.constant 0 : index
      %c0_58 = arith.constant 0 : index
      %34 = vector.load %arg4[%c0_57, %c0_58] : memref<1x32xf32, #tpu.memory_space<vmem>>, vector<1x32xf32>
      %35 = vector.shape_cast %34 : vector<1x32xf32> to vector<1x1x32xf32>
      %c0_59 = arith.constant 0 : index
      %c0_60 = arith.constant 0 : index
      %c0_61 = arith.constant 0 : index
      %c0_62 = arith.constant 0 : index
      %36 = vector.load %arg2[%c0_59, %c0_60, %c0_61, %c0_62] : memref<1x15x15x32xf32, #tpu.memory_space<vmem>>, vector<1x15x15x32xf32>
      %37 = vector.shape_cast %36 : vector<1x15x15x32xf32> to vector<15x15x32xf32>
      %cst_63 = arith.constant 0.000000e+00 : f32
      %38 = vector.broadcast %cst_63 : f32 to vector<15x15x32xf32>
      %39 = arith.maximumf %37, %38 : vector<15x15x32xf32>
      %40 = vector.broadcast %33 : vector<1x1x32xf32> to vector<15x15x32xf32>
      %41 = arith.mulf %39, %40 : vector<15x15x32xf32>
      %42 = vector.broadcast %35 : vector<1x1x32xf32> to vector<15x15x32xf32>
      %43 = arith.addf %41, %42 : vector<15x15x32xf32>
      %c0_64 = arith.constant 0 : index
      %c0_65 = arith.constant 0 : index
      %c1_66 = arith.constant 1 : index
      %c1_67 = arith.constant 1 : index
      %c0_68 = arith.constant 0 : index
      %44 = vector.load %arg7[%c0_64, %c0_65, %c1_66, %c1_67, %c0_68] : memref<1x1x17x18x32xf32, #tpu.memory_space<vmem>>, vector<1x1x15x15x32xf32>
      %45 = vector.shape_cast %44 : vector<1x1x15x15x32xf32> to vector<15x15x32xf32>
      %46 = vector.shape_cast %43 : vector<15x15x32xf32> to vector<1x1x15x15x32xf32>
      tpu.vector_store %arg7[%c0_64, %c0_65, %c1_66, %c1_67, %c0_68], %46 {strides = array<i32>} : memref<1x1x17x18x32xf32, #tpu.memory_space<vmem>>, vector<1x1x15x15x32xf32>,
    } else {
    }
    %c0 = arith.constant 0 : index
    %c0_1 = arith.constant 0 : index
    %c0_2 = arith.constant 0 : index
    %c0_3 = arith.constant 0 : index
    %c0_4 = arith.constant 0 : index
    %3 = vector.load %arg7[%c0, %c0_1, %c0_2, %c0_3, %c0_4] : memref<1x1x17x18x32xf32, #tpu.memory_space<vmem>>, vector<1x1x15x16x32xf32>
    %4 = vector.shape_cast %3 : vector<1x1x15x16x32xf32> to vector<15x16x32xf32>
    %c0_5 = arith.constant 0 : index
    %c0_6 = arith.constant 0 : index
    %c0_7 = arith.constant 0 : index
    %c1 = arith.constant 1 : index
    %c0_8 = arith.constant 0 : index
    %5 = vector.load %arg7[%c0_5, %c0_6, %c0_7, %c1, %c0_8] : memref<1x1x17x18x32xf32, #tpu.memory_space<vmem>>, vector<1x1x15x16x32xf32>
    %6 = vector.shape_cast %5 : vector<1x1x15x16x32xf32> to vector<15x16x32xf32>
    %c0_9 = arith.constant 0 : index
    %c0_10 = arith.constant 0 : index
    %c0_11 = arith.constant 0 : index
    %c2 = arith.constant 2 : index
    %c0_12 = arith.constant 0 : index
    %7 = vector.load %arg7[%c0_9, %c0_10, %c0_11, %c2, %c0_12] : memref<1x1x17x18x32xf32, #tpu.memory_space<vmem>>, vector<1x1x15x16x32xf32>
    %8 = vector.shape_cast %7 : vector<1x1x15x16x32xf32> to vector<15x16x32xf32>
    %c0_13 = arith.constant 0 : index
    %c0_14 = arith.constant 0 : index
    %c1_15 = arith.constant 1 : index
    %c0_16 = arith.constant 0 : index
    %c0_17 = arith.constant 0 : index
    %9 = vector.load %arg7[%c0_13, %c0_14, %c1_15, %c0_16, %c0_17] : memref<1x1x17x18x32xf32, #tpu.memory_space<vmem>>, vector<1x1x15x16x32xf32>
    %10 = vector.shape_cast %9 : vector<1x1x15x16x32xf32> to vector<15x16x32xf32>
    %c0_18 = arith.constant 0 : index
    %c0_19 = arith.constant 0 : index
    %c1_20 = arith.constant 1 : index
    %c1_21 = arith.constant 1 : index
    %c0_22 = arith.constant 0 : index
    %11 = vector.load %arg7[%c0_18, %c0_19, %c1_20, %c1_21, %c0_22] : memref<1x1x17x18x32xf32, #tpu.memory_space<vmem>>, vector<1x1x15x16x32xf32>
    %12 = vector.shape_cast %11 : vector<1x1x15x16x32xf32> to vector<15x16x32xf32>
    %c0_23 = arith.constant 0 : index
    %c0_24 = arith.constant 0 : index
    %c1_25 = arith.constant 1 : index
    %c2_26 = arith.constant 2 : index
    %c0_27 = arith.constant 0 : index
    %13 = vector.load %arg7[%c0_23, %c0_24, %c1_25, %c2_26, %c0_27] : memref<1x1x17x18x32xf32, #tpu.memory_space<vmem>>, vector<1x1x15x16x32xf32>
    %14 = vector.shape_cast %13 : vector<1x1x15x16x32xf32> to vector<15x16x32xf32>
    %c0_28 = arith.constant 0 : index
    %c0_29 = arith.constant 0 : index
    %c2_30 = arith.constant 2 : index
    %c0_31 = arith.constant 0 : index
    %c0_32 = arith.constant 0 : index
    %15 = vector.load %arg7[%c0_28, %c0_29, %c2_30, %c0_31, %c0_32] : memref<1x1x17x18x32xf32, #tpu.memory_space<vmem>>, vector<1x1x15x16x32xf32>
    %16 = vector.shape_cast %15 : vector<1x1x15x16x32xf32> to vector<15x16x32xf32>
    %c0_33 = arith.constant 0 : index
    %c0_34 = arith.constant 0 : index
    %c2_35 = arith.constant 2 : index
    %c1_36 = arith.constant 1 : index
    %c0_37 = arith.constant 0 : index
    %17 = vector.load %arg7[%c0_33, %c0_34, %c2_35, %c1_36, %c0_37] : memref<1x1x17x18x32xf32, #tpu.memory_space<vmem>>, vector<1x1x15x16x32xf32>
    %18 = vector.shape_cast %17 : vector<1x1x15x16x32xf32> to vector<15x16x32xf32>
    %c0_38 = arith.constant 0 : index
    %c0_39 = arith.constant 0 : index
    %c2_40 = arith.constant 2 : index
    %c2_41 = arith.constant 2 : index
    %c0_42 = arith.constant 0 : index
    %19 = vector.load %arg7[%c0_38, %c0_39, %c2_40, %c2_41, %c0_42] : memref<1x1x17x18x32xf32, #tpu.memory_space<vmem>>, vector<1x1x15x16x32xf32>
    %20 = vector.shape_cast %19 : vector<1x1x15x16x32xf32> to vector<15x16x32xf32>
    %21 = tpu.concatenate %4, %6, %8, %10, %12, %14, %16, %18, %20 in 2 : vector<15x16x32xf32>, vector<15x16x32xf32>, vector<15x16x32xf32>, vector<15x16x32xf32>, vector<15x16x32xf32>, vector<15x16x32xf32>, vector<15x16x32xf32>, vector<15x16x32xf32>, vector<15x16x32xf32> -> vector<15x16x288xf32>
    %22 = vector.shape_cast %21 : vector<15x16x288xf32> to vector<240x288xf32>
    %c0_43 = arith.constant 0 : index
    %c0_44 = arith.constant 0 : index
    %23 = vector.load %arg5[%c0_43, %c0_44] : memref<288x128xf32, #tpu.memory_space<vmem>>, vector<288x128xf32>
    %cst = arith.constant dense<0.000000e+00> : vector<240x128xf32>
    %24 = tpu.matmul %22, %23, %cst {dimension_numbers = #tpu.dot_dimension_numbers<[1], [0], [0], [1], [0, 0, 1, 1], [], []>, precision = #tpu.contract_precision<fp32>} : vector<240x288xf32>, vector<288x128xf32>, vector<240x128xf32> -> vector<240x128xf32>
    %25 = vector.shape_cast %24 : vector<240x128xf32> to vector<15x16x128xf32>
    %26 = vector.extract_strided_slice %25 {offsets = [0, 0, 0], sizes = [15, 15, 128], strides = [1, 1, 1]} : vector<15x16x128xf32> to vector<15x15x128xf32>
    %c0_45 = arith.constant 0 : index
    %c0_46 = arith.constant 0 : index
    %c0_47 = arith.constant 0 : index
    %c0_48 = arith.constant 0 : index
    %27 = vector.load %arg6[%c0_45, %c0_46, %c0_47, %c0_48] : memref<1x15x15x128xf32, #tpu.memory_space<vmem>>, vector<1x15x15x128xf32>
    %28 = vector.shape_cast %27 : vector<1x15x15x128xf32> to vector<15x15x128xf32>
    %29 = vector.shape_cast %26 : vector<15x15x128xf32> to vector<1x15x15x128xf32>
    tpu.vector_store %arg6[%c0_45, %c0_46, %c0_47, %c0_48], %29 {strides = array<i32>} : memref<1x15x15x128xf32, #tpu.memory_space<vmem>>, vector<1x15x15x128xf32>,
    return
  }
  func.func @transform_0(%arg0: i32, %arg1: i32) -> (i32, i32, i32, i32) {
    %c0_i32 = arith.constant 0 : i32
    %c0_i32_0 = arith.constant 0 : i32
    %c0_i32_1 = arith.constant 0 : i32
    %c0_i32_2 = arith.constant 0 : i32
    return %arg0, %c0_i32, %c0_i32_0, %c0_i32_1 : i32, i32, i32, i32
  }
  func.func @transform_1(%arg0: i32, %arg1: i32) -> (i32, i32) {
    %c0_i32 = arith.constant 0 : i32
    %c0_i32_0 = arith.constant 0 : i32
    %c0_i32_1 = arith.constant 0 : i32
    return %c0_i32, %c0_i32_0 : i32, i32
  }
  func.func @transform_2(%arg0: i32, %arg1: i32) -> (i32, i32) {
    %c0_i32 = arith.constant 0 : i32
    %c0_i32_0 = arith.constant 0 : i32
    %c0_i32_1 = arith.constant 0 : i32
    return %c0_i32, %c0_i32_0 : i32, i32
  }
  func.func @transform_3(%arg0: i32, %arg1: i32) -> (i32, i32) {
    %c0_i32 = arith.constant 0 : i32
    %c0_i32_0 = arith.constant 0 : i32
    return %c0_i32, %arg1 : i32, i32
  }
  func.func @transform_4(%arg0: i32, %arg1: i32) -> (i32, i32, i32, i32) {
    %c0_i32 = arith.constant 0 : i32
    %c0_i32_0 = arith.constant 0 : i32
    %c0_i32_1 = arith.constant 0 : i32
    return %arg0, %c0_i32, %c0_i32_0, %arg1 : i32, i32, i32, i32
  }
}

</mosaic_0001>

<llo_original>
// kernel: tpu_custom_call.1
$region0: #{tpu_custom_call.1}
  #allocation0 [shape = 'u32[]', space=smem, size = 0x4, offset = 0x4, fixed_abs, tag = 'smem constant byte address 0x4 - core index']
  #allocation1 [shape = 'u32[144,128]{1,0:T(1,128)}', space=vmem, size = 0x12000, scoped, tag = 'internal scratch']
  #allocation2 [shape = 'f32[1,1,17,18,32]{4,3,2,1,0:T(8,128)}', space=vmem, size = 0x33000, scoped, tag = 'scratch operand']
  %s0 = inlined_call_operand.vmem [shape: f32[2,15,15,32], index: 0, kind: input, shape index: {}]
  %s1 = inlined_call_operand.vmem [shape: f32[1,32], index: 1, kind: input, shape index: {}]
  %s2 = inlined_call_operand.vmem [shape: f32[1,32], index: 2, kind: input, shape index: {}]
  %s3 = inlined_call_operand.vmem [shape: f32[288,128], index: 3, kind: input, shape index: {}]
  %s4 = inlined_call_operand.vmem [shape: f32[2,15,15,128], index: 4, kind: output, shape index: {}]
  %s5 = sld [smem:[#allocation0]]
  $region53: #{tpu_custom_call.1} parent=0
    _
  %s7 = ssub.s32 1, %s5
  %s8 = scalar_select 0, %s7, %s5
  loop: start=0, step=1, limit=4
  $region2: #{tpu_custom_call.1} parent=0 // loop_pre_header
    _
  $region3: #{tpu_custom_call.1} parent=0 // loop_header
    %s10 = sphi 0, %s14
    %p11 = scmp.ge.s32.totalorder %s10, 4
    %s17 = sphi 0, %s29
    %s18 = sphi 0, %s25
    %s19 = sphi 0, %s17
    %s20 = sphi 0, %s18
    %s21 = sphi 0, %s19
    %s22 = sphi 0, %s20
    %s32 = sphi 0, %s34
    %s35 = sphi 0, %s32
    %s36 = sphi 0, %s35
    %s52 = sphi 0, %s36
    %s56 = sphi 0, %s56
    %s58 = sphi 0, %s56
    %s59 = sphi 0, %s58
    %s73 = sphi 0, %s59
    %s77 = sphi 0, %s77
    %s79 = sphi 0, %s77
    %s80 = sphi 0, %s79
    %s94 = sphi 0, %s80
    %s100 = sphi 0, %s102
    %s103 = sphi 0, %s100
    %s104 = sphi 0, %s103
    %s120 = sphi 0, %s104
    %s128 = sphi 0, %s130
    %s131 = sphi 0, %s128
    %s132 = sphi 0, %s131
    %s148 = sphi 0, %s132
  $region4: #{tpu_custom_call.1} parent=0 // loop_header_branch
    %13 = sbr.rel (%p11) target = $region8
  $region5: #{tpu_custom_call.1} parent=0 // loop_body
    %s15 = ssub.s32 %s10, 1
    %s16 = ssub.s32 %s10, 2
    %s23 = sadd.s32 1, %s18
    %p24 = scmp.ge.s32.totalorder %s23, 1
    %s25 = scalar_select %p24, 0, %s23
    %s26 = sadd.s32 1, %s17
    %s27 = scalar_select %p24, %s26, %s17
    %p28 = scmp.ge.s32.totalorder %s27, 2
    %s29 = scalar_select %p28, 0, %s27
    %s30 = ssub.s32 %s17, %s29
    %p31 = scmp.eq.s32.totalorder %s30, 0
    %s33 = sadd.s32 %s32, 1
    %s34 = scalar_select %p31, %s32, %s33
    %p37 = pneg %p31
    %p38 = scmp.eq.s32.totalorder %s10, 1
    %p39 = por %p37, %p38
    %p40 = scmp.ne.s32.totalorder %s32, %s35
    %p41 = scmp.eq.s32.totalorder %s10, 0
    %p42 = por %p40, %p41
    %p43 = scmp.ne.s32.totalorder %s32, %s35
    %p44 = scmp.eq.s32.totalorder %s15, 1
    %p45 = por %p43, %p44
    %p46 = scmp.ne.s32.totalorder %s35, %s36
    %p47 = scmp.eq.s32.totalorder %s15, 0
    %p48 = por %p46, %p47
    %p49 = scmp.ne.s32.totalorder %s35, %s36
    %p50 = scmp.eq.s32.totalorder %s16, 1
    %p51 = por %p49, %p50
    %p53 = scmp.ne.s32.totalorder %s36, %s52
    %p54 = scmp.eq.s32.totalorder %s16, 0
    %p55 = por %p53, %p54
    %s57 = sadd.s32 %s56, 1
    %p60 = scmp.eq.s32.totalorder %s10, 1
    %p61 = scmp.ne.s32.totalorder %s56, %s58
    %p62 = scmp.eq.s32.totalorder %s10, 0
    %p63 = por %p61, %p62
    %p64 = scmp.ne.s32.totalorder %s56, %s58
    %p65 = scmp.eq.s32.totalorder %s15, 1
    %p66 = por %p64, %p65
    %p67 = scmp.ne.s32.totalorder %s58, %s59
    %p68 = scmp.eq.s32.totalorder %s15, 0
    %p69 = por %p67, %p68
    %p70 = scmp.ne.s32.totalorder %s58, %s59
    %p71 = scmp.eq.s32.totalorder %s16, 1
    %p72 = por %p70, %p71
    %p74 = scmp.ne.s32.totalorder %s59, %s73
    %p75 = scmp.eq.s32.totalorder %s16, 0
    %p76 = por %p74, %p75
    %s78 = sadd.s32 %s77, 1
    %p81 = scmp.eq.s32.totalorder %s10, 1
    %p82 = scmp.ne.s32.totalorder %s77, %s79
    %p83 = scmp.eq.s32.totalorder %s10, 0
    %p84 = por %p82, %p83
    %p85 = scmp.ne.s32.totalorder %s77, %s79
    %p86 = scmp.eq.s32.totalorder %s15, 1
    %p87 = por %p85, %p86
    %p88 = scmp.ne.s32.totalorder %s79, %s80
    %p89 = scmp.eq.s32.totalorder %s15, 0
    %p90 = por %p88, %p89
    %p91 = scmp.ne.s32.totalorder %s79, %s80
    %p92 = scmp.eq.s32.totalorder %s16, 1
    %p93 = por %p91, %p92
    %p95 = scmp.ne.s32.totalorder %s80, %s94
    %p96 = scmp.eq.s32.totalorder %s16, 0
    %p97 = por %p95, %p96
    %s98 = ssub.s32 %s18, %s25
    %p99 = scmp.eq.s32.totalorder %s98, 0
    %s101 = sadd.s32 %s100, 1
    %s102 = scalar_select %p99, %s100, %s101
    %p105 = pneg %p99
    %p106 = scmp.eq.s32.totalorder %s10, 1
    %p107 = por %p105, %p106
    %p108 = scmp.ne.s32.totalorder %s100, %s103
    %p109 = scmp.eq.s32.totalorder %s10, 0
    %p110 = por %p108, %p109
    %p111 = scmp.ne.s32.totalorder %s100, %s103
    %p112 = scmp.eq.s32.totalorder %s15, 1
    %p113 = por %p111, %p112
    %p114 = scmp.ne.s32.totalorder %s103, %s104
    %p115 = scmp.eq.s32.totalorder %s15, 0
    %p116 = por %p114, %p115
    %p117 = scmp.ne.s32.totalorder %s103, %s104
    %p118 = scmp.eq.s32.totalorder %s16, 1
    %p119 = por %p117, %p118
    %p121 = scmp.ne.s32.totalorder %s104, %s120
    %p122 = scmp.eq.s32.totalorder %s16, 0
    %p123 = por %p121, %p122
    %s124 = ssub.s32 %s17, %s29
    %s125 = ssub.s32 %s18, %s25
    %s126 = sor.u32 %s124, %s125
    %p127 = scmp.eq.s32.totalorder %s126, 0
    %s129 = sadd.s32 %s128, 1
    %s130 = scalar_select %p127, %s128, %s129
    %p133 = pneg %p127
    %p134 = scmp.eq.s32.totalorder %s10, 1
    %p135 = por %p133, %p134
    %p136 = scmp.ne.s32.totalorder %s128, %s131
    %p137 = scmp.eq.s32.totalorder %s10, 0
    %p138 = por %p136, %p137
    %p139 = scmp.ne.s32.totalorder %s128, %s131
    %p140 = scmp.eq.s32.totalorder %s15, 1
    %p141 = por %p139, %p140
    %p142 = scmp.ne.s32.totalorder %s131, %s132
    %p143 = scmp.eq.s32.totalorder %s15, 0
    %p144 = por %p142, %p143
    %p145 = scmp.ne.s32.totalorder %s131, %s132
    %p146 = scmp.eq.s32.totalorder %s16, 1
    %p147 = por %p145, %p146
    %p149 = scmp.ne.s32.totalorder %s132, %s148
    %p150 = scmp.eq.s32.totalorder %s16, 0
    %p151 = por %p149, %p150
    %p152 = scmp.le.s32.totalorder 1, %s10
    %p153 = scmp.lt.s32.totalorder %s10, 3
    %p154 = pnand %p152, %p153
    %p155 = pneg %p154
    // Predicated region
    $region9: #{tpu_custom_call.1} parent=5 // pred_check
      _
    $region10: #{tpu_custom_call.1} parent=5 // pred_check_branch
      %157 = sbr.rel (%p154) target = $region12
    $region11: #{tpu_custom_call.1} parent=5 // pred_region
      %s158 = ssub.s32 %s10, 1
      // Predicated region
      $region13: #{tpu_custom_call.1} parent=11 // pred_check
        %p159 = pneg %p69
      $region14: #{tpu_custom_call.1} parent=11 // pred_check_branch
        %161 = sbr.rel (%p159) target = $region16
      $region15: #{tpu_custom_call.1} parent=11 // pred_region
        _
      $region16: #{tpu_custom_call.1} parent=11 // pred_fallthru
        _
      // Predicated region
      $region17: #{tpu_custom_call.1} parent=11 // pred_check
        %p162 = pneg %p90
      $region18: #{tpu_custom_call.1} parent=11 // pred_check_branch
        %164 = sbr.rel (%p162) target = $region20
      $region19: #{tpu_custom_call.1} parent=11 // pred_region
        _
      $region20: #{tpu_custom_call.1} parent=11 // pred_fallthru
        _
      // Predicated region
      $region21: #{tpu_custom_call.1} parent=11 // pred_check
        %p165 = pneg %p116
      $region22: #{tpu_custom_call.1} parent=11 // pred_check_branch
        %167 = sbr.rel (%p165) target = $region24
      $region23: #{tpu_custom_call.1} parent=11 // pred_region
        %p168 = scmp.lt.s32.totalorder %s20, 0
        %s169 = scalar_select %p168, %s20, 0
        %s170 = smul.addr %s169, 8
        %s171 = scalar_lea.vmem %s3, %s170
      $region24: #{tpu_custom_call.1} parent=11 // pred_fallthru
        _
    $region12: #{tpu_custom_call.1} parent=5 // pred_fallthru
      _
    %p172 = scmp.lt.s32.totalorder %s10, 2
    // Predicated region
    $region25: #{tpu_custom_call.1} parent=5 // pred_check
      %p173 = pneg %p172
    $region26: #{tpu_custom_call.1} parent=5 // pred_check_branch
      %175 = sbr.rel (%p173) target = $region28
    $region27: #{tpu_custom_call.1} parent=5 // pred_region
      // Predicated region
      $region29: #{tpu_custom_call.1} parent=27 // pred_check
        %p176 = pneg %p42
      $region30: #{tpu_custom_call.1} parent=27 // pred_check_branch
        %178 = sbr.rel (%p176) target = $region32
      $region31: #{tpu_custom_call.1} parent=27 // pred_region
        %p179 = scmp.lt.s32.totalorder %s17, 1
        %s180 = scalar_select %p179, %s17, 1
        %s181 = smul.addr %s180, 30
        %s182 = smul.addr %s181, 8
        %s183 = scalar_lea.vmem %s0, %s182
      $region32: #{tpu_custom_call.1} parent=27 // pred_fallthru
        _
    $region28: #{tpu_custom_call.1} parent=5 // pred_fallthru
      _
    %p184 = scmp.le.s32.totalorder 1, %s10
    %p185 = scmp.lt.s32.totalorder %s10, 3
    %p186 = pnand %p184, %p185
    %p187 = pneg %p186
    // Predicated region
    $region33: #{tpu_custom_call.1} parent=5 // pred_check
      _
    $region34: #{tpu_custom_call.1} parent=5 // pred_check_branch
      %189 = sbr.rel (%p186) target = $region36
    $region35: #{tpu_custom_call.1} parent=5 // pred_region
      %s190 = ssub.s32 %s10, 1
      %p191 = scmp.lt.s32.totalorder %s19, 1
      %s192 = scalar_select %p191, %s19, 1
      %s193 = smul.addr %s192, 30
      %s194 = smul.addr %s193, 8
      %s195 = scalar_lea.vmem %s0, %s194
      %p196 = pneg %p48
      %p197 = pneg %p45
      %p198 = pneg %p69
      %p199 = pneg %p66
      %p200 = pneg %p90
      %p201 = pneg %p87
      %p202 = scmp.lt.s32.totalorder %s20, 0
      %s203 = scalar_select %p202, %s20, 0
      %s204 = smul.addr %s203, 8
      %s205 = scalar_lea.vmem %s3, %s204
      %p206 = pneg %p116
      %p207 = pneg %p113
      %p208 = pneg %p144
      %p209 = pneg %p141
      %p210 = scmp.lt.s32.totalorder %s19, 1
      %s211 = scalar_select %p210, %s19, 1
      %p212 = scmp.lt.s32.totalorder %s20, 0
      %s213 = scalar_select %p212, %s20, 0
      %s214 = smul.addr %s211, 30
      %s215 = sadd.s32 %s213, %s214
      %s216 = smul.addr %s215, 8
      %s217 = scalar_lea.vmem %s4, %s216
      %p218 = scmp.lt.s32.totalorder %s19, 1
      %s219 = scalar_select %p218, %s19, 1
      %s220 = smul.addr %s219, 30
      %s221 = smul.addr %s220, 8
      %s222 = scalar_lea.vmem %s0, %s221
      %p223 = scmp.lt.s32.totalorder %s20, 0
      %s224 = scalar_select %p223, %s20, 0
      %s225 = smul.addr %s224, 8
      %s226 = scalar_lea.vmem %s3, %s225
      %p227 = scmp.lt.s32.totalorder %s19, 1
      %s228 = scalar_select %p227, %s19, 1
      %p229 = scmp.lt.s32.totalorder %s20, 0
      %s230 = scalar_select %p229, %s20, 0
      %s231 = smul.addr %s228, 30
      %s232 = sadd.s32 %s230, %s231
      %s233 = smul.addr %s232, 8
      %s234 = scalar_lea.vmem %s4, %s233
      %p235 = scmp.eq.s32.totalorder %s20, 0
      // Predicated region
      $region37: #{tpu_custom_call.1} parent=35 // pred_check
        %p236 = pneg %p235
      $region38: #{tpu_custom_call.1} parent=35 // pred_check_branch
        %238 = sbr.rel (%p236) target = $region40
      $region39: #{tpu_custom_call.1} parent=35 // pred_region
        %vm239 = vcmask 261120
        %240 = vst.msk [vmem:[#allocation2] sm:$0xff] %vm239, 0.0
        %241 = vst.msk [vmem:[#allocation2 + $0x8] sm:$0xff] %vm239, 0.0
        %vm242 = vcmask 254976
        %243 = vst.msk [vmem:[#allocation2 + $0x10] sm:$0x3] %vm242, 0.0
        %244 = vst.msk [vmem:[#allocation2 + $0x18] sm:$0xff] %vm239, 0.0
        %245 = vst.msk [vmem:[#allocation2 + $0x20] sm:$0xff] %vm239, 0.0
        %246 = vst.msk [vmem:[#allocation2 + $0x28] sm:$0x3] %vm242, 0.0
        %247 = vst.msk [vmem:[#allocation2 + $0x30] sm:$0xff] %vm239, 0.0
        %248 = vst.msk [vmem:[#allocation2 + $0x38] sm:$0xff] %vm239, 0.0
        %249 = vst.msk [vmem:[#allocation2 + $0x40] sm:$0x3] %vm242, 0.0
        %250 = vst.msk [vmem:[#allocation2 + $0x48] sm:$0xff] %vm239, 0.0
        %251 = vst.msk [vmem:[#allocation2 + $0x50] sm:$0xff] %vm239, 0.0
        %252 = vst.msk [vmem:[#allocation2 + $0x58] sm:$0x3] %vm242, 0.0
        %253 = vst.msk [vmem:[#allocation2 + $0x60] sm:$0xff] %vm239, 0.0
        %254 = vst.msk [vmem:[#allocation2 + $0x68] sm:$0xff] %vm239, 0.0
        %255 = vst.msk [vmem:[#allocation2 + $0x70] sm:$0x3] %vm242, 0.0
        %256 = vst.msk [vmem:[#allocation2 + $0x78] sm:$0xff] %vm239, 0.0
        %257 = vst.msk [vmem:[#allocation2 + $0x80] sm:$0xff] %vm239, 0.0
        %258 = vst.msk [vmem:[#allocation2 + $0x88] sm:$0x3] %vm242, 0.0
        %259 = vst.msk [vmem:[#allocation2 + $0x90] sm:$0xff] %vm239, 0.0
        %260 = vst.msk [vmem:[#allocation2 + $0x98] sm:$0xff] %vm239, 0.0
        %261 = vst.msk [vmem:[#allocation2 + $0xa0] sm:$0x3] %vm242, 0.0
        %262 = vst.msk [vmem:[#allocation2 + $0xa8] sm:$0xff] %vm239, 0.0
        %263 = vst.msk [vmem:[#allocation2 + $0xb0] sm:$0xff] %vm239, 0.0
        %264 = vst.msk [vmem:[#allocation2 + $0xb8] sm:$0x3] %vm242, 0.0
        %265 = vst.msk [vmem:[#allocation2 + $0xc0] sm:$0xff] %vm239, 0.0
        %266 = vst.msk [vmem:[#allocation2 + $0xc8] sm:$0xff] %vm239, 0.0
        %267 = vst.msk [vmem:[#allocation2 + $0xd0] sm:$0x3] %vm242, 0.0
        %268 = vst.msk [vmem:[#allocation2 + $0xd8] sm:$0xff] %vm239, 0.0
        %269 = vst.msk [vmem:[#allocation2 + $0xe0] sm:$0xff] %vm239, 0.0
        %270 = vst.msk [vmem:[#allocation2 + $0xe8] sm:$0x3] %vm242, 0.0
        %271 = vst.msk [vmem:[#allocation2 + $0xf0] sm:$0xff] %vm239, 0.0
        %272 = vst.msk [vmem:[#allocation2 + $0xf8] sm:$0xff] %vm239, 0.0
        %273 = vst.msk [vmem:[#allocation2 + $0x100] sm:$0x3] %vm242, 0.0
        %274 = vst.msk [vmem:[#allocation2 + $0x108] sm:$0xff] %vm239, 0.0
        %275 = vst.msk [vmem:[#allocation2 + $0x110] sm:$0xff] %vm239, 0.0
        %276 = vst.msk [vmem:[#allocation2 + $0x118] sm:$0x3] %vm242, 0.0
        %277 = vst.msk [vmem:[#allocation2 + $0x120] sm:$0xff] %vm239, 0.0
        %278 = vst.msk [vmem:[#allocation2 + $0x128] sm:$0xff] %vm239, 0.0
        %279 = vst.msk [vmem:[#allocation2 + $0x130] sm:$0x3] %vm242, 0.0
        %280 = vst.msk [vmem:[#allocation2 + $0x138] sm:$0xff] %vm239, 0.0
        %281 = vst.msk [vmem:[#allocation2 + $0x140] sm:$0xff] %vm239, 0.0
        %282 = vst.msk [vmem:[#allocation2 + $0x148] sm:$0x3] %vm242, 0.0
        %283 = vst.msk [vmem:[#allocation2 + $0x150] sm:$0xff] %vm239, 0.0
        %284 = vst.msk [vmem:[#allocation2 + $0x158] sm:$0xff] %vm239, 0.0
        %285 = vst.msk [vmem:[#allocation2 + $0x160] sm:$0x3] %vm242, 0.0
        %286 = vst.msk [vmem:[#allocation2 + $0x168] sm:$0xff] %vm239, 0.0
        %287 = vst.msk [vmem:[#allocation2 + $0x170] sm:$0xff] %vm239, 0.0
        %288 = vst.msk [vmem:[#allocation2 + $0x178] sm:$0x3] %vm242, 0.0
        %289 = vst.msk [vmem:[#allocation2 + $0x180] sm:$0xff] %vm239, 0.0
        %290 = vst.msk [vmem:[#allocation2 + $0x188] sm:$0xff] %vm239, 0.0
        %291 = vst.msk [vmem:[#allocation2 + $0x190] sm:$0x3] %vm242, 0.0
        %v292 = vld [vmem:[%s1] sm:$0x1]
        %v293 = vld [vmem:[%s2] sm:$0x1]
        %v294 = vld [vmem:[%s222] sm:$0xff]
        %v295 = vld [vmem:[%s222 + $0x8] sm:$0x7f]
        %v296 = vld [vmem:[%s222 + $0x10] sm:$0xff]
        %v297 = vld [vmem:[%s222 + $0x18] sm:$0x7f]
        %v298 = vld [vmem:[%s222 + $0x20] sm:$0xff]
        %v299 = vld [vmem:[%s222 + $0x28] sm:$0x7f]
        %v300 = vld [vmem:[%s222 + $0x30] sm:$0xff]
        %v301 = vld [vmem:[%s222 + $0x38] sm:$0x7f]
        %v302 = vld [vmem:[%s222 + $0x40] sm:$0xff]
        %v303 = vld [vmem:[%s222 + $0x48] sm:$0x7f]
        %v304 = vld [vmem:[%s222 + $0x50] sm:$0xff]
        %v305 = vld [vmem:[%s222 + $0x58] sm:$0x7f]
        %v306 = vld [vmem:[%s222 + $0x60] sm:$0xff]
        %v307 = vld [vmem:[%s222 + $0x68] sm:$0x7f]
        %v308 = vld [vmem:[%s222 + $0x70] sm:$0xff]
        %v309 = vld [vmem:[%s222 + $0x78] sm:$0x7f]
        %v310 = vld [vmem:[%s222 + $0x80] sm:$0xff]
        %v311 = vld [vmem:[%s222 + $0x88] sm:$0x7f]
        %v312 = vld [vmem:[%s222 + $0x90] sm:$0xff]
        %v313 = vld [vmem:[%s222 + $0x98] sm:$0x7f]
        %v314 = vld [vmem:[%s222 + $0xa0] sm:$0xff]
        %v315 = vld [vmem:[%s222 + $0xa8] sm:$0x7f]
        %v316 = vld [vmem:[%s222 + $0xb0] sm:$0xff]
        %v317 = vld [vmem:[%s222 + $0xb8] sm:$0x7f]
        %v318 = vld [vmem:[%s222 + $0xc0] sm:$0xff]
        %v319 = vld [vmem:[%s222 + $0xc8] sm:$0x7f]
        %v320 = vld [vmem:[%s222 + $0xd0] sm:$0xff]
        %v321 = vld [vmem:[%s222 + $0xd8] sm:$0x7f]
        %v322 = vld [vmem:[%s222 + $0xe0] sm:$0xff]
        %v323 = vld [vmem:[%s222 + $0xe8] sm:$0x7f]
        %v324 = vmax.f32 %v294, 0.0
        %v325 = vmax.f32 %v295, 0.0
        %v326 = vmax.f32 %v296, 0.0
        %v327 = vmax.f32 %v297, 0.0
        %v328 = vmax.f32 %v298, 0.0
        %v329 = vmax.f32 %v299, 0.0
        %v330 = vmax.f32 %v300, 0.0
        %v331 = vmax.f32 %v301, 0.0
        %v332 = vmax.f32 %v302, 0.0
        %v333 = vmax.f32 %v303, 0.0
        %v334 = vmax.f32 %v304, 0.0
        %v335 = vmax.f32 %v305, 0.0
        %v336 = vmax.f32 %v306, 0.0
        %v337 = vmax.f32 %v307, 0.0
        %v338 = vmax.f32 %v308, 0.0
        %v339 = vmax.f32 %v309, 0.0
        %v340 = vmax.f32 %v310, 0.0
        %v341 = vmax.f32 %v311, 0.0
        %v342 = vmax.f32 %v312, 0.0
        %v343 = vmax.f32 %v313, 0.0
        %v344 = vmax.f32 %v314, 0.0
        %v345 = vmax.f32 %v315, 0.0
        %v346 = vmax.f32 %v316, 0.0
        %v347 = vmax.f32 %v317, 0.0
        %v348 = vmax.f32 %v318, 0.0
        %v349 = vmax.f32 %v319, 0.0
        %v350 = vmax.f32 %v320, 0.0
        %v351 = vmax.f32 %v321, 0.0
        %v352 = vmax.f32 %v322, 0.0
        %v353 = vmax.f32 %v323, 0.0
        %v355 = vlaneseq
        %v356 = vshrl.u32 %v355, 7
        %v357 = vsub.s32 0, %v356
        %v358 = vrot.slane %v292, %v357
        %v360 = vmul.f32 %v324, %v358
        %v361 = vmul.f32 %v325, %v358
        %v362 = vmul.f32 %v326, %v358
        %v363 = vmul.f32 %v327, %v358
        %v364 = vmul.f32 %v328, %v358
        %v365 = vmul.f32 %v329, %v358
        %v366 = vmul.f32 %v330, %v358
        %v367 = vmul.f32 %v331, %v358
        %v368 = vmul.f32 %v332, %v358
        %v369 = vmul.f32 %v333, %v358
        %v370 = vmul.f32 %v334, %v358
        %v371 = vmul.f32 %v335, %v358
        %v372 = vmul.f32 %v336, %v358
        %v373 = vmul.f32 %v337, %v358
        %v374 = vmul.f32 %v338, %v358
        %v375 = vmul.f32 %v339, %v358
        %v376 = vmul.f32 %v340, %v358
        %v377 = vmul.f32 %v341, %v358
        %v378 = vmul.f32 %v342, %v358
        %v379 = vmul.f32 %v343, %v358
        %v380 = vmul.f32 %v344, %v358
        %v381 = vmul.f32 %v345, %v358
        %v382 = vmul.f32 %v346, %v358
        %v383 = vmul.f32 %v347, %v358
        %v384 = vmul.f32 %v348, %v358
        %v385 = vmul.f32 %v349, %v358
        %v386 = vmul.f32 %v350, %v358
        %v387 = vmul.f32 %v351, %v358
        %v388 = vmul.f32 %v352, %v358
        %v389 = vmul.f32 %v353, %v358
        %v391 = vlaneseq
        %v392 = vshrl.u32 %v391, 7
        %v393 = vsub.s32 0, %v392
        %v394 = vrot.slane %v293, %v393
        %v396 = vadd.f32 %v360, %v394
        %v397 = vadd.f32 %v361, %v394
        %v398 = vadd.f32 %v362, %v394
        %v399 = vadd.f32 %v363, %v394
        %v400 = vadd.f32 %v364, %v394
        %v401 = vadd.f32 %v365, %v394
        %v402 = vadd.f32 %v366, %v394
        %v403 = vadd.f32 %v367, %v394
        %v404 = vadd.f32 %v368, %v394
        %v405 = vadd.f32 %v369, %v394
        %v406 = vadd.f32 %v370, %v394
        %v407 = vadd.f32 %v371, %v394
        %v408 = vadd.f32 %v372, %v394
        %v409 = vadd.f32 %v373, %v394
        %v410 = vadd.f32 %v374, %v394
        %v411 = vadd.f32 %v375, %v394
        %v412 = vadd.f32 %v376, %v394
        %v413 = vadd.f32 %v377, %v394
        %v414 = vadd.f32 %v378, %v394
        %v415 = vadd.f32 %v379, %v394
        %v416 = vadd.f32 %v380, %v394
        %v417 = vadd.f32 %v381, %v394
        %v418 = vadd.f32 %v382, %v394
        %v419 = vadd.f32 %v383, %v394
        %v420 = vadd.f32 %v384, %v394
        %v421 = vadd.f32 %v385, %v394
        %v422 = vadd.f32 %v386, %v394
        %v423 = vadd.f32 %v387, %v394
        %v424 = vadd.f32 %v388, %v394
        %v425 = vadd.f32 %v389, %v394
        %s426 = scalar_lea.vmem [#allocation2], 24
        %427 = vst.msk [vmem:[%s426 + $0x1] sm:$0xff] %vm239, %v396
        %vm428 = vcmask 260096
        %429 = vst.msk [vmem:[%s426 + $0x9] sm:$0x7f] %vm428, %v397
        %430 = vst.msk [vmem:[%s426 + $0x19] sm:$0xff] %vm239, %v398
        %431 = vst.msk [vmem:[%s426 + $0x21] sm:$0x7f] %vm428, %v399
        %432 = vst.msk [vmem:[%s426 + $0x31] sm:$0xff] %vm239, %v400
        %433 = vst.msk [vmem:[%s426 + $0x39] sm:$0x7f] %vm428, %v401
        %434 = vst.msk [vmem:[%s426 + $0x49] sm:$0xff] %vm239, %v402
        %435 = vst.msk [vmem:[%s426 + $0x51] sm:$0x7f] %vm428, %v403
        %436 = vst.msk [vmem:[%s426 + $0x61] sm:$0xff] %vm239, %v404
        %437 = vst.msk [vmem:[%s426 + $0x69] sm:$0x7f] %vm428, %v405
        %438 = vst.msk [vmem:[%s426 + $0x79] sm:$0xff] %vm239, %v406
        %439 = vst.msk [vmem:[%s426 + $0x81] sm:$0x7f] %vm428, %v407
        %440 = vst.msk [vmem:[%s426 + $0x91] sm:$0xff] %vm239, %v408
        %441 = vst.msk [vmem:[%s426 + $0x99] sm:$0x7f] %vm428, %v409
        %442 = vst.msk [vmem:[%s426 + $0xa9] sm:$0xff] %vm239, %v410
        %443 = vst.msk [vmem:[%s426 + $0xb1] sm:$0x7f] %vm428, %v411
        %444 = vst.msk [vmem:[%s426 + $0xc1] sm:$0xff] %vm239, %v412
        %445 = vst.msk [vmem:[%s426 + $0xc9] sm:$0x7f] %vm428, %v413
        %446 = vst.msk [vmem:[%s426 + $0xd9] sm:$0xff] %vm239, %v414
        %447 = vst.msk [vmem:[%s426 + $0xe1] sm:$0x7f] %vm428, %v415
        %448 = vst.msk [vmem:[%s426 + $0xf1] sm:$0xff] %vm239, %v416
        %449 = vst.msk [vmem:[%s426 + $0xf9] sm:$0x7f] %vm428, %v417
        %450 = vst.msk [vmem:[%s426 + $0x109] sm:$0xff] %vm239, %v418
        %451 = vst.msk [vmem:[%s426 + $0x111] sm:$0x7f] %vm428, %v419
        %452 = vst.msk [vmem:[%s426 + $0x121] sm:$0xff] %vm239, %v420
        %453 = vst.msk [vmem:[%s426 + $0x129] sm:$0x7f] %vm428, %v421
        %454 = vst.msk [vmem:[%s426 + $0x139] sm:$0xff] %vm239, %v422
        %455 = vst.msk [vmem:[%s426 + $0x141] sm:$0x7f] %vm428, %v423
        %456 = vst.msk [vmem:[%s426 + $0x151] sm:$0xff] %vm239, %v424
        %457 = vst.msk [vmem:[%s426 + $0x159] sm:$0x7f] %vm428, %v425
      $region40: #{tpu_custom_call.1} parent=35 // pred_fallthru
        _
      %v458 = vld [vmem:[#allocation2] sm:$0xff]
      %v459 = vld [vmem:[#allocation2 + $0x8] sm:$0xff]
      %v460 = vld [vmem:[#allocation2 + $0x18] sm:$0xff]
      %v461 = vld [vmem:[#allocation2 + $0x20] sm:$0xff]
      %v462 = vld [vmem:[#allocation2 + $0x30] sm:$0xff]
      %v463 = vld [vmem:[#allocation2 + $0x38] sm:$0xff]
      %v464 = vld [vmem:[#allocation2 + $0x48] sm:$0xff]
      %v465 = vld [vmem:[#allocation2 + $0x50] sm:$0xff]
      %v466 = vld [vmem:[#allocation2 + $0x60] sm:$0xff]
      %v467 = vld [vmem:[#allocation2 + $0x68] sm:$0xff]
      %v468 = vld [vmem:[#allocation2 + $0x78] sm:$0xff]
      %v469 = vld [vmem:[#allocation2 + $0x80] sm:$0xff]
      %v470 = vld [vmem:[#allocation2 + $0x90] sm:$0xff]
      %v471 = vld [vmem:[#allocation2 + $0x98] sm:$0xff]
      %v472 = vld [vmem:[#allocation2 + $0xa8] sm:$0xff]
      %v473 = vld [vmem:[#allocation2 + $0xb0] sm:$0xff]
      %v474 = vld [vmem:[#allocation2 + $0xc0] sm:$0xff]
      %v475 = vld [vmem:[#allocation2 + $0xc8] sm:$0xff]
      %v476 = vld [vmem:[#allocation2 + $0xd8] sm:$0xff]
      %v477 = vld [vmem:[#allocation2 + $0xe0] sm:$0xff]
      %v478 = vld [vmem:[#allocation2 + $0xf0] sm:$0xff]
      %v479 = vld [vmem:[#allocation2 + $0xf8] sm:$0xff]
      %v480 = vld [vmem:[#allocation2 + $0x108] sm:$0xff]
      %v481 = vld [vmem:[#allocation2 + $0x110] sm:$0xff]
      %v482 = vld [vmem:[#allocation2 + $0x120] sm:$0xff]
      %v483 = vld [vmem:[#allocation2 + $0x128] sm:$0xff]
      %v484 = vld [vmem:[#allocation2 + $0x138] sm:$0xff]
      %v485 = vld [vmem:[#allocation2 + $0x140] sm:$0xff]
      %v486 = vld [vmem:[#allocation2 + $0x150] sm:$0xff]
      %v487 = vld [vmem:[#allocation2 + $0x158] sm:$0xff]
      %v488 = vld [vmem:[#allocation2 + $0x1] sm:$0xff]
      %v489 = vld [vmem:[#allocation2 + $0x9] sm:$0xff]
      %v490 = vld [vmem:[#allocation2 + $0x19] sm:$0xff]
      %v491 = vld [vmem:[#allocation2 + $0x21] sm:$0xff]
      %v492 = vld [vmem:[#allocation2 + $0x31] sm:$0xff]
      %v493 = vld [vmem:[#allocation2 + $0x39] sm:$0xff]
      %v494 = vld [vmem:[#allocation2 + $0x49] sm:$0xff]
      %v495 = vld [vmem:[#allocation2 + $0x51] sm:$0xff]
      %v496 = vld [vmem:[#allocation2 + $0x61] sm:$0xff]
      %v497 = vld [vmem:[#allocation2 + $0x69] sm:$0xff]
      %v498 = vld [vmem:[#allocation2 + $0x79] sm:$0xff]
      %v499 = vld [vmem:[#allocation2 + $0x81] sm:$0xff]
      %v500 = vld [vmem:[#allocation2 + $0x91] sm:$0xff]
      %v501 = vld [vmem:[#allocation2 + $0x99] sm:$0xff]
      %v502 = vld [vmem:[#allocation2 + $0xa9] sm:$0xff]
      %v503 = vld [vmem:[#allocation2 + $0xb1] sm:$0xff]
      %v504 = vld [vmem:[#allocation2 + $0xc1] sm:$0xff]
      %v505 = vld [vmem:[#allocation2 + $0xc9] sm:$0xff]
      %v506 = vld [vmem:[#allocation2 + $0xd9] sm:$0xff]
      %v507 = vld [vmem:[#allocation2 + $0xe1] sm:$0xff]
      %v508 = vld [vmem:[#allocation2 + $0xf1] sm:$0xff]
      %v509 = vld [vmem:[#allocation2 + $0xf9] sm:$0xff]
      %v510 = vld [vmem:[#allocation2 + $0x109] sm:$0xff]
      %v511 = vld [vmem:[#allocation2 + $0x111] sm:$0xff]
      %v512 = vld [vmem:[#allocation2 + $0x121] sm:$0xff]
      %v513 = vld [vmem:[#allocation2 + $0x129] sm:$0xff]
      %v514 = vld [vmem:[#allocation2 + $0x139] sm:$0xff]
      %v515 = vld [vmem:[#allocation2 + $0x141] sm:$0xff]
      %v516 = vld [vmem:[#allocation2 + $0x151] sm:$0xff]
      %v517 = vld [vmem:[#allocation2 + $0x159] sm:$0xff]
      %v518 = vld [vmem:[#allocation2 + $0x2] sm:$0xff]
      %v519 = vld [vmem:[#allocation2 + $0xa] sm:$0xff]
      %v520 = vld [vmem:[#allocation2 + $0x1a] sm:$0xff]
      %v521 = vld [vmem:[#allocation2 + $0x22] sm:$0xff]
      %v522 = vld [vmem:[#allocation2 + $0x32] sm:$0xff]
      %v523 = vld [vmem:[#allocation2 + $0x3a] sm:$0xff]
      %v524 = vld [vmem:[#allocation2 + $0x4a] sm:$0xff]
      %v525 = vld [vmem:[#allocation2 + $0x52] sm:$0xff]
      %v526 = vld [vmem:[#allocation2 + $0x62] sm:$0xff]
      %v527 = vld [vmem:[#allocation2 + $0x6a] sm:$0xff]
      %v528 = vld [vmem:[#allocation2 + $0x7a] sm:$0xff]
      %v529 = vld [vmem:[#allocation2 + $0x82] sm:$0xff]
      %v530 = vld [vmem:[#allocation2 + $0x92] sm:$0xff]
      %v531 = vld [vmem:[#allocation2 + $0x9a] sm:$0xff]
      %v532 = vld [vmem:[#allocation2 + $0xaa] sm:$0xff]
      %v533 = vld [vmem:[#allocation2 + $0xb2] sm:$0xff]
      %v534 = vld [vmem:[#allocation2 + $0xc2] sm:$0xff]
      %v535 = vld [vmem:[#allocation2 + $0xca] sm:$0xff]
      %v536 = vld [vmem:[#allocation2 + $0xda] sm:$0xff]
      %v537 = vld [vmem:[#allocation2 + $0xe2] sm:$0xff]
      %v538 = vld [vmem:[#allocation2 + $0xf2] sm:$0xff]
      %v539 = vld [vmem:[#allocation2 + $0xfa] sm:$0xff]
      %v540 = vld [vmem:[#allocation2 + $0x10a] sm:$0xff]
      %v541 = vld [vmem:[#allocation2 + $0x112] sm:$0xff]
      %v542 = vld [vmem:[#allocation2 + $0x122] sm:$0xff]
      %v543 = vld [vmem:[#allocation2 + $0x12a] sm:$0xff]
      %v544 = vld [vmem:[#allocation2 + $0x13a] sm:$0xff]
      %v545 = vld [vmem:[#allocation2 + $0x142] sm:$0xff]
      %v546 = vld [vmem:[#allocation2 + $0x152] sm:$0xff]
      %v547 = vld [vmem:[#allocation2 + $0x15a] sm:$0xff]
      %s548 = scalar_lea.vmem [#allocation2], 24
      %v549 = vld [vmem:[%s548] sm:$0xff]
      %v550 = vld [vmem:[%s548 + $0x8] sm:$0xff]
      %v551 = vld [vmem:[%s548 + $0x18] sm:$0xff]
      %v552 = vld [vmem:[%s548 + $0x20] sm:$0xff]
      %v553 = vld [vmem:[%s548 + $0x30] sm:$0xff]
      %v554 = vld [vmem:[%s548 + $0x38] sm:$0xff]
      %v555 = vld [vmem:[%s548 + $0x48] sm:$0xff]
      %v556 = vld [vmem:[%s548 + $0x50] sm:$0xff]
      %v557 = vld [vmem:[%s548 + $0x60] sm:$0xff]
      %v558 = vld [vmem:[%s548 + $0x68] sm:$0xff]
      %v559 = vld [vmem:[%s548 + $0x78] sm:$0xff]
      %v560 = vld [vmem:[%s548 + $0x80] sm:$0xff]
      %v561 = vld [vmem:[%s548 + $0x90] sm:$0xff]
      %v562 = vld [vmem:[%s548 + $0x98] sm:$0xff]
      %v563 = vld [vmem:[%s548 + $0xa8] sm:$0xff]
      %v564 = vld [vmem:[%s548 + $0xb0] sm:$0xff]
      %v565 = vld [vmem:[%s548 + $0xc0] sm:$0xff]
      %v566 = vld [vmem:[%s548 + $0xc8] sm:$0xff]
      %v567 = vld [vmem:[%s548 + $0xd8] sm:$0xff]
      %v568 = vld [vmem:[%s548 + $0xe0] sm:$0xff]
      %v569 = vld [vmem:[%s548 + $0xf0] sm:$0xff]
      %v570 = vld [vmem:[%s548 + $0xf8] sm:$0xff]
      %v571 = vld [vmem:[%s548 + $0x108] sm:$0xff]
      %v572 = vld [vmem:[%s548 + $0x110] sm:$0xff]
      %v573 = vld [vmem:[%s548 + $0x120] sm:$0xff]
      %v574 = vld [vmem:[%s548 + $0x128] sm:$0xff]
      %v575 = vld [vmem:[%s548 + $0x138] sm:$0xff]
      %v576 = vld [vmem:[%s548 + $0x140] sm:$0xff]
      %v577 = vld [vmem:[%s548 + $0x150] sm:$0xff]
      %v578 = vld [vmem:[%s548 + $0x158] sm:$0xff]
      %v579 = vld [vmem:[%s548 + $0x1] sm:$0xff]
      %v580 = vld [vmem:[%s548 + $0x9] sm:$0xff]
      %v581 = vld [vmem:[%s548 + $0x19] sm:$0xff]
      %v582 = vld [vmem:[%s548 + $0x21] sm:$0xff]
      %v583 = vld [vmem:[%s548 + $0x31] sm:$0xff]
      %v584 = vld [vmem:[%s548 + $0x39] sm:$0xff]
      %v585 = vld [vmem:[%s548 + $0x49] sm:$0xff]
      %v586 = vld [vmem:[%s548 + $0x51] sm:$0xff]
      %v587 = vld [vmem:[%s548 + $0x61] sm:$0xff]
      %v588 = vld [vmem:[%s548 + $0x69] sm:$0xff]
      %v589 = vld [vmem:[%s548 + $0x79] sm:$0xff]
      %v590 = vld [vmem:[%s548 + $0x81] sm:$0xff]
      %v591 = vld [vmem:[%s548 + $0x91] sm:$0xff]
      %v592 = vld [vmem:[%s548 + $0x99] sm:$0xff]
      %v593 = vld [vmem:[%s548 + $0xa9] sm:$0xff]
      %v594 = vld [vmem:[%s548 + $0xb1] sm:$0xff]
      %v595 = vld [vmem:[%s548 + $0xc1] sm:$0xff]
      %v596 = vld [vmem:[%s548 + $0xc9] sm:$0xff]
      %v597 = vld [vmem:[%s548 + $0xd9] sm:$0xff]
      %v598 = vld [vmem:[%s548 + $0xe1] sm:$0xff]
      %v599 = vld [vmem:[%s548 + $0xf1] sm:$0xff]
      %v600 = vld [vmem:[%s548 + $0xf9] sm:$0xff]
      %v601 = vld [vmem:[%s548 + $0x109] sm:$0xff]
      %v602 = vld [vmem:[%s548 + $0x111] sm:$0xff]
      %v603 = vld [vmem:[%s548 + $0x121] sm:$0xff]
      %v604 = vld [vmem:[%s548 + $0x129] sm:$0xff]
      %v605 = vld [vmem:[%s548 + $0x139] sm:$0xff]
      %v606 = vld [vmem:[%s548 + $0x141] sm:$0xff]
      %v607 = vld [vmem:[%s548 + $0x151] sm:$0xff]
      %v608 = vld [vmem:[%s548 + $0x159] sm:$0xff]
      %v609 = vld [vmem:[%s548 + $0x2] sm:$0xff]
      %v610 = vld [vmem:[%s548 + $0xa] sm:$0xff]
      %v611 = vld [vmem:[%s548 + $0x1a] sm:$0xff]
      %v612 = vld [vmem:[%s548 + $0x22] sm:$0xff]
      %v613 = vld [vmem:[%s548 + $0x32] sm:$0xff]
      %v614 = vld [vmem:[%s548 + $0x3a] sm:$0xff]
      %v615 = vld [vmem:[%s548 + $0x4a] sm:$0xff]
      %v616 = vld [vmem:[%s548 + $0x52] sm:$0xff]
      %v617 = vld [vmem:[%s548 + $0x62] sm:$0xff]
      %v618 = vld [vmem:[%s548 + $0x6a] sm:$0xff]
      %v619 = vld [vmem:[%s548 + $0x7a] sm:$0xff]
      %v620 = vld [vmem:[%s548 + $0x82] sm:$0xff]
      %v621 = vld [vmem:[%s548 + $0x92] sm:$0xff]
      %v622 = vld [vmem:[%s548 + $0x9a] sm:$0xff]
      %v623 = vld [vmem:[%s548 + $0xaa] sm:$0xff]
      %v624 = vld [vmem:[%s548 + $0xb2] sm:$0xff]
      %v625 = vld [vmem:[%s548 + $0xc2] sm:$0xff]
      %v626 = vld [vmem:[%s548 + $0xca] sm:$0xff]
      %v627 = vld [vmem:[%s548 + $0xda] sm:$0xff]
      %v628 = vld [vmem:[%s548 + $0xe2] sm:$0xff]
      %v629 = vld [vmem:[%s548 + $0xf2] sm:$0xff]
      %v630 = vld [vmem:[%s548 + $0xfa] sm:$0xff]
      %v631 = vld [vmem:[%s548 + $0x10a] sm:$0xff]
      %v632 = vld [vmem:[%s548 + $0x112] sm:$0xff]
      %v633 = vld [vmem:[%s548 + $0x122] sm:$0xff]
      %v634 = vld [vmem:[%s548 + $0x12a] sm:$0xff]
      %v635 = vld [vmem:[%s548 + $0x13a] sm:$0xff]
      %v636 = vld [vmem:[%s548 + $0x142] sm:$0xff]
      %v637 = vld [vmem:[%s548 + $0x152] sm:$0xff]
      %v638 = vld [vmem:[%s548 + $0x15a] sm:$0xff]
      %s639 = scalar_lea.vmem [#allocation2], 48
      %v640 = vld [vmem:[%s639] sm:$0xff]
      %v641 = vld [vmem:[%s639 + $0x8] sm:$0xff]
      %v642 = vld [vmem:[%s639 + $0x18] sm:$0xff]
      %v643 = vld [vmem:[%s639 + $0x20] sm:$0xff]
      %v644 = vld [vmem:[%s639 + $0x30] sm:$0xff]
      %v645 = vld [vmem:[%s639 + $0x38] sm:$0xff]
      %v646 = vld [vmem:[%s639 + $0x48] sm:$0xff]
      %v647 = vld [vmem:[%s639 + $0x50] sm:$0xff]
      %v648 = vld [vmem:[%s639 + $0x60] sm:$0xff]
      %v649 = vld [vmem:[%s639 + $0x68] sm:$0xff]
      %v650 = vld [vmem:[%s639 + $0x78] sm:$0xff]
      %v651 = vld [vmem:[%s639 + $0x80] sm:$0xff]
      %v652 = vld [vmem:[%s639 + $0x90] sm:$0xff]
      %v653 = vld [vmem:[%s639 + $0x98] sm:$0xff]
      %v654 = vld [vmem:[%s639 + $0xa8] sm:$0xff]
      %v655 = vld [vmem:[%s639 + $0xb0] sm:$0xff]
      %v656 = vld [vmem:[%s639 + $0xc0] sm:$0xff]
      %v657 = vld [vmem:[%s639 + $0xc8] sm:$0xff]
      %v658 = vld [vmem:[%s639 + $0xd8] sm:$0xff]
      %v659 = vld [vmem:[%s639 + $0xe0] sm:$0xff]
      %v660 = vld [vmem:[%s639 + $0xf0] sm:$0xff]
      %v661 = vld [vmem:[%s639 + $0xf8] sm:$0xff]
      %v662 = vld [vmem:[%s639 + $0x108] sm:$0xff]
      %v663 = vld [vmem:[%s639 + $0x110] sm:$0xff]
      %v664 = vld [vmem:[%s639 + $0x120] sm:$0xff]
      %v665 = vld [vmem:[%s639 + $0x128] sm:$0xff]
      %v666 = vld [vmem:[%s639 + $0x138] sm:$0xff]
      %v667 = vld [vmem:[%s639 + $0x140] sm:$0xff]
      %v668 = vld [vmem:[%s639 + $0x150] sm:$0xff]
      %v669 = vld [vmem:[%s639 + $0x158] sm:$0xff]
      %v670 = vld [vmem:[%s639 + $0x1] sm:$0xff]
      %v671 = vld [vmem:[%s639 + $0x9] sm:$0xff]
      %v672 = vld [vmem:[%s639 + $0x19] sm:$0xff]
      %v673 = vld [vmem:[%s639 + $0x21] sm:$0xff]
      %v674 = vld [vmem:[%s639 + $0x31] sm:$0xff]
      %v675 = vld [vmem:[%s639 + $0x39] sm:$0xff]
      %v676 = vld [vmem:[%s639 + $0x49] sm:$0xff]
      %v677 = vld [vmem:[%s639 + $0x51] sm:$0xff]
      %v678 = vld [vmem:[%s639 + $0x61] sm:$0xff]
      %v679 = vld [vmem:[%s639 + $0x69] sm:$0xff]
      %v680 = vld [vmem:[%s639 + $0x79] sm:$0xff]
      %v681 = vld [vmem:[%s639 + $0x81] sm:$0xff]
      %v682 = vld [vmem:[%s639 + $0x91] sm:$0xff]
      %v683 = vld [vmem:[%s639 + $0x99] sm:$0xff]
      %v684 = vld [vmem:[%s639 + $0xa9] sm:$0xff]
      %v685 = vld [vmem:[%s639 + $0xb1] sm:$0xff]
      %v686 = vld [vmem:[%s639 + $0xc1] sm:$0xff]
      %v687 = vld [vmem:[%s639 + $0xc9] sm:$0xff]
      %v688 = vld [vmem:[%s639 + $0xd9] sm:$0xff]
      %v689 = vld [vmem:[%s639 + $0xe1] sm:$0xff]
      %v690 = vld [vmem:[%s639 + $0xf1] sm:$0xff]
      %v691 = vld [vmem:[%s639 + $0xf9] sm:$0xff]
      %v692 = vld [vmem:[%s639 + $0x109] sm:$0xff]
      %v693 = vld [vmem:[%s639 + $0x111] sm:$0xff]
      %v694 = vld [vmem:[%s639 + $0x121] sm:$0xff]
      %v695 = vld [vmem:[%s639 + $0x129] sm:$0xff]
      %v696 = vld [vmem:[%s639 + $0x139] sm:$0xff]
      %v697 = vld [vmem:[%s639 + $0x141] sm:$0xff]
      %v698 = vld [vmem:[%s639 + $0x151] sm:$0xff]
      %v699 = vld [vmem:[%s639 + $0x159] sm:$0xff]
      %v700 = vld [vmem:[%s639 + $0x2] sm:$0xff]
      %v701 = vld [vmem:[%s639 + $0xa] sm:$0xff]
      %v702 = vld [vmem:[%s639 + $0x1a] sm:$0xff]
      %v703 = vld [vmem:[%s639 + $0x22] sm:$0xff]
      %v704 = vld [vmem:[%s639 + $0x32] sm:$0xff]
      %v705 = vld [vmem:[%s639 + $0x3a] sm:$0xff]
      %v706 = vld [vmem:[%s639 + $0x4a] sm:$0xff]
      %v707 = vld [vmem:[%s639 + $0x52] sm:$0xff]
      %v708 = vld [vmem:[%s639 + $0x62] sm:$0xff]
      %v709 = vld [vmem:[%s639 + $0x6a] sm:$0xff]
      %v710 = vld [vmem:[%s639 + $0x7a] sm:$0xff]
      %v711 = vld [vmem:[%s639 + $0x82] sm:$0xff]
      %v712 = vld [vmem:[%s639 + $0x92] sm:$0xff]
      %v713 = vld [vmem:[%s639 + $0x9a] sm:$0xff]
      %v714 = vld [vmem:[%s639 + $0xaa] sm:$0xff]
      %v715 = vld [vmem:[%s639 + $0xb2] sm:$0xff]
      %v716 = vld [vmem:[%s639 + $0xc2] sm:$0xff]
      %v717 = vld [vmem:[%s639 + $0xca] sm:$0xff]
      %v718 = vld [vmem:[%s639 + $0xda] sm:$0xff]
      %v719 = vld [vmem:[%s639 + $0xe2] sm:$0xff]
      %v720 = vld [vmem:[%s639 + $0xf2] sm:$0xff]
      %v721 = vld [vmem:[%s639 + $0xfa] sm:$0xff]
      %v722 = vld [vmem:[%s639 + $0x10a] sm:$0xff]
      %v723 = vld [vmem:[%s639 + $0x112] sm:$0xff]
      %v724 = vld [vmem:[%s639 + $0x122] sm:$0xff]
      %v725 = vld [vmem:[%s639 + $0x12a] sm:$0xff]
      %v726 = vld [vmem:[%s639 + $0x13a] sm:$0xff]
      %v727 = vld [vmem:[%s639 + $0x142] sm:$0xff]
      %v728 = vld [vmem:[%s639 + $0x152] sm:$0xff]
      %v729 = vld [vmem:[%s639 + $0x15a] sm:$0xff]
      %760 = vrot.lane.b32.xlu0 %v488, 32
      %v761 = vpop.permute.xlu0 %760
      %762 = vrot.lane.b32.xlu0 %v489, 32
      %v763 = vpop.permute.xlu0 %762
      %764 = vrot.lane.b32.xlu0 %v490, 32
      %v765 = vpop.permute.xlu0 %764
      %766 = vrot.lane.b32.xlu0 %v491, 32
      %v767 = vpop.permute.xlu0 %766
      %768 = vrot.lane.b32.xlu0 %v492, 32
      %v769 = vpop.permute.xlu0 %768
      %770 = vrot.lane.b32.xlu0 %v493, 32
      %v771 = vpop.permute.xlu0 %770
      %772 = vrot.lane.b32.xlu0 %v494, 32
      %v773 = vpop.permute.xlu0 %772
      %774 = vrot.lane.b32.xlu0 %v495, 32
      %v775 = vpop.permute.xlu0 %774
      %776 = vrot.lane.b32.xlu0 %v496, 32
      %v777 = vpop.permute.xlu0 %776
      %778 = vrot.lane.b32.xlu0 %v497, 32
      %v779 = vpop.permute.xlu0 %778
      %780 = vrot.lane.b32.xlu0 %v498, 32
      %v781 = vpop.permute.xlu0 %780
      %782 = vrot.lane.b32.xlu0 %v499, 32
      %v783 = vpop.permute.xlu0 %782
      %784 = vrot.lane.b32.xlu0 %v500, 32
      %v785 = vpop.permute.xlu0 %784
      %786 = vrot.lane.b32.xlu0 %v501, 32
      %v787 = vpop.permute.xlu0 %786
      %788 = vrot.lane.b32.xlu0 %v502, 32
      %v789 = vpop.permute.xlu0 %788
      %790 = vrot.lane.b32.xlu0 %v503, 32
      %v791 = vpop.permute.xlu0 %790
      %792 = vrot.lane.b32.xlu0 %v504, 32
      %v793 = vpop.permute.xlu0 %792
      %794 = vrot.lane.b32.xlu0 %v505, 32
      %v795 = vpop.permute.xlu0 %794
      %796 = vrot.lane.b32.xlu0 %v506, 32
      %v797 = vpop.permute.xlu0 %796
      %798 = vrot.lane.b32.xlu0 %v507, 32
      %v799 = vpop.permute.xlu0 %798
      %800 = vrot.lane.b32.xlu0 %v508, 32
      %v801 = vpop.permute.xlu0 %800
      %802 = vrot.lane.b32.xlu0 %v509, 32
      %v803 = vpop.permute.xlu0 %802
      %804 = vrot.lane.b32.xlu0 %v510, 32
      %v805 = vpop.permute.xlu0 %804
      %806 = vrot.lane.b32.xlu0 %v511, 32
      %v807 = vpop.permute.xlu0 %806
      %808 = vrot.lane.b32.xlu0 %v512, 32
      %v809 = vpop.permute.xlu0 %808
      %810 = vrot.lane.b32.xlu0 %v513, 32
      %v811 = vpop.permute.xlu0 %810
      %812 = vrot.lane.b32.xlu0 %v514, 32
      %v813 = vpop.permute.xlu0 %812
      %814 = vrot.lane.b32.xlu0 %v515, 32
      %v815 = vpop.permute.xlu0 %814
      %816 = vrot.lane.b32.xlu0 %v516, 32
      %v817 = vpop.permute.xlu0 %816
      %818 = vrot.lane.b32.xlu0 %v517, 32
      %v819 = vpop.permute.xlu0 %818
      %880 = vrot.lane.b32.xlu0 %v518, 64
      %v881 = vpop.permute.xlu0 %880
      %882 = vrot.lane.b32.xlu0 %v519, 64
      %v883 = vpop.permute.xlu0 %882
      %884 = vrot.lane.b32.xlu0 %v520, 64
      %v885 = vpop.permute.xlu0 %884
      %886 = vrot.lane.b32.xlu0 %v521, 64
      %v887 = vpop.permute.xlu0 %886
      %888 = vrot.lane.b32.xlu0 %v522, 64
      %v889 = vpop.permute.xlu0 %888
      %890 = vrot.lane.b32.xlu0 %v523, 64
      %v891 = vpop.permute.xlu0 %890
      %892 = vrot.lane.b32.xlu0 %v524, 64
      %v893 = vpop.permute.xlu0 %892
      %894 = vrot.lane.b32.xlu0 %v525, 64
      %v895 = vpop.permute.xlu0 %894
      %896 = vrot.lane.b32.xlu0 %v526, 64
      %v897 = vpop.permute.xlu0 %896
      %898 = vrot.lane.b32.xlu0 %v527, 64
      %v899 = vpop.permute.xlu0 %898
      %900 = vrot.lane.b32.xlu0 %v528, 64
      %v901 = vpop.permute.xlu0 %900
      %902 = vrot.lane.b32.xlu0 %v529, 64
      %v903 = vpop.permute.xlu0 %902
      %904 = vrot.lane.b32.xlu0 %v530, 64
      %v905 = vpop.permute.xlu0 %904
      %906 = vrot.lane.b32.xlu0 %v531, 64
      %v907 = vpop.permute.xlu0 %906
      %908 = vrot.lane.b32.xlu0 %v532, 64
      %v909 = vpop.permute.xlu0 %908
      %910 = vrot.lane.b32.xlu0 %v533, 64
      %v911 = vpop.permute.xlu0 %910
      %912 = vrot.lane.b32.xlu0 %v534, 64
      %v913 = vpop.permute.xlu0 %912
      %914 = vrot.lane.b32.xlu0 %v535, 64
      %v915 = vpop.permute.xlu0 %914
      %916 = vrot.lane.b32.xlu0 %v536, 64
      %v917 = vpop.permute.xlu0 %916
      %918 = vrot.lane.b32.xlu0 %v537, 64
      %v919 = vpop.permute.xlu0 %918
      %920 = vrot.lane.b32.xlu0 %v538, 64
      %v921 = vpop.permute.xlu0 %920
      %922 = vrot.lane.b32.xlu0 %v539, 64
      %v923 = vpop.permute.xlu0 %922
      %924 = vrot.lane.b32.xlu0 %v540, 64
      %v925 = vpop.permute.xlu0 %924
      %926 = vrot.lane.b32.xlu0 %v541, 64
      %v927 = vpop.permute.xlu0 %926
      %928 = vrot.lane.b32.xlu0 %v542, 64
      %v929 = vpop.permute.xlu0 %928
      %930 = vrot.lane.b32.xlu0 %v543, 64
      %v931 = vpop.permute.xlu0 %930
      %932 = vrot.lane.b32.xlu0 %v544, 64
      %v933 = vpop.permute.xlu0 %932
      %934 = vrot.lane.b32.xlu0 %v545, 64
      %v935 = vpop.permute.xlu0 %934
      %936 = vrot.lane.b32.xlu0 %v546, 64
      %v937 = vpop.permute.xlu0 %936
      %938 = vrot.lane.b32.xlu0 %v547, 64
      %v939 = vpop.permute.xlu0 %938
      %1000 = vrot.lane.b32.xlu0 %v549, 96
      %v1001 = vpop.permute.xlu0 %1000
      %1002 = vrot.lane.b32.xlu0 %v550, 96
      %v1003 = vpop.permute.xlu0 %1002
      %1004 = vrot.lane.b32.xlu0 %v551, 96
      %v1005 = vpop.permute.xlu0 %1004
      %1006 = vrot.lane.b32.xlu0 %v552, 96
      %v1007 = vpop.permute.xlu0 %1006
      %1008 = vrot.lane.b32.xlu0 %v553, 96
      %v1009 = vpop.permute.xlu0 %1008
      %1010 = vrot.lane.b32.xlu0 %v554, 96
      %v1011 = vpop.permute.xlu0 %1010
      %1012 = vrot.lane.b32.xlu0 %v555, 96
      %v1013 = vpop.permute.xlu0 %1012
      %1014 = vrot.lane.b32.xlu0 %v556, 96
      %v1015 = vpop.permute.xlu0 %1014
      %1016 = vrot.lane.b32.xlu0 %v557, 96
      %v1017 = vpop.permute.xlu0 %1016
      %1018 = vrot.lane.b32.xlu0 %v558, 96
      %v1019 = vpop.permute.xlu0 %1018
      %1020 = vrot.lane.b32.xlu0 %v559, 96
      %v1021 = vpop.permute.xlu0 %1020
      %1022 = vrot.lane.b32.xlu0 %v560, 96
      %v1023 = vpop.permute.xlu0 %1022
      %1024 = vrot.lane.b32.xlu0 %v561, 96
      %v1025 = vpop.permute.xlu0 %1024
      %1026 = vrot.lane.b32.xlu0 %v562, 96
      %v1027 = vpop.permute.xlu0 %1026
      %1028 = vrot.lane.b32.xlu0 %v563, 96
      %v1029 = vpop.permute.xlu0 %1028
      %1030 = vrot.lane.b32.xlu0 %v564, 96
      %v1031 = vpop.permute.xlu0 %1030
      %1032 = vrot.lane.b32.xlu0 %v565, 96
      %v1033 = vpop.permute.xlu0 %1032
      %1034 = vrot.lane.b32.xlu0 %v566, 96
      %v1035 = vpop.permute.xlu0 %1034
      %1036 = vrot.lane.b32.xlu0 %v567, 96
      %v1037 = vpop.permute.xlu0 %1036
      %1038 = vrot.lane.b32.xlu0 %v568, 96
      %v1039 = vpop.permute.xlu0 %1038
      %1040 = vrot.lane.b32.xlu0 %v569, 96
      %v1041 = vpop.permute.xlu0 %1040
      %1042 = vrot.lane.b32.xlu0 %v570, 96
      %v1043 = vpop.permute.xlu0 %1042
      %1044 = vrot.lane.b32.xlu0 %v571, 96
      %v1045 = vpop.permute.xlu0 %1044
      %1046 = vrot.lane.b32.xlu0 %v572, 96
      %v1047 = vpop.permute.xlu0 %1046
      %1048 = vrot.lane.b32.xlu0 %v573, 96
      %v1049 = vpop.permute.xlu0 %1048
      %1050 = vrot.lane.b32.xlu0 %v574, 96
      %v1051 = vpop.permute.xlu0 %1050
      %1052 = vrot.lane.b32.xlu0 %v575, 96
      %v1053 = vpop.permute.xlu0 %1052
      %1054 = vrot.lane.b32.xlu0 %v576, 96
      %v1055 = vpop.permute.xlu0 %1054
      %1056 = vrot.lane.b32.xlu0 %v577, 96
      %v1057 = vpop.permute.xlu0 %1056
      %1058 = vrot.lane.b32.xlu0 %v578, 96
      %v1059 = vpop.permute.xlu0 %1058
      %1120 = vrot.lane.b32.xlu0 %v609, 32
      %v1121 = vpop.permute.xlu0 %1120
      %1122 = vrot.lane.b32.xlu0 %v610, 32
      %v1123 = vpop.permute.xlu0 %1122
      %1124 = vrot.lane.b32.xlu0 %v611, 32
      %v1125 = vpop.permute.xlu0 %1124
      %1126 = vrot.lane.b32.xlu0 %v612, 32
      %v1127 = vpop.permute.xlu0 %1126
      %1128 = vrot.lane.b32.xlu0 %v613, 32
      %v1129 = vpop.permute.xlu0 %1128
      %1130 = vrot.lane.b32.xlu0 %v614, 32
      %v1131 = vpop.permute.xlu0 %1130
      %1132 = vrot.lane.b32.xlu0 %v615, 32
      %v1133 = vpop.permute.xlu0 %1132
      %1134 = vrot.lane.b32.xlu0 %v616, 32
      %v1135 = vpop.permute.xlu0 %1134
      %1136 = vrot.lane.b32.xlu0 %v617, 32
      %v1137 = vpop.permute.xlu0 %1136
      %1138 = vrot.lane.b32.xlu0 %v618, 32
      %v1139 = vpop.permute.xlu0 %1138
      %1140 = vrot.lane.b32.xlu0 %v619, 32
      %v1141 = vpop.permute.xlu0 %1140
      %1142 = vrot.lane.b32.xlu0 %v620, 32
      %v1143 = vpop.permute.xlu0 %1142
      %1144 = vrot.lane.b32.xlu0 %v621, 32
      %v1145 = vpop.permute.xlu0 %1144
      %1146 = vrot.lane.b32.xlu0 %v622, 32
      %v1147 = vpop.permute.xlu0 %1146
      %1148 = vrot.lane.b32.xlu0 %v623, 32
      %v1149 = vpop.permute.xlu0 %1148
      %1150 = vrot.lane.b32.xlu0 %v624, 32
      %v1151 = vpop.permute.xlu0 %1150
      %1152 = vrot.lane.b32.xlu0 %v625, 32
      %v1153 = vpop.permute.xlu0 %1152
      %1154 = vrot.lane.b32.xlu0 %v626, 32
      %v1155 = vpop.permute.xlu0 %1154
      %1156 = vrot.lane.b32.xlu0 %v627, 32
      %v1157 = vpop.permute.xlu0 %1156
      %1158 = vrot.lane.b32.xlu0 %v628, 32
      %v1159 = vpop.permute.xlu0 %1158
      %1160 = vrot.lane.b32.xlu0 %v629, 32
      %v1161 = vpop.permute.xlu0 %1160
      %1162 = vrot.lane.b32.xlu0 %v630, 32
      %v1163 = vpop.permute.xlu0 %1162
      %1164 = vrot.lane.b32.xlu0 %v631, 32
      %v1165 = vpop.permute.xlu0 %1164
      %1166 = vrot.lane.b32.xlu0 %v632, 32
      %v1167 = vpop.permute.xlu0 %1166
      %1168 = vrot.lane.b32.xlu0 %v633, 32
      %v1169 = vpop.permute.xlu0 %1168
      %1170 = vrot.lane.b32.xlu0 %v634, 32
      %v1171 = vpop.permute.xlu0 %1170
      %1172 = vrot.lane.b32.xlu0 %v635, 32
      %v1173 = vpop.permute.xlu0 %1172
      %1174 = vrot.lane.b32.xlu0 %v636, 32
      %v1175 = vpop.permute.xlu0 %1174
      %1176 = vrot.lane.b32.xlu0 %v637, 32
      %v1177 = vpop.permute.xlu0 %1176
      %1178 = vrot.lane.b32.xlu0 %v638, 32
      %v1179 = vpop.permute.xlu0 %1178
      %1240 = vrot.lane.b32.xlu0 %v640, 64
      %v1241 = vpop.permute.xlu0 %1240
      %1242 = vrot.lane.b32.xlu0 %v641, 64
      %v1243 = vpop.permute.xlu0 %1242
      %1244 = vrot.lane.b32.xlu0 %v642, 64
      %v1245 = vpop.permute.xlu0 %1244
      %1246 = vrot.lane.b32.xlu0 %v643, 64
      %v1247 = vpop.permute.xlu0 %1246
      %1248 = vrot.lane.b32.xlu0 %v644, 64
      %v1249 = vpop.permute.xlu0 %1248
      %1250 = vrot.lane.b32.xlu0 %v645, 64
      %v1251 = vpop.permute.xlu0 %1250
      %1252 = vrot.lane.b32.xlu0 %v646, 64
      %v1253 = vpop.permute.xlu0 %1252
      %1254 = vrot.lane.b32.xlu0 %v647, 64
      %v1255 = vpop.permute.xlu0 %1254
      %1256 = vrot.lane.b32.xlu0 %v648, 64
      %v1257 = vpop.permute.xlu0 %1256
      %1258 = vrot.lane.b32.xlu0 %v649, 64
      %v1259 = vpop.permute.xlu0 %1258
      %1260 = vrot.lane.b32.xlu0 %v650, 64
      %v1261 = vpop.permute.xlu0 %1260
      %1262 = vrot.lane.b32.xlu0 %v651, 64
      %v1263 = vpop.permute.xlu0 %1262
      %1264 = vrot.lane.b32.xlu0 %v652, 64
      %v1265 = vpop.permute.xlu0 %1264
      %1266 = vrot.lane.b32.xlu0 %v653, 64
      %v1267 = vpop.permute.xlu0 %1266
      %1268 = vrot.lane.b32.xlu0 %v654, 64
      %v1269 = vpop.permute.xlu0 %1268
      %1270 = vrot.lane.b32.xlu0 %v655, 64
      %v1271 = vpop.permute.xlu0 %1270
      %1272 = vrot.lane.b32.xlu0 %v656, 64
      %v1273 = vpop.permute.xlu0 %1272
      %1274 = vrot.lane.b32.xlu0 %v657, 64
      %v1275 = vpop.permute.xlu0 %1274
      %1276 = vrot.lane.b32.xlu0 %v658, 64
      %v1277 = vpop.permute.xlu0 %1276
      %1278 = vrot.lane.b32.xlu0 %v659, 64
      %v1279 = vpop.permute.xlu0 %1278
      %1280 = vrot.lane.b32.xlu0 %v660, 64
      %v1281 = vpop.permute.xlu0 %1280
      %1282 = vrot.lane.b32.xlu0 %v661, 64
      %v1283 = vpop.permute.xlu0 %1282
      %1284 = vrot.lane.b32.xlu0 %v662, 64
      %v1285 = vpop.permute.xlu0 %1284
      %1286 = vrot.lane.b32.xlu0 %v663, 64
      %v1287 = vpop.permute.xlu0 %1286
      %1288 = vrot.lane.b32.xlu0 %v664, 64
      %v1289 = vpop.permute.xlu0 %1288
      %1290 = vrot.lane.b32.xlu0 %v665, 64
      %v1291 = vpop.permute.xlu0 %1290
      %1292 = vrot.lane.b32.xlu0 %v666, 64
      %v1293 = vpop.permute.xlu0 %1292
      %1294 = vrot.lane.b32.xlu0 %v667, 64
      %v1295 = vpop.permute.xlu0 %1294
      %1296 = vrot.lane.b32.xlu0 %v668, 64
      %v1297 = vpop.permute.xlu0 %1296
      %1298 = vrot.lane.b32.xlu0 %v669, 64
      %v1299 = vpop.permute.xlu0 %1298
      %1360 = vrot.lane.b32.xlu0 %v670, 96
      %v1361 = vpop.permute.xlu0 %1360
      %1362 = vrot.lane.b32.xlu0 %v671, 96
      %v1363 = vpop.permute.xlu0 %1362
      %1364 = vrot.lane.b32.xlu0 %v672, 96
      %v1365 = vpop.permute.xlu0 %1364
      %1366 = vrot.lane.b32.xlu0 %v673, 96
      %v1367 = vpop.permute.xlu0 %1366
      %1368 = vrot.lane.b32.xlu0 %v674, 96
      %v1369 = vpop.permute.xlu0 %1368
      %1370 = vrot.lane.b32.xlu0 %v675, 96
      %v1371 = vpop.permute.xlu0 %1370
      %1372 = vrot.lane.b32.xlu0 %v676, 96
      %v1373 = vpop.permute.xlu0 %1372
      %1374 = vrot.lane.b32.xlu0 %v677, 96
      %v1375 = vpop.permute.xlu0 %1374
      %1376 = vrot.lane.b32.xlu0 %v678, 96
      %v1377 = vpop.permute.xlu0 %1376
      %1378 = vrot.lane.b32.xlu0 %v679, 96
      %v1379 = vpop.permute.xlu0 %1378
      %1380 = vrot.lane.b32.xlu0 %v680, 96
      %v1381 = vpop.permute.xlu0 %1380
      %1382 = vrot.lane.b32.xlu0 %v681, 96
      %v1383 = vpop.permute.xlu0 %1382
      %1384 = vrot.lane.b32.xlu0 %v682, 96
      %v1385 = vpop.permute.xlu0 %1384
      %1386 = vrot.lane.b32.xlu0 %v683, 96
      %v1387 = vpop.permute.xlu0 %1386
      %1388 = vrot.lane.b32.xlu0 %v684, 96
      %v1389 = vpop.permute.xlu0 %1388
      %1390 = vrot.lane.b32.xlu0 %v685, 96
      %v1391 = vpop.permute.xlu0 %1390
      %1392 = vrot.lane.b32.xlu0 %v686, 96
      %v1393 = vpop.permute.xlu0 %1392
      %1394 = vrot.lane.b32.xlu0 %v687, 96
      %v1395 = vpop.permute.xlu0 %1394
      %1396 = vrot.lane.b32.xlu0 %v688, 96
      %v1397 = vpop.permute.xlu0 %1396
      %1398 = vrot.lane.b32.xlu0 %v689, 96
      %v1399 = vpop.permute.xlu0 %1398
      %1400 = vrot.lane.b32.xlu0 %v690, 96
      %v1401 = vpop.permute.xlu0 %1400
      %1402 = vrot.lane.b32.xlu0 %v691, 96
      %v1403 = vpop.permute.xlu0 %1402
      %1404 = vrot.lane.b32.xlu0 %v692, 96
      %v1405 = vpop.permute.xlu0 %1404
      %1406 = vrot.lane.b32.xlu0 %v693, 96
      %v1407 = vpop.permute.xlu0 %1406
      %1408 = vrot.lane.b32.xlu0 %v694, 96
      %v1409 = vpop.permute.xlu0 %1408
      %1410 = vrot.lane.b32.xlu0 %v695, 96
      %v1411 = vpop.permute.xlu0 %1410
      %1412 = vrot.lane.b32.xlu0 %v696, 96
      %v1413 = vpop.permute.xlu0 %1412
      %1414 = vrot.lane.b32.xlu0 %v697, 96
      %v1415 = vpop.permute.xlu0 %1414
      %1416 = vrot.lane.b32.xlu0 %v698, 96
      %v1417 = vpop.permute.xlu0 %1416
      %1418 = vrot.lane.b32.xlu0 %v699, 96
      %v1419 = vpop.permute.xlu0 %1418
      %vm1450 = vcmask 261120
      %v1451 = vsel %vm1450, %v458, %v761
      %v1452 = vsel %vm1450, %v459, %v763
      %v1453 = vsel %vm1450, %v460, %v765
      %v1454 = vsel %vm1450, %v461, %v767
      %v1455 = vsel %vm1450, %v462, %v769
      %v1456 = vsel %vm1450, %v463, %v771
      %v1457 = vsel %vm1450, %v464, %v773
      %v1458 = vsel %vm1450, %v465, %v775
      %v1459 = vsel %vm1450, %v466, %v777
      %v1460 = vsel %vm1450, %v467, %v779
      %v1461 = vsel %vm1450, %v468, %v781
      %v1462 = vsel %vm1450, %v469, %v783
      %v1463 = vsel %vm1450, %v470, %v785
      %v1464 = vsel %vm1450, %v471, %v787
      %v1465 = vsel %vm1450, %v472, %v789
      %v1466 = vsel %vm1450, %v473, %v791
      %v1467 = vsel %vm1450, %v474, %v793
      %v1468 = vsel %vm1450, %v475, %v795
      %v1469 = vsel %vm1450, %v476, %v797
      %v1470 = vsel %vm1450, %v477, %v799
      %v1471 = vsel %vm1450, %v478, %v801
      %v1472 = vsel %vm1450, %v479, %v803
      %v1473 = vsel %vm1450, %v480, %v805
      %v1474 = vsel %vm1450, %v481, %v807
      %v1475 = vsel %vm1450, %v482, %v809
      %v1476 = vsel %vm1450, %v483, %v811
      %v1477 = vsel %vm1450, %v484, %v813
      %v1478 = vsel %vm1450, %v485, %v815
      %v1479 = vsel %vm1450, %v486, %v817
      %v1480 = vsel %vm1450, %v487, %v819
      %vm1481 = vcmask 523264
      %v1482 = vsel %vm1481, %v1451, %v881
      %v1483 = vsel %vm1481, %v1452, %v883
      %v1484 = vsel %vm1481, %v1453, %v885
      %v1485 = vsel %vm1481, %v1454, %v887
      %v1486 = vsel %vm1481, %v1455, %v889
      %v1487 = vsel %vm1481, %v1456, %v891
      %v1488 = vsel %vm1481, %v1457, %v893
      %v1489 = vsel %vm1481, %v1458, %v895
      %v1490 = vsel %vm1481, %v1459, %v897
      %v1491 = vsel %vm1481, %v1460, %v899
      %v1492 = vsel %vm1481, %v1461, %v901
      %v1493 = vsel %vm1481, %v1462, %v903
      %v1494 = vsel %vm1481, %v1463, %v905
      %v1495 = vsel %vm1481, %v1464, %v907
      %v1496 = vsel %vm1481, %v1465, %v909
      %v1497 = vsel %vm1481, %v1466, %v911
      %v1498 = vsel %vm1481, %v1467, %v913
      %v1499 = vsel %vm1481, %v1468, %v915
      %v1500 = vsel %vm1481, %v1469, %v917
      %v1501 = vsel %vm1481, %v1470, %v919
      %v1502 = vsel %vm1481, %v1471, %v921
      %v1503 = vsel %vm1481, %v1472, %v923
      %v1504 = vsel %vm1481, %v1473, %v925
      %v1505 = vsel %vm1481, %v1474, %v927
      %v1506 = vsel %vm1481, %v1475, %v929
      %v1507 = vsel %vm1481, %v1476, %v931
      %v1508 = vsel %vm1481, %v1477, %v933
      %v1509 = vsel %vm1481, %v1478, %v935
      %v1510 = vsel %vm1481, %v1479, %v937
      %v1511 = vsel %vm1481, %v1480, %v939
      %vm1512 = vcmask 785408
      %v1513 = vsel %vm1512, %v1482, %v1001
      %v1514 = vsel %vm1512, %v1483, %v1003
      %v1515 = vsel %vm1512, %v1484, %v1005
      %v1516 = vsel %vm1512, %v1485, %v1007
      %v1517 = vsel %vm1512, %v1486, %v1009
      %v1518 = vsel %vm1512, %v1487, %v1011
      %v1519 = vsel %vm1512, %v1488, %v1013
      %v1520 = vsel %vm1512, %v1489, %v1015
      %v1521 = vsel %vm1512, %v1490, %v1017
      %v1522 = vsel %vm1512, %v1491, %v1019
      %v1523 = vsel %vm1512, %v1492, %v1021
      %v1524 = vsel %vm1512, %v1493, %v1023
      %v1525 = vsel %vm1512, %v1494, %v1025
      %v1526 = vsel %vm1512, %v1495, %v1027
      %v1527 = vsel %vm1512, %v1496, %v1029
      %v1528 = vsel %vm1512, %v1497, %v1031
      %v1529 = vsel %vm1512, %v1498, %v1033
      %v1530 = vsel %vm1512, %v1499, %v1035
      %v1531 = vsel %vm1512, %v1500, %v1037
      %v1532 = vsel %vm1512, %v1501, %v1039
      %v1533 = vsel %vm1512, %v1502, %v1041
      %v1534 = vsel %vm1512, %v1503, %v1043
      %v1535 = vsel %vm1512, %v1504, %v1045
      %v1536 = vsel %vm1512, %v1505, %v1047
      %v1537 = vsel %vm1512, %v1506, %v1049
      %v1538 = vsel %vm1512, %v1507, %v1051
      %v1539 = vsel %vm1512, %v1508, %v1053
      %v1540 = vsel %vm1512, %v1509, %v1055
      %v1541 = vsel %vm1512, %v1510, %v1057
      %v1542 = vsel %vm1512, %v1511, %v1059
      %v1543 = vsel %vm1450, %v579, %v1121
      %v1544 = vsel %vm1450, %v580, %v1123
      %v1545 = vsel %vm1450, %v581, %v1125
      %v1546 = vsel %vm1450, %v582, %v1127
      %v1547 = vsel %vm1450, %v583, %v1129
      %v1548 = vsel %vm1450, %v584, %v1131
      %v1549 = vsel %vm1450, %v585, %v1133
      %v1550 = vsel %vm1450, %v586, %v1135
      %v1551 = vsel %vm1450, %v587, %v1137
      %v1552 = vsel %vm1450, %v588, %v1139
      %v1553 = vsel %vm1450, %v589, %v1141
      %v1554 = vsel %vm1450, %v590, %v1143
      %v1555 = vsel %vm1450, %v591, %v1145
      %v1556 = vsel %vm1450, %v592, %v1147
      %v1557 = vsel %vm1450, %v593, %v1149
      %v1558 = vsel %vm1450, %v594, %v1151
      %v1559 = vsel %vm1450, %v595, %v1153
      %v1560 = vsel %vm1450, %v596, %v1155
      %v1561 = vsel %vm1450, %v597, %v1157
      %v1562 = vsel %vm1450, %v598, %v1159
      %v1563 = vsel %vm1450, %v599, %v1161
      %v1564 = vsel %vm1450, %v600, %v1163
      %v1565 = vsel %vm1450, %v601, %v1165
      %v1566 = vsel %vm1450, %v602, %v1167
      %v1567 = vsel %vm1450, %v603, %v1169
      %v1568 = vsel %vm1450, %v604, %v1171
      %v1569 = vsel %vm1450, %v605, %v1173
      %v1570 = vsel %vm1450, %v606, %v1175
      %v1571 = vsel %vm1450, %v607, %v1177
      %v1572 = vsel %vm1450, %v608, %v1179
      %v1573 = vsel %vm1481, %v1543, %v1241
      %v1574 = vsel %vm1481, %v1544, %v1243
      %v1575 = vsel %vm1481, %v1545, %v1245
      %v1576 = vsel %vm1481, %v1546, %v1247
      %v1577 = vsel %vm1481, %v1547, %v1249
      %v1578 = vsel %vm1481, %v1548, %v1251
      %v1579 = vsel %vm1481, %v1549, %v1253
      %v1580 = vsel %vm1481, %v1550, %v1255
      %v1581 = vsel %vm1481, %v1551, %v1257
      %v1582 = vsel %vm1481, %v1552, %v1259
      %v1583 = vsel %vm1481, %v1553, %v1261
      %v1584 = vsel %vm1481, %v1554, %v1263
      %v1585 = vsel %vm1481, %v1555, %v1265
      %v1586 = vsel %vm1481, %v1556, %v1267
      %v1587 = vsel %vm1481, %v1557, %v1269
      %v1588 = vsel %vm1481, %v1558, %v1271
      %v1589 = vsel %vm1481, %v1559, %v1273
      %v1590 = vsel %vm1481, %v1560, %v1275
      %v1591 = vsel %vm1481, %v1561, %v1277
      %v1592 = vsel %vm1481, %v1562, %v1279
      %v1593 = vsel %vm1481, %v1563, %v1281
      %v1594 = vsel %vm1481, %v1564, %v1283
      %v1595 = vsel %vm1481, %v1565, %v1285
      %v1596 = vsel %vm1481, %v1566, %v1287
      %v1597 = vsel %vm1481, %v1567, %v1289
      %v1598 = vsel %vm1481, %v1568, %v1291
      %v1599 = vsel %vm1481, %v1569, %v1293
      %v1600 = vsel %vm1481, %v1570, %v1295
      %v1601 = vsel %vm1481, %v1571, %v1297
      %v1602 = vsel %vm1481, %v1572, %v1299
      %v1603 = vsel %vm1512, %v1573, %v1361
      %v1604 = vsel %vm1512, %v1574, %v1363
      %v1605 = vsel %vm1512, %v1575, %v1365
      %v1606 = vsel %vm1512, %v1576, %v1367
      %v1607 = vsel %vm1512, %v1577, %v1369
      %v1608 = vsel %vm1512, %v1578, %v1371
      %v1609 = vsel %vm1512, %v1579, %v1373
      %v1610 = vsel %vm1512, %v1580, %v1375
      %v1611 = vsel %vm1512, %v1581, %v1377
      %v1612 = vsel %vm1512, %v1582, %v1379
      %v1613 = vsel %vm1512, %v1583, %v1381
      %v1614 = vsel %vm1512, %v1584, %v1383
      %v1615 = vsel %vm1512, %v1585, %v1385
      %v1616 = vsel %vm1512, %v1586, %v1387
      %v1617 = vsel %vm1512, %v1587, %v1389
      %v1618 = vsel %vm1512, %v1588, %v1391
      %v1619 = vsel %vm1512, %v1589, %v1393
      %v1620 = vsel %vm1512, %v1590, %v1395
      %v1621 = vsel %vm1512, %v1591, %v1397
      %v1622 = vsel %vm1512, %v1592, %v1399
      %v1623 = vsel %vm1512, %v1593, %v1401
      %v1624 = vsel %vm1512, %v1594, %v1403
      %v1625 = vsel %vm1512, %v1595, %v1405
      %v1626 = vsel %vm1512, %v1596, %v1407
      %v1627 = vsel %vm1512, %v1597, %v1409
      %v1628 = vsel %vm1512, %v1598, %v1411
      %v1629 = vsel %vm1512, %v1599, %v1413
      %v1630 = vsel %vm1512, %v1600, %v1415
      %v1631 = vsel %vm1512, %v1601, %v1417
      %v1632 = vsel %vm1512, %v1602, %v1419
      %v1633 = vld [vmem:[%s226] sm:$0xff]
      %v1634 = vld [vmem:[%s226 + $0x8] sm:$0xff]
      %v1635 = vld [vmem:[%s226 + $0x10] sm:$0xff]
      %v1636 = vld [vmem:[%s226 + $0x18] sm:$0xff]
      %v1637 = vld [vmem:[%s226 + $0x20] sm:$0xff]
      %v1638 = vld [vmem:[%s226 + $0x28] sm:$0xff]
      %v1639 = vld [vmem:[%s226 + $0x30] sm:$0xff]
      %v1640 = vld [vmem:[%s226 + $0x38] sm:$0xff]
      %v1641 = vld [vmem:[%s226 + $0x40] sm:$0xff]
      %v1642 = vld [vmem:[%s226 + $0x48] sm:$0xff]
      %v1643 = vld [vmem:[%s226 + $0x50] sm:$0xff]
      %v1644 = vld [vmem:[%s226 + $0x58] sm:$0xff]
      %v1645 = vld [vmem:[%s226 + $0x60] sm:$0xff]
      %v1646 = vld [vmem:[%s226 + $0x68] sm:$0xff]
      %v1647 = vld [vmem:[%s226 + $0x70] sm:$0xff]
      %v1648 = vld [vmem:[%s226 + $0x78] sm:$0xff]
      %v1649 = vld [vmem:[%s226 + $0x80] sm:$0xff]
      %v1650 = vld [vmem:[%s226 + $0x88] sm:$0xff]
      %v1651 = vld [vmem:[%s226 + $0x90] sm:$0xff]
      %v1652 = vld [vmem:[%s226 + $0x98] sm:$0xff]
      %v1653 = vld [vmem:[%s226 + $0xa0] sm:$0xff]
      %v1654 = vld [vmem:[%s226 + $0xa8] sm:$0xff]
      %v1655 = vld [vmem:[%s226 + $0xb0] sm:$0xff]
      %v1656 = vld [vmem:[%s226 + $0xb8] sm:$0xff]
      %v1657 = vld [vmem:[%s226 + $0xc0] sm:$0xff]
      %v1658 = vld [vmem:[%s226 + $0xc8] sm:$0xff]
      %v1659 = vld [vmem:[%s226 + $0xd0] sm:$0xff]
      %v1660 = vld [vmem:[%s226 + $0xd8] sm:$0xff]
      %v1661 = vld [vmem:[%s226 + $0xe0] sm:$0xff]
      %v1662 = vld [vmem:[%s226 + $0xe8] sm:$0xff]
      %v1663 = vld [vmem:[%s226 + $0xf0] sm:$0xff]
      %v1664 = vld [vmem:[%s226 + $0xf8] sm:$0xff]
      %v1665 = vld [vmem:[%s226 + $0x100] sm:$0xff]
      %v1666 = vld [vmem:[%s226 + $0x108] sm:$0xff]
      %v1667 = vld [vmem:[%s226 + $0x110] sm:$0xff]
      %v1668 = vld [vmem:[%s226 + $0x118] sm:$0xff]
      %v1670 = vsel %vm1450, %v700, 0
      %v1673 = vsel %vm1450, %v701, 0
      %v1676 = vsel %vm1450, %v702, 0
      %v1679 = vsel %vm1450, %v703, 0
      %v1682 = vsel %vm1450, %v704, 0
      %v1685 = vsel %vm1450, %v705, 0
      %v1688 = vsel %vm1450, %v706, 0
      %v1691 = vsel %vm1450, %v707, 0
      %v1694 = vsel %vm1450, %v708, 0
      %v1697 = vsel %vm1450, %v709, 0
      %v1700 = vsel %vm1450, %v710, 0
      %v1703 = vsel %vm1450, %v711, 0
      %v1706 = vsel %vm1450, %v712, 0
      %v1709 = vsel %vm1450, %v713, 0
      %v1712 = vsel %vm1450, %v714, 0
      %v1715 = vsel %vm1450, %v715, 0
      %v1718 = vsel %vm1450, %v716, 0
      %v1721 = vsel %vm1450, %v717, 0
      %v1724 = vsel %vm1450, %v718, 0
      %v1727 = vsel %vm1450, %v719, 0
      %v1730 = vsel %vm1450, %v720, 0
      %v1733 = vsel %vm1450, %v721, 0
      %v1736 = vsel %vm1450, %v722, 0
      %v1739 = vsel %vm1450, %v723, 0
      %v1742 = vsel %vm1450, %v724, 0
      %v1745 = vsel %vm1450, %v725, 0
      %v1748 = vsel %vm1450, %v726, 0
      %v1751 = vsel %vm1450, %v727, 0
      %v1754 = vsel %vm1450, %v728, 0
      %v1757 = vsel %vm1450, %v729, 0
      %1759 = vmatprep.subr.mxu0 0.0
      %v1760 = vand.u32 %v1648, 4294901760
      %1761 = vmatpush1.msra.mxu0 %v1760
      %1762 = vmatprep.subr.mxu0 0.0
      %v1763 = vand.u32 %v1647, 4294901760
      %1764 = vmatpush1.msra.mxu0 %v1763
      %1765 = vmatprep.subr.mxu0 0.0
      %v1766 = vand.u32 %v1646, 4294901760
      %1767 = vmatpush1.msra.mxu0 %v1766
      %1768 = vmatprep.subr.mxu0 0.0
      %v1769 = vand.u32 %v1645, 4294901760
      %1770 = vmatpush1.msra.mxu0 %v1769
      %1771 = vmatprep.subr.mxu0 0.0
      %v1772 = vand.u32 %v1644, 4294901760
      %1773 = vmatpush1.msra.mxu0 %v1772
      %1774 = vmatprep.subr.mxu0 0.0
      %v1775 = vand.u32 %v1643, 4294901760
      %1776 = vmatpush1.msra.mxu0 %v1775
      %1777 = vmatprep.subr.mxu0 0.0
      %v1778 = vand.u32 %v1642, 4294901760
      %1779 = vmatpush1.msra.mxu0 %v1778
      %1780 = vmatprep.subr.mxu0 0.0
      %v1781 = vand.u32 %v1641, 4294901760
      %1782 = vmatpush1.msra.mxu0 %v1781
      %1783 = vmatprep.subr.mxu0 0.0
      %v1784 = vand.u32 %v1640, 4294901760
      %1785 = vmatpush1.msra.mxu0 %v1784
      %1786 = vmatprep.subr.mxu0 0.0
      %v1787 = vand.u32 %v1639, 4294901760
      %1788 = vmatpush1.msra.mxu0 %v1787
      %1789 = vmatprep.subr.mxu0 0.0
      %v1790 = vand.u32 %v1638, 4294901760
      %1791 = vmatpush1.msra.mxu0 %v1790
      %1792 = vmatprep.subr.mxu0 0.0
      %v1793 = vand.u32 %v1637, 4294901760
      %1794 = vmatpush1.msra.mxu0 %v1793
      %1795 = vmatprep.subr.mxu0 0.0
      %v1796 = vand.u32 %v1636, 4294901760
      %1797 = vmatpush1.msra.mxu0 %v1796
      %1798 = vmatprep.subr.mxu0 0.0
      %v1799 = vand.u32 %v1635, 4294901760
      %1800 = vmatpush1.msra.mxu0 %v1799
      %1801 = vmatprep.subr.mxu0 0.0
      %v1802 = vand.u32 %v1634, 4294901760
      %1803 = vmatpush1.msra.mxu0 %v1802
      %1804 = vmatprep.subr.mxu0 0.0
      %v1805 = vand.u32 %v1633, 4294901760
      %1806 = vmatpush1.msra.mxu0 %v1805
      %1807 = vmatprep.subr.mxu0 0.0
      %v1808 = vand.u32 %v1664, 4294901760
      %1809 = vmatpush2.msra.mxu0 %v1808
      %1810 = vmatprep.subr.mxu0 0.0
      %v1811 = vand.u32 %v1663, 4294901760
      %1812 = vmatpush2.msra.mxu0 %v1811
      %1813 = vmatprep.subr.mxu0 0.0
      %v1814 = vand.u32 %v1662, 4294901760
      %1815 = vmatpush2.msra.mxu0 %v1814
      %1816 = vmatprep.subr.mxu0 0.0
      %v1817 = vand.u32 %v1661, 4294901760
      %1818 = vmatpush2.msra.mxu0 %v1817
      %1819 = vmatprep.subr.mxu0 0.0
      %v1820 = vand.u32 %v1660, 4294901760
      %1821 = vmatpush2.msra.mxu0 %v1820
      %1822 = vmatprep.subr.mxu0 0.0
      %v1823 = vand.u32 %v1659, 4294901760
      %1824 = vmatpush2.msra.mxu0 %v1823
      %1825 = vmatprep.subr.mxu0 0.0
      %v1826 = vand.u32 %v1658, 4294901760
      %1827 = vmatpush2.msra.mxu0 %v1826
      %1828 = vmatprep.subr.mxu0 0.0
      %v1829 = vand.u32 %v1657, 4294901760
      %1830 = vmatpush2.msra.mxu0 %v1829
      %1831 = vmatprep.subr.mxu0 0.0
      %v1832 = vand.u32 %v1656, 4294901760
      %1833 = vmatpush2.msra.mxu0 %v1832
      %1834 = vmatprep.subr.mxu0 0.0
      %v1835 = vand.u32 %v1655, 4294901760
      %1836 = vmatpush2.msra.mxu0 %v1835
      %1837 = vmatprep.subr.mxu0 0.0
      %v1838 = vand.u32 %v1654, 4294901760
      %1839 = vmatpush2.msra.mxu0 %v1838
      %1840 = vmatprep.subr.mxu0 0.0
      %v1841 = vand.u32 %v1653, 4294901760
      %1842 = vmatpush2.msra.mxu0 %v1841
      %1843 = vmatprep.subr.mxu0 0.0
      %v1844 = vand.u32 %v1652, 4294901760
      %1845 = vmatpush2.msra.mxu0 %v1844
      %1846 = vmatprep.subr.mxu0 0.0
      %v1847 = vand.u32 %v1651, 4294901760
      %1848 = vmatpush2.msra.mxu0 %v1847
      %1849 = vmatprep.subr.mxu0 0.0
      %v1850 = vand.u32 %v1650, 4294901760
      %1851 = vmatpush2.msra.mxu0 %v1850
      %1852 = vmatprep.subr.mxu0 0.0
      %v1853 = vand.u32 %v1649, 4294901760
      %1854 = vmatpush2.msra.mxu0 %v1853
      %v1855 = vand.u32 %v1603, 4294901760
      %v1856 = vsub.f32 %v1603, %v1855
      %v1857 = vand.u32 %v1856, 4294901760
      %v1858 = vsub.f32 %v1856, %v1857
      %v1859 = vand.u32 %v1858, 4294901760
      %1860 = vmatprep.mubr.f32.mxu0 %v1859
      %v1861 = vand.u32 %v1513, 4294901760
      %v1862 = vsub.f32 %v1513, %v1861
      %v1863 = vand.u32 %v1862, 4294901760
      %v1864 = vsub.f32 %v1862, %v1863
      %v1865 = vand.u32 %v1864, 4294901760
      %1866 = vmatmul.mubr.f32.gmra.mxu0 %v1865
      %v1867 = vpop.f32.mrf.mxu0
      %v1868 = vadd.f32 0.0, %v1867
      %v1869 = vpop.f32.mrf.mxu0
      %v1870 = vand.u32 %v1604, 4294901760
      %v1871 = vsub.f32 %v1604, %v1870
      %v1872 = vand.u32 %v1871, 4294901760
      %v1873 = vsub.f32 %v1871, %v1872
      %v1874 = vand.u32 %v1873, 4294901760
      %1875 = vmatprep.mubr.f32.mxu0 %v1874
      %v1876 = vand.u32 %v1514, 4294901760
      %v1877 = vsub.f32 %v1514, %v1876
      %v1878 = vand.u32 %v1877, 4294901760
      %v1879 = vsub.f32 %v1877, %v1878
      %v1880 = vand.u32 %v1879, 4294901760
      %1881 = vmatmul.mubr.f32.gmra.mxu0 %v1880
      %v1882 = vpop.f32.mrf.mxu0
      %v1883 = vadd.f32 0.0, %v1882
      %v1884 = vpop.f32.mrf.mxu0
      %v1885 = vand.u32 %v1605, 4294901760
      %v1886 = vsub.f32 %v1605, %v1885
      %v1887 = vand.u32 %v1886, 4294901760
      %v1888 = vsub.f32 %v1886, %v1887
      %v1889 = vand.u32 %v1888, 4294901760
      %1890 = vmatprep.mubr.f32.mxu0 %v1889
      %v1891 = vand.u32 %v1515, 4294901760
      %v1892 = vsub.f32 %v1515, %v1891
      %v1893 = vand.u32 %v1892, 4294901760
      %v1894 = vsub.f32 %v1892, %v1893
      %v1895 = vand.u32 %v1894, 4294901760
      %1896 = vmatmul.mubr.f32.gmra.mxu0 %v1895
      %v1897 = vpop.f32.mrf.mxu0
      %v1898 = vadd.f32 0.0, %v1897
      %v1899 = vpop.f32.mrf.mxu0
      %v1900 = vand.u32 %v1606, 4294901760
      %v1901 = vsub.f32 %v1606, %v1900
      %v1902 = vand.u32 %v1901, 4294901760
      %v1903 = vsub.f32 %v1901, %v1902
      %v1904 = vand.u32 %v1903, 4294901760
      %1905 = vmatprep.mubr.f32.mxu0 %v1904
      %v1906 = vand.u32 %v1516, 4294901760
      %v1907 = vsub.f32 %v1516, %v1906
      %v1908 = vand.u32 %v1907, 4294901760
      %v1909 = vsub.f32 %v1907, %v1908
      %v1910 = vand.u32 %v1909, 4294901760
      %1911 = vmatmul.mubr.f32.gmra.mxu0 %v1910
      %v1912 = vpop.f32.mrf.mxu0
      %v1913 = vadd.f32 0.0, %v1912
      %v1914 = vpop.f32.mrf.mxu0
      %v1915 = vand.u32 %v1607, 4294901760
      %v1916 = vsub.f32 %v1607, %v1915
      %v1917 = vand.u32 %v1916, 4294901760
      %v1918 = vsub.f32 %v1916, %v1917
      %v1919 = vand.u32 %v1918, 4294901760
      %1920 = vmatprep.mubr.f32.mxu0 %v1919
      %v1921 = vand.u32 %v1517, 4294901760
      %v1922 = vsub.f32 %v1517, %v1921
      %v1923 = vand.u32 %v1922, 4294901760
      %v1924 = vsub.f32 %v1922, %v1923
      %v1925 = vand.u32 %v1924, 4294901760
      %1926 = vmatmul.mubr.f32.gmra.mxu0 %v1925
      %v1927 = vpop.f32.mrf.mxu0
      %v1928 = vadd.f32 0.0, %v1927
      %v1929 = vpop.f32.mrf.mxu0
      %v1930 = vand.u32 %v1608, 4294901760
      %v1931 = vsub.f32 %v1608, %v1930
      %v1932 = vand.u32 %v1931, 4294901760
      %v1933 = vsub.f32 %v1931, %v1932
      %v1934 = vand.u32 %v1933, 4294901760
      %1935 = vmatprep.mubr.f32.mxu0 %v1934
      %v1936 = vand.u32 %v1518, 4294901760
      %v1937 = vsub.f32 %v1518, %v1936
      %v1938 = vand.u32 %v1937, 4294901760
      %v1939 = vsub.f32 %v1937, %v1938
      %v1940 = vand.u32 %v1939, 4294901760
      %1941 = vmatmul.mubr.f32.gmra.mxu0 %v1940
      %v1942 = vpop.f32.mrf.mxu0
      %v1943 = vadd.f32 0.0, %v1942
      %v1944 = vpop.f32.mrf.mxu0
      %v1945 = vand.u32 %v1609, 4294901760
      %v1946 = vsub.f32 %v1609, %v1945
      %v1947 = vand.u32 %v1946, 4294901760
      %v1948 = vsub.f32 %v1946, %v1947
      %v1949 = vand.u32 %v1948, 4294901760
      %1950 = vmatprep.mubr.f32.mxu0 %v1949
      %v1951 = vand.u32 %v1519, 4294901760
      %v1952 = vsub.f32 %v1519, %v1951
      %v1953 = vand.u32 %v1952, 4294901760
      %v1954 = vsub.f32 %v1952, %v1953
      %v1955 = vand.u32 %v1954, 4294901760
      %1956 = vmatmul.mubr.f32.gmra.mxu0 %v1955
      %v1957 = vpop.f32.mrf.mxu0
      %v1958 = vadd.f32 0.0, %v1957
      %v1959 = vpop.f32.mrf.mxu0
      %v1960 = vand.u32 %v1610, 4294901760
      %v1961 = vsub.f32 %v1610, %v1960
      %v1962 = vand.u32 %v1961, 4294901760
      %v1963 = vsub.f32 %v1961, %v1962
      %v1964 = vand.u32 %v1963, 4294901760
      %1965 = vmatprep.mubr.f32.mxu0 %v1964
      %v1966 = vand.u32 %v1520, 4294901760
      %v1967 = vsub.f32 %v1520, %v1966
      %v1968 = vand.u32 %v1967, 4294901760
      %v1969 = vsub.f32 %v1967, %v1968
      %v1970 = vand.u32 %v1969, 4294901760
      %1971 = vmatmul.mubr.f32.gmra.mxu0 %v1970
      %v1972 = vpop.f32.mrf.mxu0
      %v1973 = vadd.f32 0.0, %v1972
      %v1974 = vpop.f32.mrf.mxu0
      %v1975 = vand.u32 %v1611, 4294901760
      %v1976 = vsub.f32 %v1611, %v1975
      %v1977 = vand.u32 %v1976, 4294901760
      %v1978 = vsub.f32 %v1976, %v1977
      %v1979 = vand.u32 %v1978, 4294901760
      %1980 = vmatprep.mubr.f32.mxu0 %v1979
      %v1981 = vand.u32 %v1521, 4294901760
      %v1982 = vsub.f32 %v1521, %v1981
      %v1983 = vand.u32 %v1982, 4294901760
      %v1984 = vsub.f32 %v1982, %v1983
      %v1985 = vand.u32 %v1984, 4294901760
      %1986 = vmatmul.mubr.f32.gmra.mxu0 %v1985
      %v1987 = vpop.f32.mrf.mxu0
      %v1988 = vadd.f32 0.0, %v1987
      %v1989 = vpop.f32.mrf.mxu0
      %v1990 = vand.u32 %v1612, 4294901760
      %v1991 = vsub.f32 %v1612, %v1990
      %v1992 = vand.u32 %v1991, 4294901760
      %v1993 = vsub.f32 %v1991, %v1992
      %v1994 = vand.u32 %v1993, 4294901760
      %1995 = vmatprep.mubr.f32.mxu0 %v1994
      %v1996 = vand.u32 %v1522, 4294901760
      %v1997 = vsub.f32 %v1522, %v1996
      %v1998 = vand.u32 %v1997, 4294901760
      %v1999 = vsub.f32 %v1997, %v1998
      %v2000 = vand.u32 %v1999, 4294901760
      %2001 = vmatmul.mubr.f32.gmra.mxu0 %v2000
      %v2002 = vpop.f32.mrf.mxu0
      %v2003 = vadd.f32 0.0, %v2002
      %v2004 = vpop.f32.mrf.mxu0
      %v2005 = vand.u32 %v1613, 4294901760
      %v2006 = vsub.f32 %v1613, %v2005
      %v2007 = vand.u32 %v2006, 4294901760
      %v2008 = vsub.f32 %v2006, %v2007
      %v2009 = vand.u32 %v2008, 4294901760
      %2010 = vmatprep.mubr.f32.mxu0 %v2009
      %v2011 = vand.u32 %v1523, 4294901760
      %v2012 = vsub.f32 %v1523, %v2011
      %v2013 = vand.u32 %v2012, 4294901760
      %v2014 = vsub.f32 %v2012, %v2013
      %v2015 = vand.u32 %v2014, 4294901760
      %2016 = vmatmul.mubr.f32.gmra.mxu0 %v2015
      %v2017 = vpop.f32.mrf.mxu0
      %v2018 = vadd.f32 0.0, %v2017
      %v2019 = vpop.f32.mrf.mxu0
      %v2020 = vand.u32 %v1614, 4294901760
      %v2021 = vsub.f32 %v1614, %v2020
      %v2022 = vand.u32 %v2021, 4294901760
      %v2023 = vsub.f32 %v2021, %v2022
      %v2024 = vand.u32 %v2023, 4294901760
      %2025 = vmatprep.mubr.f32.mxu0 %v2024
      %v2026 = vand.u32 %v1524, 4294901760
      %v2027 = vsub.f32 %v1524, %v2026
      %v2028 = vand.u32 %v2027, 4294901760
      %v2029 = vsub.f32 %v2027, %v2028
      %v2030 = vand.u32 %v2029, 4294901760
      %2031 = vmatmul.mubr.f32.gmra.mxu0 %v2030
      %v2032 = vpop.f32.mrf.mxu0
      %v2033 = vadd.f32 0.0, %v2032
      %v2034 = vpop.f32.mrf.mxu0
      %v2035 = vand.u32 %v1615, 4294901760
      %v2036 = vsub.f32 %v1615, %v2035
      %v2037 = vand.u32 %v2036, 4294901760
      %v2038 = vsub.f32 %v2036, %v2037
      %v2039 = vand.u32 %v2038, 4294901760
      %2040 = vmatprep.mubr.f32.mxu0 %v2039
      %v2041 = vand.u32 %v1525, 4294901760
      %v2042 = vsub.f32 %v1525, %v2041
      %v2043 = vand.u32 %v2042, 4294901760
      %v2044 = vsub.f32 %v2042, %v2043
      %v2045 = vand.u32 %v2044, 4294901760
      %2046 = vmatmul.mubr.f32.gmra.mxu0 %v2045
      %v2047 = vpop.f32.mrf.mxu0
      %v2048 = vadd.f32 0.0, %v2047
      %v2049 = vpop.f32.mrf.mxu0
      %v2050 = vand.u32 %v1616, 4294901760
      %v2051 = vsub.f32 %v1616, %v2050
      %v2052 = vand.u32 %v2051, 4294901760
      %v2053 = vsub.f32 %v2051, %v2052
      %v2054 = vand.u32 %v2053, 4294901760
      %2055 = vmatprep.mubr.f32.mxu0 %v2054
      %v2056 = vand.u32 %v1526, 4294901760
      %v2057 = vsub.f32 %v1526, %v2056
      %v2058 = vand.u32 %v2057, 4294901760
      %v2059 = vsub.f32 %v2057, %v2058
      %v2060 = vand.u32 %v2059, 4294901760
      %2061 = vmatmul.mubr.f32.gmra.mxu0 %v2060
      %v2062 = vpop.f32.mrf.mxu0
      %v2063 = vadd.f32 0.0, %v2062
      %v2064 = vpop.f32.mrf.mxu0
      %v2065 = vand.u32 %v1617, 4294901760
      %v2066 = vsub.f32 %v1617, %v2065
      %v2067 = vand.u32 %v2066, 4294901760
      %v2068 = vsub.f32 %v2066, %v2067
      %v2069 = vand.u32 %v2068, 4294901760
      %2070 = vmatprep.mubr.f32.mxu0 %v2069
      %v2071 = vand.u32 %v1527, 4294901760
      %v2072 = vsub.f32 %v1527, %v2071
      %v2073 = vand.u32 %v2072, 4294901760
      %v2074 = vsub.f32 %v2072, %v2073
      %v2075 = vand.u32 %v2074, 4294901760
      %2076 = vmatmul.mubr.f32.gmra.mxu0 %v2075
      %v2077 = vpop.f32.mrf.mxu0
      %v2078 = vadd.f32 0.0, %v2077
      %v2079 = vpop.f32.mrf.mxu0
      %v2080 = vand.u32 %v1618, 4294901760
      %v2081 = vsub.f32 %v1618, %v2080
      %v2082 = vand.u32 %v2081, 4294901760
      %v2083 = vsub.f32 %v2081, %v2082
      %v2084 = vand.u32 %v2083, 4294901760
      %2085 = vmatprep.mubr.f32.mxu0 %v2084
      %v2086 = vand.u32 %v1528, 4294901760
      %v2087 = vsub.f32 %v1528, %v2086
      %v2088 = vand.u32 %v2087, 4294901760
      %v2089 = vsub.f32 %v2087, %v2088
      %v2090 = vand.u32 %v2089, 4294901760
      %2091 = vmatmul.mubr.f32.gmra.mxu0 %v2090
      %v2092 = vpop.f32.mrf.mxu0
      %v2093 = vadd.f32 0.0, %v2092
      %v2094 = vpop.f32.mrf.mxu0
      %v2095 = vand.u32 %v1619, 4294901760
      %v2096 = vsub.f32 %v1619, %v2095
      %v2097 = vand.u32 %v2096, 4294901760
      %v2098 = vsub.f32 %v2096, %v2097
      %v2099 = vand.u32 %v2098, 4294901760
      %2100 = vmatprep.mubr.f32.mxu0 %v2099
      %v2101 = vand.u32 %v1529, 4294901760
      %v2102 = vsub.f32 %v1529, %v2101
      %v2103 = vand.u32 %v2102, 4294901760
      %v2104 = vsub.f32 %v2102, %v2103
      %v2105 = vand.u32 %v2104, 4294901760
      %2106 = vmatmul.mubr.f32.gmra.mxu0 %v2105
      %v2107 = vpop.f32.mrf.mxu0
      %v2108 = vadd.f32 0.0, %v2107
      %v2109 = vpop.f32.mrf.mxu0
      %v2110 = vand.u32 %v1620, 4294901760
      %v2111 = vsub.f32 %v1620, %v2110
      %v2112 = vand.u32 %v2111, 4294901760
      %v2113 = vsub.f32 %v2111, %v2112
      %v2114 = vand.u32 %v2113, 4294901760
      %2115 = vmatprep.mubr.f32.mxu0 %v2114
      %v2116 = vand.u32 %v1530, 4294901760
      %v2117 = vsub.f32 %v1530, %v2116
      %v2118 = vand.u32 %v2117, 4294901760
      %v2119 = vsub.f32 %v2117, %v2118
      %v2120 = vand.u32 %v2119, 4294901760
      %2121 = vmatmul.mubr.f32.gmra.mxu0 %v2120
      %v2122 = vpop.f32.mrf.mxu0
      %v2123 = vadd.f32 0.0, %v2122
      %v2124 = vpop.f32.mrf.mxu0
      %v2125 = vand.u32 %v1621, 4294901760
      %v2126 = vsub.f32 %v1621, %v2125
      %v2127 = vand.u32 %v2126, 4294901760
      %v2128 = vsub.f32 %v2126, %v2127
      %v2129 = vand.u32 %v2128, 4294901760
      %2130 = vmatprep.mubr.f32.mxu0 %v2129
      %v2131 = vand.u32 %v1531, 4294901760
      %v2132 = vsub.f32 %v1531, %v2131
      %v2133 = vand.u32 %v2132, 4294901760
      %v2134 = vsub.f32 %v2132, %v2133
      %v2135 = vand.u32 %v2134, 4294901760
      %2136 = vmatmul.mubr.f32.gmra.mxu0 %v2135
      %v2137 = vpop.f32.mrf.mxu0
      %v2138 = vadd.f32 0.0, %v2137
      %v2139 = vpop.f32.mrf.mxu0
      %v2140 = vand.u32 %v1622, 4294901760
      %v2141 = vsub.f32 %v1622, %v2140
      %v2142 = vand.u32 %v2141, 4294901760
      %v2143 = vsub.f32 %v2141, %v2142
      %v2144 = vand.u32 %v2143, 4294901760
      %2145 = vmatprep.mubr.f32.mxu0 %v2144
      %v2146 = vand.u32 %v1532, 4294901760
      %v2147 = vsub.f32 %v1532, %v2146
      %v2148 = vand.u32 %v2147, 4294901760
      %v2149 = vsub.f32 %v2147, %v2148
      %v2150 = vand.u32 %v2149, 4294901760
      %2151 = vmatmul.mubr.f32.gmra.mxu0 %v2150
      %v2152 = vpop.f32.mrf.mxu0
      %v2153 = vadd.f32 0.0, %v2152
      %v2154 = vpop.f32.mrf.mxu0
      %v2155 = vand.u32 %v1623, 4294901760
      %v2156 = vsub.f32 %v1623, %v2155
      %v2157 = vand.u32 %v2156, 4294901760
      %v2158 = vsub.f32 %v2156, %v2157
      %v2159 = vand.u32 %v2158, 4294901760
      %2160 = vmatprep.mubr.f32.mxu0 %v2159
      %v2161 = vand.u32 %v1533, 4294901760
      %v2162 = vsub.f32 %v1533, %v2161
      %v2163 = vand.u32 %v2162, 4294901760
      %v2164 = vsub.f32 %v2162, %v2163
      %v2165 = vand.u32 %v2164, 4294901760
      %2166 = vmatmul.mubr.f32.gmra.mxu0 %v2165
      %v2167 = vpop.f32.mrf.mxu0
      %v2168 = vadd.f32 0.0, %v2167
      %v2169 = vpop.f32.mrf.mxu0
      %v2170 = vand.u32 %v1624, 4294901760
      %v2171 = vsub.f32 %v1624, %v2170
      %v2172 = vand.u32 %v2171, 4294901760
      %v2173 = vsub.f32 %v2171, %v2172
      %v2174 = vand.u32 %v2173, 4294901760
      %2175 = vmatprep.mubr.f32.mxu0 %v2174
      %v2176 = vand.u32 %v1534, 4294901760
      %v2177 = vsub.f32 %v1534, %v2176
      %v2178 = vand.u32 %v2177, 4294901760
      %v2179 = vsub.f32 %v2177, %v2178
      %v2180 = vand.u32 %v2179, 4294901760
      %2181 = vmatmul.mubr.f32.gmra.mxu0 %v2180
      %v2182 = vpop.f32.mrf.mxu0
      %v2183 = vadd.f32 0.0, %v2182
      %v2184 = vpop.f32.mrf.mxu0
      %v2185 = vand.u32 %v1625, 4294901760
      %v2186 = vsub.f32 %v1625, %v2185
      %v2187 = vand.u32 %v2186, 4294901760
      %v2188 = vsub.f32 %v2186, %v2187
      %v2189 = vand.u32 %v2188, 4294901760
      %2190 = vmatprep.mubr.f32.mxu0 %v2189
      %v2191 = vand.u32 %v1535, 4294901760
      %v2192 = vsub.f32 %v1535, %v2191
      %v2193 = vand.u32 %v2192, 4294901760
      %v2194 = vsub.f32 %v2192, %v2193
      %v2195 = vand.u32 %v2194, 4294901760
      %2196 = vmatmul.mubr.f32.gmra.mxu0 %v2195
      %v2197 = vpop.f32.mrf.mxu0
      %v2198 = vadd.f32 0.0, %v2197
      %v2199 = vpop.f32.mrf.mxu0
      %v2200 = vand.u32 %v1626, 4294901760
      %v2201 = vsub.f32 %v1626, %v2200
      %v2202 = vand.u32 %v2201, 4294901760
      %v2203 = vsub.f32 %v2201, %v2202
      %v2204 = vand.u32 %v2203, 4294901760
      %2205 = vmatprep.mubr.f32.mxu0 %v2204
      %v2206 = vand.u32 %v1536, 4294901760
      %v2207 = vsub.f32 %v1536, %v2206
      %v2208 = vand.u32 %v2207, 4294901760
      %v2209 = vsub.f32 %v2207, %v2208
      %v2210 = vand.u32 %v2209, 4294901760
      %2211 = vmatmul.mubr.f32.gmra.mxu0 %v2210
      %v2212 = vpop.f32.mrf.mxu0
      %v2213 = vadd.f32 0.0, %v2212
      %v2214 = vpop.f32.mrf.mxu0
      %v2215 = vand.u32 %v1627, 4294901760
      %v2216 = vsub.f32 %v1627, %v2215
      %v2217 = vand.u32 %v2216, 4294901760
      %v2218 = vsub.f32 %v2216, %v2217
      %v2219 = vand.u32 %v2218, 4294901760
      %2220 = vmatprep.mubr.f32.mxu0 %v2219
      %v2221 = vand.u32 %v1537, 4294901760
      %v2222 = vsub.f32 %v1537, %v2221
      %v2223 = vand.u32 %v2222, 4294901760
      %v2224 = vsub.f32 %v2222, %v2223
      %v2225 = vand.u32 %v2224, 4294901760
      %2226 = vmatmul.mubr.f32.gmra.mxu0 %v2225
      %v2227 = vpop.f32.mrf.mxu0
      %v2228 = vadd.f32 0.0, %v2227
      %v2229 = vpop.f32.mrf.mxu0
      %v2230 = vand.u32 %v1628, 4294901760
      %v2231 = vsub.f32 %v1628, %v2230
      %v2232 = vand.u32 %v2231, 4294901760
      %v2233 = vsub.f32 %v2231, %v2232
      %v2234 = vand.u32 %v2233, 4294901760
      %2235 = vmatprep.mubr.f32.mxu0 %v2234
      %v2236 = vand.u32 %v1538, 4294901760
      %v2237 = vsub.f32 %v1538, %v2236
      %v2238 = vand.u32 %v2237, 4294901760
      %v2239 = vsub.f32 %v2237, %v2238
      %v2240 = vand.u32 %v2239, 4294901760
      %2241 = vmatmul.mubr.f32.gmra.mxu0 %v2240
      %v2242 = vpop.f32.mrf.mxu0
      %v2243 = vadd.f32 0.0, %v2242
      %v2244 = vpop.f32.mrf.mxu0
      %v2245 = vand.u32 %v1629, 4294901760
      %v2246 = vsub.f32 %v1629, %v2245
      %v2247 = vand.u32 %v2246, 4294901760
      %v2248 = vsub.f32 %v2246, %v2247
      %v2249 = vand.u32 %v2248, 4294901760
      %2250 = vmatprep.mubr.f32.mxu0 %v2249
      %v2251 = vand.u32 %v1539, 4294901760
      %v2252 = vsub.f32 %v1539, %v2251
      %v2253 = vand.u32 %v2252, 4294901760
      %v2254 = vsub.f32 %v2252, %v2253
      %v2255 = vand.u32 %v2254, 4294901760
      %2256 = vmatmul.mubr.f32.gmra.mxu0 %v2255
      %v2257 = vpop.f32.mrf.mxu0
      %v2258 = vadd.f32 0.0, %v2257
      %v2259 = vpop.f32.mrf.mxu0
      %v2260 = vand.u32 %v1630, 4294901760
      %v2261 = vsub.f32 %v1630, %v2260
      %v2262 = vand.u32 %v2261, 4294901760
      %v2263 = vsub.f32 %v2261, %v2262
      %v2264 = vand.u32 %v2263, 4294901760
      %2265 = vmatprep.mubr.f32.mxu0 %v2264
      %v2266 = vand.u32 %v1540, 4294901760
      %v2267 = vsub.f32 %v1540, %v2266
      %v2268 = vand.u32 %v2267, 4294901760
      %v2269 = vsub.f32 %v2267, %v2268
      %v2270 = vand.u32 %v2269, 4294901760
      %2271 = vmatmul.mubr.f32.gmra.mxu0 %v2270
      %v2272 = vpop.f32.mrf.mxu0
      %v2273 = vadd.f32 0.0, %v2272
      %v2274 = vpop.f32.mrf.mxu0
      %v2275 = vand.u32 %v1631, 4294901760
      %v2276 = vsub.f32 %v1631, %v2275
      %v2277 = vand.u32 %v2276, 4294901760
      %v2278 = vsub.f32 %v2276, %v2277
      %v2279 = vand.u32 %v2278, 4294901760
      %2280 = vmatprep.mubr.f32.mxu0 %v2279
      %v2281 = vand.u32 %v1541, 4294901760
      %v2282 = vsub.f32 %v1541, %v2281
      %v2283 = vand.u32 %v2282, 4294901760
      %v2284 = vsub.f32 %v2282, %v2283
      %v2285 = vand.u32 %v2284, 4294901760
      %2286 = vmatmul.mubr.f32.gmra.mxu0 %v2285
      %v2287 = vpop.f32.mrf.mxu0
      %v2288 = vadd.f32 0.0, %v2287
      %v2289 = vpop.f32.mrf.mxu0
      %v2290 = vand.u32 %v1632, 4294901760
      %v2291 = vsub.f32 %v1632, %v2290
      %v2292 = vand.u32 %v2291, 4294901760
      %v2293 = vsub.f32 %v2291, %v2292
      %v2294 = vand.u32 %v2293, 4294901760
      %2295 = vmatprep.mubr.f32.mxu0 %v2294
      %v2296 = vand.u32 %v1542, 4294901760
      %v2297 = vsub.f32 %v1542, %v2296
      %v2298 = vand.u32 %v2297, 4294901760
      %v2299 = vsub.f32 %v2297, %v2298
      %v2300 = vand.u32 %v2299, 4294901760
      %2301 = vmatmul.mubr.f32.gmra.mxu0 %v2300
      %v2302 = vpop.f32.mrf.mxu0
      %v2303 = vadd.f32 0.0, %v2302
      %v2304 = vpop.f32.mrf.mxu0
      %2305 = vdwg.mxu0
      %2306 = vmatprep.subr.mxu0 0.0
      %v2307 = vand.u32 %v1648, 4294901760
      %v2308 = vsub.f32 %v1648, %v2307
      %v2309 = vand.u32 %v2308, 4294901760
      %v2310 = vsub.f32 %v2308, %v2309
      %v2311 = vand.u32 %v2310, 4294901760
      %2312 = vmatpush1.msra.mxu0 %v2311
      %2313 = vmatprep.subr.mxu0 0.0
      %v2314 = vand.u32 %v1647, 4294901760
      %v2315 = vsub.f32 %v1647, %v2314
      %v2316 = vand.u32 %v2315, 4294901760
      %v2317 = vsub.f32 %v2315, %v2316
      %v2318 = vand.u32 %v2317, 4294901760
      %2319 = vmatpush1.msra.mxu0 %v2318
      %2320 = vmatprep.subr.mxu0 0.0
      %v2321 = vand.u32 %v1646, 4294901760
      %v2322 = vsub.f32 %v1646, %v2321
      %v2323 = vand.u32 %v2322, 4294901760
      %v2324 = vsub.f32 %v2322, %v2323
      %v2325 = vand.u32 %v2324, 4294901760
      %2326 = vmatpush1.msra.mxu0 %v2325
      %2327 = vmatprep.subr.mxu0 0.0
      %v2328 = vand.u32 %v1645, 4294901760
      %v2329 = vsub.f32 %v1645, %v2328
      %v2330 = vand.u32 %v2329, 4294901760
      %v2331 = vsub.f32 %v2329, %v2330
      %v2332 = vand.u32 %v2331, 4294901760
      %2333 = vmatpush1.msra.mxu0 %v2332
      %2334 = vmatprep.subr.mxu0 0.0
      %v2335 = vand.u32 %v1644, 4294901760
      %v2336 = vsub.f32 %v1644, %v2335
      %v2337 = vand.u32 %v2336, 4294901760
      %v2338 = vsub.f32 %v2336, %v2337
      %v2339 = vand.u32 %v2338, 4294901760
      %2340 = vmatpush1.msra.mxu0 %v2339
      %2341 = vmatprep.subr.mxu0 0.0
      %v2342 = vand.u32 %v1643, 4294901760
      %v2343 = vsub.f32 %v1643, %v2342
      %v2344 = vand.u32 %v2343, 4294901760
      %v2345 = vsub.f32 %v2343, %v2344
      %v2346 = vand.u32 %v2345, 4294901760
      %2347 = vmatpush1.msra.mxu0 %v2346
      %2348 = vmatprep.subr.mxu0 0.0
      %v2349 = vand.u32 %v1642, 4294901760
      %v2350 = vsub.f32 %v1642, %v2349
      %v2351 = vand.u32 %v2350, 4294901760
      %v2352 = vsub.f32 %v2350, %v2351
      %v2353 = vand.u32 %v2352, 4294901760
      %2354 = vmatpush1.msra.mxu0 %v2353
      %2355 = vmatprep.subr.mxu0 0.0
      %v2356 = vand.u32 %v1641, 4294901760
      %v2357 = vsub.f32 %v1641, %v2356
      %v2358 = vand.u32 %v2357, 4294901760
      %v2359 = vsub.f32 %v2357, %v2358
      %v2360 = vand.u32 %v2359, 4294901760
      %2361 = vmatpush1.msra.mxu0 %v2360
      %2362 = vmatprep.subr.mxu0 0.0
      %v2363 = vand.u32 %v1640, 4294901760
      %v2364 = vsub.f32 %v1640, %v2363
      %v2365 = vand.u32 %v2364, 4294901760
      %v2366 = vsub.f32 %v2364, %v2365
      %v2367 = vand.u32 %v2366, 4294901760
      %2368 = vmatpush1.msra.mxu0 %v2367
      %2369 = vmatprep.subr.mxu0 0.0
      %v2370 = vand.u32 %v1639, 4294901760
      %v2371 = vsub.f32 %v1639, %v2370
      %v2372 = vand.u32 %v2371, 4294901760
      %v2373 = vsub.f32 %v2371, %v2372
      %v2374 = vand.u32 %v2373, 4294901760
      %2375 = vmatpush1.msra.mxu0 %v2374
      %2376 = vmatprep.subr.mxu0 0.0
      %v2377 = vand.u32 %v1638, 4294901760
      %v2378 = vsub.f32 %v1638, %v2377
      %v2379 = vand.u32 %v2378, 4294901760
      %v2380 = vsub.f32 %v2378, %v2379
      %v2381 = vand.u32 %v2380, 4294901760
      %2382 = vmatpush1.msra.mxu0 %v2381
      %2383 = vmatprep.subr.mxu0 0.0
      %v2384 = vand.u32 %v1637, 4294901760
      %v2385 = vsub.f32 %v1637, %v2384
      %v2386 = vand.u32 %v2385, 4294901760
      %v2387 = vsub.f32 %v2385, %v2386
      %v2388 = vand.u32 %v2387, 4294901760
      %2389 = vmatpush1.msra.mxu0 %v2388
      %2390 = vmatprep.subr.mxu0 0.0
      %v2391 = vand.u32 %v1636, 4294901760
      %v2392 = vsub.f32 %v1636, %v2391
      %v2393 = vand.u32 %v2392, 4294901760
      %v2394 = vsub.f32 %v2392, %v2393
      %v2395 = vand.u32 %v2394, 4294901760
      %2396 = vmatpush1.msra.mxu0 %v2395
      %2397 = vmatprep.subr.mxu0 0.0
      %v2398 = vand.u32 %v1635, 4294901760
      %v2399 = vsub.f32 %v1635, %v2398
      %v2400 = vand.u32 %v2399, 4294901760
      %v2401 = vsub.f32 %v2399, %v2400
      %v2402 = vand.u32 %v2401, 4294901760
      %2403 = vmatpush1.msra.mxu0 %v2402
      %2404 = vmatprep.subr.mxu0 0.0
      %v2405 = vand.u32 %v1634, 4294901760
      %v2406 = vsub.f32 %v1634, %v2405
      %v2407 = vand.u32 %v2406, 4294901760
      %v2408 = vsub.f32 %v2406, %v2407
      %v2409 = vand.u32 %v2408, 4294901760
      %2410 = vmatpush1.msra.mxu0 %v2409
      %2411 = vmatprep.subr.mxu0 0.0
      %v2412 = vand.u32 %v1633, 4294901760
      %v2413 = vsub.f32 %v1633, %v2412
      %v2414 = vand.u32 %v2413, 4294901760
      %v2415 = vsub.f32 %v2413, %v2414
      %v2416 = vand.u32 %v2415, 4294901760
      %2417 = vmatpush1.msra.mxu0 %v2416
      %2418 = vmatprep.subr.mxu0 0.0
      %v2419 = vand.u32 %v1664, 4294901760
      %v2420 = vsub.f32 %v1664, %v2419
      %v2421 = vand.u32 %v2420, 4294901760
      %v2422 = vsub.f32 %v2420, %v2421
      %v2423 = vand.u32 %v2422, 4294901760
      %2424 = vmatpush2.msra.mxu0 %v2423
      %2425 = vmatprep.subr.mxu0 0.0
      %v2426 = vand.u32 %v1663, 4294901760
      %v2427 = vsub.f32 %v1663, %v2426
      %v2428 = vand.u32 %v2427, 4294901760
      %v2429 = vsub.f32 %v2427, %v2428
      %v2430 = vand.u32 %v2429, 4294901760
      %2431 = vmatpush2.msra.mxu0 %v2430
      %2432 = vmatprep.subr.mxu0 0.0
      %v2433 = vand.u32 %v1662, 4294901760
      %v2434 = vsub.f32 %v1662, %v2433
      %v2435 = vand.u32 %v2434, 4294901760
      %v2436 = vsub.f32 %v2434, %v2435
      %v2437 = vand.u32 %v2436, 4294901760
      %2438 = vmatpush2.msra.mxu0 %v2437
      %2439 = vmatprep.subr.mxu0 0.0
      %v2440 = vand.u32 %v1661, 4294901760
      %v2441 = vsub.f32 %v1661, %v2440
      %v2442 = vand.u32 %v2441, 4294901760
      %v2443 = vsub.f32 %v2441, %v2442
      %v2444 = vand.u32 %v2443, 4294901760
      %2445 = vmatpush2.msra.mxu0 %v2444
      %2446 = vmatprep.subr.mxu0 0.0
      %v2447 = vand.u32 %v1660, 4294901760
      %v2448 = vsub.f32 %v1660, %v2447
      %v2449 = vand.u32 %v2448, 4294901760
      %v2450 = vsub.f32 %v2448, %v2449
      %v2451 = vand.u32 %v2450, 4294901760
      %2452 = vmatpush2.msra.mxu0 %v2451
      %2453 = vmatprep.subr.mxu0 0.0
      %v2454 = vand.u32 %v1659, 4294901760
      %v2455 = vsub.f32 %v1659, %v2454
      %v2456 = vand.u32 %v2455, 4294901760
      %v2457 = vsub.f32 %v2455, %v2456
      %v2458 = vand.u32 %v2457, 4294901760
      %2459 = vmatpush2.msra.mxu0 %v2458
      %2460 = vmatprep.subr.mxu0 0.0
      %v2461 = vand.u32 %v1658, 4294901760
      %v2462 = vsub.f32 %v1658, %v2461
      %v2463 = vand.u32 %v2462, 4294901760
      %v2464 = vsub.f32 %v2462, %v2463
      %v2465 = vand.u32 %v2464, 4294901760
      %2466 = vmatpush2.msra.mxu0 %v2465
      %2467 = vmatprep.subr.mxu0 0.0
      %v2468 = vand.u32 %v1657, 4294901760
      %v2469 = vsub.f32 %v1657, %v2468
      %v2470 = vand.u32 %v2469, 4294901760
      %v2471 = vsub.f32 %v2469, %v2470
      %v2472 = vand.u32 %v2471, 4294901760
      %2473 = vmatpush2.msra.mxu0 %v2472
      %2474 = vmatprep.subr.mxu0 0.0
      %v2475 = vand.u32 %v1656, 4294901760
      %v2476 = vsub.f32 %v1656, %v2475
      %v2477 = vand.u32 %v2476, 4294901760
      %v2478 = vsub.f32 %v2476, %v2477
      %v2479 = vand.u32 %v2478, 4294901760
      %2480 = vmatpush2.msra.mxu0 %v2479
      %2481 = vmatprep.subr.mxu0 0.0
      %v2482 = vand.u32 %v1655, 4294901760
      %v2483 = vsub.f32 %v1655, %v2482
      %v2484 = vand.u32 %v2483, 4294901760
      %v2485 = vsub.f32 %v2483, %v2484
      %v2486 = vand.u32 %v2485, 4294901760
      %2487 = vmatpush2.msra.mxu0 %v2486
      %2488 = vmatprep.subr.mxu0 0.0
      %v2489 = vand.u32 %v1654, 4294901760
      %v2490 = vsub.f32 %v1654, %v2489
      %v2491 = vand.u32 %v2490, 4294901760
      %v2492 = vsub.f32 %v2490, %v2491
      %v2493 = vand.u32 %v2492, 4294901760
      %2494 = vmatpush2.msra.mxu0 %v2493
      %2495 = vmatprep.subr.mxu0 0.0
      %v2496 = vand.u32 %v1653, 4294901760
      %v2497 = vsub.f32 %v1653, %v2496
      %v2498 = vand.u32 %v2497, 4294901760
      %v2499 = vsub.f32 %v2497, %v2498
      %v2500 = vand.u32 %v2499, 4294901760
      %2501 = vmatpush2.msra.mxu0 %v2500
      %2502 = vmatprep.subr.mxu0 0.0
      %v2503 = vand.u32 %v1652, 4294901760
      %v2504 = vsub.f32 %v1652, %v2503
      %v2505 = vand.u32 %v2504, 4294901760
      %v2506 = vsub.f32 %v2504, %v2505
      %v2507 = vand.u32 %v2506, 4294901760
      %2508 = vmatpush2.msra.mxu0 %v2507
      %2509 = vmatprep.subr.mxu0 0.0
      %v2510 = vand.u32 %v1651, 4294901760
      %v2511 = vsub.f32 %v1651, %v2510
      %v2512 = vand.u32 %v2511, 4294901760
      %v2513 = vsub.f32 %v2511, %v2512
      %v2514 = vand.u32 %v2513, 4294901760
      %2515 = vmatpush2.msra.mxu0 %v2514
      %2516 = vmatprep.subr.mxu0 0.0
      %v2517 = vand.u32 %v1650, 4294901760
      %v2518 = vsub.f32 %v1650, %v2517
      %v2519 = vand.u32 %v2518, 4294901760
      %v2520 = vsub.f32 %v2518, %v2519
      %v2521 = vand.u32 %v2520, 4294901760
      %2522 = vmatpush2.msra.mxu0 %v2521
      %2523 = vmatprep.subr.mxu0 0.0
      %v2524 = vand.u32 %v1649, 4294901760
      %v2525 = vsub.f32 %v1649, %v2524
      %v2526 = vand.u32 %v2525, 4294901760
      %v2527 = vsub.f32 %v2525, %v2526
      %v2528 = vand.u32 %v2527, 4294901760
      %2529 = vmatpush2.msra.mxu0 %v2528
      %v2530 = vand.u32 %v1603, 4294901760
      %2531 = vmatprep.mubr.f32.mxu0 %v2530
      %v2532 = vand.u32 %v1513, 4294901760
      %2533 = vmatmul.mubr.f32.gmra.mxu0 %v2532
      %v2534 = vpop.f32.mrf.mxu0
      %v2535 = vadd.f32 %v1868, %v2534
      %v2536 = vpop.f32.mrf.mxu0
      %v2537 = vand.u32 %v1604, 4294901760
      %2538 = vmatprep.mubr.f32.mxu0 %v2537
      %v2539 = vand.u32 %v1514, 4294901760
      %2540 = vmatmul.mubr.f32.gmra.mxu0 %v2539
      %v2541 = vpop.f32.mrf.mxu0
      %v2542 = vadd.f32 %v1883, %v2541
      %v2543 = vpop.f32.mrf.mxu0
      %v2544 = vand.u32 %v1605, 4294901760
      %2545 = vmatprep.mubr.f32.mxu0 %v2544
      %v2546 = vand.u32 %v1515, 4294901760
      %2547 = vmatmul.mubr.f32.gmra.mxu0 %v2546
      %v2548 = vpop.f32.mrf.mxu0
      %v2549 = vadd.f32 %v1898, %v2548
      %v2550 = vpop.f32.mrf.mxu0
      %v2551 = vand.u32 %v1606, 4294901760
      %2552 = vmatprep.mubr.f32.mxu0 %v2551
      %v2553 = vand.u32 %v1516, 4294901760
      %2554 = vmatmul.mubr.f32.gmra.mxu0 %v2553
      %v2555 = vpop.f32.mrf.mxu0
      %v2556 = vadd.f32 %v1913, %v2555
      %v2557 = vpop.f32.mrf.mxu0
      %v2558 = vand.u32 %v1607, 4294901760
      %2559 = vmatprep.mubr.f32.mxu0 %v2558
      %v2560 = vand.u32 %v1517, 4294901760
      %2561 = vmatmul.mubr.f32.gmra.mxu0 %v2560
      %v2562 = vpop.f32.mrf.mxu0
      %v2563 = vadd.f32 %v1928, %v2562
      %v2564 = vpop.f32.mrf.mxu0
      %v2565 = vand.u32 %v1608, 4294901760
      %2566 = vmatprep.mubr.f32.mxu0 %v2565
      %v2567 = vand.u32 %v1518, 4294901760
      %2568 = vmatmul.mubr.f32.gmra.mxu0 %v2567
      %v2569 = vpop.f32.mrf.mxu0
      %v2570 = vadd.f32 %v1943, %v2569
      %v2571 = vpop.f32.mrf.mxu0
      %v2572 = vand.u32 %v1609, 4294901760
      %2573 = vmatprep.mubr.f32.mxu0 %v2572
      %v2574 = vand.u32 %v1519, 4294901760
      %2575 = vmatmul.mubr.f32.gmra.mxu0 %v2574
      %v2576 = vpop.f32.mrf.mxu0
      %v2577 = vadd.f32 %v1958, %v2576
      %v2578 = vpop.f32.mrf.mxu0
      %v2579 = vand.u32 %v1610, 4294901760
      %2580 = vmatprep.mubr.f32.mxu0 %v2579
      %v2581 = vand.u32 %v1520, 4294901760
      %2582 = vmatmul.mubr.f32.gmra.mxu0 %v2581
      %v2583 = vpop.f32.mrf.mxu0
      %v2584 = vadd.f32 %v1973, %v2583
      %v2585 = vpop.f32.mrf.mxu0
      %v2586 = vand.u32 %v1611, 4294901760
      %2587 = vmatprep.mubr.f32.mxu0 %v2586
      %v2588 = vand.u32 %v1521, 4294901760
      %2589 = vmatmul.mubr.f32.gmra.mxu0 %v2588
      %v2590 = vpop.f32.mrf.mxu0
      %v2591 = vadd.f32 %v1988, %v2590
      %v2592 = vpop.f32.mrf.mxu0
      %v2593 = vand.u32 %v1612, 4294901760
      %2594 = vmatprep.mubr.f32.mxu0 %v2593
      %v2595 = vand.u32 %v1522, 4294901760
      %2596 = vmatmul.mubr.f32.gmra.mxu0 %v2595
      %v2597 = vpop.f32.mrf.mxu0
      %v2598 = vadd.f32 %v2003, %v2597
      %v2599 = vpop.f32.mrf.mxu0
      %v2600 = vand.u32 %v1613, 4294901760
      %2601 = vmatprep.mubr.f32.mxu0 %v2600
      %v2602 = vand.u32 %v1523, 4294901760
      %2603 = vmatmul.mubr.f32.gmra.mxu0 %v2602
      %v2604 = vpop.f32.mrf.mxu0
      %v2605 = vadd.f32 %v2018, %v2604
      %v2606 = vpop.f32.mrf.mxu0
      %v2607 = vand.u32 %v1614, 4294901760
      %2608 = vmatprep.mubr.f32.mxu0 %v2607
      %v2609 = vand.u32 %v1524, 4294901760
      %2610 = vmatmul.mubr.f32.gmra.mxu0 %v2609
      %v2611 = vpop.f32.mrf.mxu0
      %v2612 = vadd.f32 %v2033, %v2611
      %v2613 = vpop.f32.mrf.mxu0
      %v2614 = vand.u32 %v1615, 4294901760
      %2615 = vmatprep.mubr.f32.mxu0 %v2614
      %v2616 = vand.u32 %v1525, 4294901760
      %2617 = vmatmul.mubr.f32.gmra.mxu0 %v2616
      %v2618 = vpop.f32.mrf.mxu0
      %v2619 = vadd.f32 %v2048, %v2618
      %v2620 = vpop.f32.mrf.mxu0
      %v2621 = vand.u32 %v1616, 4294901760
      %2622 = vmatprep.mubr.f32.mxu0 %v2621
      %v2623 = vand.u32 %v1526, 4294901760
      %2624 = vmatmul.mubr.f32.gmra.mxu0 %v2623
      %v2625 = vpop.f32.mrf.mxu0
      %v2626 = vadd.f32 %v2063, %v2625
      %v2627 = vpop.f32.mrf.mxu0
      %v2628 = vand.u32 %v1617, 4294901760
      %2629 = vmatprep.mubr.f32.mxu0 %v2628
      %v2630 = vand.u32 %v1527, 4294901760
      %2631 = vmatmul.mubr.f32.gmra.mxu0 %v2630
      %v2632 = vpop.f32.mrf.mxu0
      %v2633 = vadd.f32 %v2078, %v2632
      %v2634 = vpop.f32.mrf.mxu0
      %v2635 = vand.u32 %v1618, 4294901760
      %2636 = vmatprep.mubr.f32.mxu0 %v2635
      %v2637 = vand.u32 %v1528, 4294901760
      %2638 = vmatmul.mubr.f32.gmra.mxu0 %v2637
      %v2639 = vpop.f32.mrf.mxu0
      %v2640 = vadd.f32 %v2093, %v2639
      %v2641 = vpop.f32.mrf.mxu0
      %v2642 = vand.u32 %v1619, 4294901760
      %2643 = vmatprep.mubr.f32.mxu0 %v2642
      %v2644 = vand.u32 %v1529, 4294901760
      %2645 = vmatmul.mubr.f32.gmra.mxu0 %v2644
      %v2646 = vpop.f32.mrf.mxu0
      %v2647 = vadd.f32 %v2108, %v2646
      %v2648 = vpop.f32.mrf.mxu0
      %v2649 = vand.u32 %v1620, 4294901760
      %2650 = vmatprep.mubr.f32.mxu0 %v2649
      %v2651 = vand.u32 %v1530, 4294901760
      %2652 = vmatmul.mubr.f32.gmra.mxu0 %v2651
      %v2653 = vpop.f32.mrf.mxu0
      %v2654 = vadd.f32 %v2123, %v2653
      %v2655 = vpop.f32.mrf.mxu0
      %v2656 = vand.u32 %v1621, 4294901760
      %2657 = vmatprep.mubr.f32.mxu0 %v2656
      %v2658 = vand.u32 %v1531, 4294901760
      %2659 = vmatmul.mubr.f32.gmra.mxu0 %v2658
      %v2660 = vpop.f32.mrf.mxu0
      %v2661 = vadd.f32 %v2138, %v2660
      %v2662 = vpop.f32.mrf.mxu0
      %v2663 = vand.u32 %v1622, 4294901760
      %2664 = vmatprep.mubr.f32.mxu0 %v2663
      %v2665 = vand.u32 %v1532, 4294901760
      %2666 = vmatmul.mubr.f32.gmra.mxu0 %v2665
      %v2667 = vpop.f32.mrf.mxu0
      %v2668 = vadd.f32 %v2153, %v2667
      %v2669 = vpop.f32.mrf.mxu0
      %v2670 = vand.u32 %v1623, 4294901760
      %2671 = vmatprep.mubr.f32.mxu0 %v2670
      %v2672 = vand.u32 %v1533, 4294901760
      %2673 = vmatmul.mubr.f32.gmra.mxu0 %v2672
      %v2674 = vpop.f32.mrf.mxu0
      %v2675 = vadd.f32 %v2168, %v2674
      %v2676 = vpop.f32.mrf.mxu0
      %v2677 = vand.u32 %v1624, 4294901760
      %2678 = vmatprep.mubr.f32.mxu0 %v2677
      %v2679 = vand.u32 %v1534, 4294901760
      %2680 = vmatmul.mubr.f32.gmra.mxu0 %v2679
      %v2681 = vpop.f32.mrf.mxu0
      %v2682 = vadd.f32 %v2183, %v2681
      %v2683 = vpop.f32.mrf.mxu0
      %v2684 = vand.u32 %v1625, 4294901760
      %2685 = vmatprep.mubr.f32.mxu0 %v2684
      %v2686 = vand.u32 %v1535, 4294901760
      %2687 = vmatmul.mubr.f32.gmra.mxu0 %v2686
      %v2688 = vpop.f32.mrf.mxu0
      %v2689 = vadd.f32 %v2198, %v2688
      %v2690 = vpop.f32.mrf.mxu0
      %v2691 = vand.u32 %v1626, 4294901760
      %2692 = vmatprep.mubr.f32.mxu0 %v2691
      %v2693 = vand.u32 %v1536, 4294901760
      %2694 = vmatmul.mubr.f32.gmra.mxu0 %v2693
      %v2695 = vpop.f32.mrf.mxu0
      %v2696 = vadd.f32 %v2213, %v2695
      %v2697 = vpop.f32.mrf.mxu0
      %v2698 = vand.u32 %v1627, 4294901760
      %2699 = vmatprep.mubr.f32.mxu0 %v2698
      %v2700 = vand.u32 %v1537, 4294901760
      %2701 = vmatmul.mubr.f32.gmra.mxu0 %v2700
      %v2702 = vpop.f32.mrf.mxu0
      %v2703 = vadd.f32 %v2228, %v2702
      %v2704 = vpop.f32.mrf.mxu0
      %v2705 = vand.u32 %v1628, 4294901760
      %2706 = vmatprep.mubr.f32.mxu0 %v2705
      %v2707 = vand.u32 %v1538, 4294901760
      %2708 = vmatmul.mubr.f32.gmra.mxu0 %v2707
      %v2709 = vpop.f32.mrf.mxu0
      %v2710 = vadd.f32 %v2243, %v2709
      %v2711 = vpop.f32.mrf.mxu0
      %v2712 = vand.u32 %v1629, 4294901760
      %2713 = vmatprep.mubr.f32.mxu0 %v2712
      %v2714 = vand.u32 %v1539, 4294901760
      %2715 = vmatmul.mubr.f32.gmra.mxu0 %v2714
      %v2716 = vpop.f32.mrf.mxu0
      %v2717 = vadd.f32 %v2258, %v2716
      %v2718 = vpop.f32.mrf.mxu0
      %v2719 = vand.u32 %v1630, 4294901760
      %2720 = vmatprep.mubr.f32.mxu0 %v2719
      %v2721 = vand.u32 %v1540, 4294901760
      %2722 = vmatmul.mubr.f32.gmra.mxu0 %v2721
      %v2723 = vpop.f32.mrf.mxu0
      %v2724 = vadd.f32 %v2273, %v2723
      %v2725 = vpop.f32.mrf.mxu0
      %v2726 = vand.u32 %v1631, 4294901760
      %2727 = vmatprep.mubr.f32.mxu0 %v2726
      %v2728 = vand.u32 %v1541, 4294901760
      %2729 = vmatmul.mubr.f32.gmra.mxu0 %v2728
      %v2730 = vpop.f32.mrf.mxu0
      %v2731 = vadd.f32 %v2288, %v2730
      %v2732 = vpop.f32.mrf.mxu0
      %v2733 = vand.u32 %v1632, 4294901760
      %2734 = vmatprep.mubr.f32.mxu0 %v2733
      %v2735 = vand.u32 %v1542, 4294901760
      %2736 = vmatmul.mubr.f32.gmra.mxu0 %v2735
      %v2737 = vpop.f32.mrf.mxu0
      %v2738 = vadd.f32 %v2303, %v2737
      %v2739 = vpop.f32.mrf.mxu0
      %2740 = vdwg.mxu0
      %2741 = vmatprep.subr.mxu0 0.0
      %v2742 = vand.u32 %v1648, 4294901760
      %v2743 = vsub.f32 %v1648, %v2742
      %2744 = vmatpush1.msra.mxu0 %v2743
      %2745 = vmatprep.subr.mxu0 0.0
      %v2746 = vand.u32 %v1647, 4294901760
      %v2747 = vsub.f32 %v1647, %v2746
      %2748 = vmatpush1.msra.mxu0 %v2747
      %2749 = vmatprep.subr.mxu0 0.0
      %v2750 = vand.u32 %v1646, 4294901760
      %v2751 = vsub.f32 %v1646, %v2750
      %2752 = vmatpush1.msra.mxu0 %v2751
      %2753 = vmatprep.subr.mxu0 0.0
      %v2754 = vand.u32 %v1645, 4294901760
      %v2755 = vsub.f32 %v1645, %v2754
      %2756 = vmatpush1.msra.mxu0 %v2755
      %2757 = vmatprep.subr.mxu0 0.0
      %v2758 = vand.u32 %v1644, 4294901760
      %v2759 = vsub.f32 %v1644, %v2758
      %2760 = vmatpush1.msra.mxu0 %v2759
      %2761 = vmatprep.subr.mxu0 0.0
      %v2762 = vand.u32 %v1643, 4294901760
      %v2763 = vsub.f32 %v1643, %v2762
      %2764 = vmatpush1.msra.mxu0 %v2763
      %2765 = vmatprep.subr.mxu0 0.0
      %v2766 = vand.u32 %v1642, 4294901760
      %v2767 = vsub.f32 %v1642, %v2766
      %2768 = vmatpush1.msra.mxu0 %v2767
      %2769 = vmatprep.subr.mxu0 0.0
      %v2770 = vand.u32 %v1641, 4294901760
      %v2771 = vsub.f32 %v1641, %v2770
      %2772 = vmatpush1.msra.mxu0 %v2771
      %2773 = vmatprep.subr.mxu0 0.0
      %v2774 = vand.u32 %v1640, 4294901760
      %v2775 = vsub.f32 %v1640, %v2774
      %2776 = vmatpush1.msra.mxu0 %v2775
      %2777 = vmatprep.subr.mxu0 0.0
      %v2778 = vand.u32 %v1639, 4294901760
      %v2779 = vsub.f32 %v1639, %v2778
      %2780 = vmatpush1.msra.mxu0 %v2779
      %2781 = vmatprep.subr.mxu0 0.0
      %v2782 = vand.u32 %v1638, 4294901760
      %v2783 = vsub.f32 %v1638, %v2782
      %2784 = vmatpush1.msra.mxu0 %v2783
      %2785 = vmatprep.subr.mxu0 0.0
      %v2786 = vand.u32 %v1637, 4294901760
      %v2787 = vsub.f32 %v1637, %v2786
      %2788 = vmatpush1.msra.mxu0 %v2787
      %2789 = vmatprep.subr.mxu0 0.0
      %v2790 = vand.u32 %v1636, 4294901760
      %v2791 = vsub.f32 %v1636, %v2790
      %2792 = vmatpush1.msra.mxu0 %v2791
      %2793 = vmatprep.subr.mxu0 0.0
      %v2794 = vand.u32 %v1635, 4294901760
      %v2795 = vsub.f32 %v1635, %v2794
      %2796 = vmatpush1.msra.mxu0 %v2795
      %2797 = vmatprep.subr.mxu0 0.0
      %v2798 = vand.u32 %v1634, 4294901760
      %v2799 = vsub.f32 %v1634, %v2798
      %2800 = vmatpush1.msra.mxu0 %v2799
      %2801 = vmatprep.subr.mxu0 0.0
      %v2802 = vand.u32 %v1633, 4294901760
      %v2803 = vsub.f32 %v1633, %v2802
      %2804 = vmatpush1.msra.mxu0 %v2803
      %2805 = vmatprep.subr.mxu0 0.0
      %v2806 = vand.u32 %v1664, 4294901760
      %v2807 = vsub.f32 %v1664, %v2806
      %2808 = vmatpush2.msra.mxu0 %v2807
      %2809 = vmatprep.subr.mxu0 0.0
      %v2810 = vand.u32 %v1663, 4294901760
      %v2811 = vsub.f32 %v1663, %v2810
      %2812 = vmatpush2.msra.mxu0 %v2811
      %2813 = vmatprep.subr.mxu0 0.0
      %v2814 = vand.u32 %v1662, 4294901760
      %v2815 = vsub.f32 %v1662, %v2814
      %2816 = vmatpush2.msra.mxu0 %v2815
      %2817 = vmatprep.subr.mxu0 0.0
      %v2818 = vand.u32 %v1661, 4294901760
      %v2819 = vsub.f32 %v1661, %v2818
      %2820 = vmatpush2.msra.mxu0 %v2819
      %2821 = vmatprep.subr.mxu0 0.0
      %v2822 = vand.u32 %v1660, 4294901760
      %v2823 = vsub.f32 %v1660, %v2822
      %2824 = vmatpush2.msra.mxu0 %v2823
      %2825 = vmatprep.subr.mxu0 0.0
      %v2826 = vand.u32 %v1659, 4294901760
      %v2827 = vsub.f32 %v1659, %v2826
      %2828 = vmatpush2.msra.mxu0 %v2827
      %2829 = vmatprep.subr.mxu0 0.0
      %v2830 = vand.u32 %v1658, 4294901760
      %v2831 = vsub.f32 %v1658, %v2830
      %2832 = vmatpush2.msra.mxu0 %v2831
      %2833 = vmatprep.subr.mxu0 0.0
      %v2834 = vand.u32 %v1657, 4294901760
      %v2835 = vsub.f32 %v1657, %v2834
      %2836 = vmatpush2.msra.mxu0 %v2835
      %2837 = vmatprep.subr.mxu0 0.0
      %v2838 = vand.u32 %v1656, 4294901760
      %v2839 = vsub.f32 %v1656, %v2838
      %2840 = vmatpush2.msra.mxu0 %v2839
      %2841 = vmatprep.subr.mxu0 0.0
      %v2842 = vand.u32 %v1655, 4294901760
      %v2843 = vsub.f32 %v1655, %v2842
      %2844 = vmatpush2.msra.mxu0 %v2843
      %2845 = vmatprep.subr.mxu0 0.0
      %v2846 = vand.u32 %v1654, 4294901760
      %v2847 = vsub.f32 %v1654, %v2846
      %2848 = vmatpush2.msra.mxu0 %v2847
      %2849 = vmatprep.subr.mxu0 0.0
      %v2850 = vand.u32 %v1653, 4294901760
      %v2851 = vsub.f32 %v1653, %v2850
      %2852 = vmatpush2.msra.mxu0 %v2851
      %2853 = vmatprep.subr.mxu0 0.0
      %v2854 = vand.u32 %v1652, 4294901760
      %v2855 = vsub.f32 %v1652, %v2854
      %2856 = vmatpush2.msra.mxu0 %v2855
      %2857 = vmatprep.subr.mxu0 0.0
      %v2858 = vand.u32 %v1651, 4294901760
      %v2859 = vsub.f32 %v1651, %v2858
      %2860 = vmatpush2.msra.mxu0 %v2859
      %2861 = vmatprep.subr.mxu0 0.0
      %v2862 = vand.u32 %v1650, 4294901760
      %v2863 = vsub.f32 %v1650, %v2862
      %2864 = vmatpush2.msra.mxu0 %v2863
      %2865 = vmatprep.subr.mxu0 0.0
      %v2866 = vand.u32 %v1649, 4294901760
      %v2867 = vsub.f32 %v1649, %v2866
      %2868 = vmatpush2.msra.mxu0 %v2867
      %v2869 = vand.u32 %v1603, 4294901760
      %v2870 = vsub.f32 %v1603, %v2869
      %2871 = vmatprep.mubr.f32.mxu0 %v2870
      %v2872 = vand.u32 %v1513, 4294901760
      %v2873 = vsub.f32 %v1513, %v2872
      %2874 = vmatmul.mubr.f32.gmra.mxu0 %v2873
      %v2875 = vpop.f32.mrf.mxu0
      %v2876 = vadd.f32 %v2535, %v2875
      %v2877 = vpop.f32.mrf.mxu0
      %v2878 = vand.u32 %v1604, 4294901760
      %v2879 = vsub.f32 %v1604, %v2878
      %2880 = vmatprep.mubr.f32.mxu0 %v2879
      %v2881 = vand.u32 %v1514, 4294901760
      %v2882 = vsub.f32 %v1514, %v2881
      %2883 = vmatmul.mubr.f32.gmra.mxu0 %v2882
      %v2884 = vpop.f32.mrf.mxu0
      %v2885 = vadd.f32 %v2542, %v2884
      %v2886 = vpop.f32.mrf.mxu0
      %v2887 = vand.u32 %v1605, 4294901760
      %v2888 = vsub.f32 %v1605, %v2887
      %2889 = vmatprep.mubr.f32.mxu0 %v2888
      %v2890 = vand.u32 %v1515, 4294901760
      %v2891 = vsub.f32 %v1515, %v2890
      %2892 = vmatmul.mubr.f32.gmra.mxu0 %v2891
      %v2893 = vpop.f32.mrf.mxu0
      %v2894 = vadd.f32 %v2549, %v2893
      %v2895 = vpop.f32.mrf.mxu0
      %v2896 = vand.u32 %v1606, 4294901760
      %v2897 = vsub.f32 %v1606, %v2896
      %2898 = vmatprep.mubr.f32.mxu0 %v2897
      %v2899 = vand.u32 %v1516, 4294901760
      %v2900 = vsub.f32 %v1516, %v2899
      %2901 = vmatmul.mubr.f32.gmra.mxu0 %v2900
      %v2902 = vpop.f32.mrf.mxu0
      %v2903 = vadd.f32 %v2556, %v2902
      %v2904 = vpop.f32.mrf.mxu0
      %v2905 = vand.u32 %v1607, 4294901760
      %v2906 = vsub.f32 %v1607, %v2905
      %2907 = vmatprep.mubr.f32.mxu0 %v2906
      %v2908 = vand.u32 %v1517, 4294901760
      %v2909 = vsub.f32 %v1517, %v2908
      %2910 = vmatmul.mubr.f32.gmra.mxu0 %v2909
      %v2911 = vpop.f32.mrf.mxu0
      %v2912 = vadd.f32 %v2563, %v2911
      %v2913 = vpop.f32.mrf.mxu0
      %v2914 = vand.u32 %v1608, 4294901760
      %v2915 = vsub.f32 %v1608, %v2914
      %2916 = vmatprep.mubr.f32.mxu0 %v2915
      %v2917 = vand.u32 %v1518, 4294901760
      %v2918 = vsub.f32 %v1518, %v2917
      %2919 = vmatmul.mubr.f32.gmra.mxu0 %v2918
      %v2920 = vpop.f32.mrf.mxu0
      %v2921 = vadd.f32 %v2570, %v2920
      %v2922 = vpop.f32.mrf.mxu0
      %v2923 = vand.u32 %v1609, 4294901760
      %v2924 = vsub.f32 %v1609, %v2923
      %2925 = vmatprep.mubr.f32.mxu0 %v2924
      %v2926 = vand.u32 %v1519, 4294901760
      %v2927 = vsub.f32 %v1519, %v2926
      %2928 = vmatmul.mubr.f32.gmra.mxu0 %v2927
      %v2929 = vpop.f32.mrf.mxu0
      %v2930 = vadd.f32 %v2577, %v2929
      %v2931 = vpop.f32.mrf.mxu0
      %v2932 = vand.u32 %v1610, 4294901760
      %v2933 = vsub.f32 %v1610, %v2932
      %2934 = vmatprep.mubr.f32.mxu0 %v2933
      %v2935 = vand.u32 %v1520, 4294901760
      %v2936 = vsub.f32 %v1520, %v2935
      %2937 = vmatmul.mubr.f32.gmra.mxu0 %v2936
      %v2938 = vpop.f32.mrf.mxu0
      %v2939 = vadd.f32 %v2584, %v2938
      %v2940 = vpop.f32.mrf.mxu0
      %v2941 = vand.u32 %v1611, 4294901760
      %v2942 = vsub.f32 %v1611, %v2941
      %2943 = vmatprep.mubr.f32.mxu0 %v2942
      %v2944 = vand.u32 %v1521, 4294901760
      %v2945 = vsub.f32 %v1521, %v2944
      %2946 = vmatmul.mubr.f32.gmra.mxu0 %v2945
      %v2947 = vpop.f32.mrf.mxu0
      %v2948 = vadd.f32 %v2591, %v2947
      %v2949 = vpop.f32.mrf.mxu0
      %v2950 = vand.u32 %v1612, 4294901760
      %v2951 = vsub.f32 %v1612, %v2950
      %2952 = vmatprep.mubr.f32.mxu0 %v2951
      %v2953 = vand.u32 %v1522, 4294901760
      %v2954 = vsub.f32 %v1522, %v2953
      %2955 = vmatmul.mubr.f32.gmra.mxu0 %v2954
      %v2956 = vpop.f32.mrf.mxu0
      %v2957 = vadd.f32 %v2598, %v2956
      %v2958 = vpop.f32.mrf.mxu0
      %v2959 = vand.u32 %v1613, 4294901760
      %v2960 = vsub.f32 %v1613, %v2959
      %2961 = vmatprep.mubr.f32.mxu0 %v2960
      %v2962 = vand.u32 %v1523, 4294901760
      %v2963 = vsub.f32 %v1523, %v2962
      %2964 = vmatmul.mubr.f32.gmra.mxu0 %v2963
      %v2965 = vpop.f32.mrf.mxu0
      %v2966 = vadd.f32 %v2605, %v2965
      %v2967 = vpop.f32.mrf.mxu0
      %v2968 = vand.u32 %v1614, 4294901760
      %v2969 = vsub.f32 %v1614, %v2968
      %2970 = vmatprep.mubr.f32.mxu0 %v2969
      %v2971 = vand.u32 %v1524, 4294901760
      %v2972 = vsub.f32 %v1524, %v2971
      %2973 = vmatmul.mubr.f32.gmra.mxu0 %v2972
      %v2974 = vpop.f32.mrf.mxu0
      %v2975 = vadd.f32 %v2612, %v2974
      %v2976 = vpop.f32.mrf.mxu0
      %v2977 = vand.u32 %v1615, 4294901760
      %v2978 = vsub.f32 %v1615, %v2977
      %2979 = vmatprep.mubr.f32.mxu0 %v2978
      %v2980 = vand.u32 %v1525, 4294901760
      %v2981 = vsub.f32 %v1525, %v2980
      %2982 = vmatmul.mubr.f32.gmra.mxu0 %v2981
      %v2983 = vpop.f32.mrf.mxu0
      %v2984 = vadd.f32 %v2619, %v2983
      %v2985 = vpop.f32.mrf.mxu0
      %v2986 = vand.u32 %v1616, 4294901760
      %v2987 = vsub.f32 %v1616, %v2986
      %2988 = vmatprep.mubr.f32.mxu0 %v2987
      %v2989 = vand.u32 %v1526, 4294901760
      %v2990 = vsub.f32 %v1526, %v2989
      %2991 = vmatmul.mubr.f32.gmra.mxu0 %v2990
      %v2992 = vpop.f32.mrf.mxu0
      %v2993 = vadd.f32 %v2626, %v2992
      %v2994 = vpop.f32.mrf.mxu0
      %v2995 = vand.u32 %v1617, 4294901760
      %v2996 = vsub.f32 %v1617, %v2995
      %2997 = vmatprep.mubr.f32.mxu0 %v2996
      %v2998 = vand.u32 %v1527, 4294901760
      %v2999 = vsub.f32 %v1527, %v2998
      %3000 = vmatmul.mubr.f32.gmra.mxu0 %v2999
      %v3001 = vpop.f32.mrf.mxu0
      %v3002 = vadd.f32 %v2633, %v3001
      %v3003 = vpop.f32.mrf.mxu0
      %v3004 = vand.u32 %v1618, 4294901760
      %v3005 = vsub.f32 %v1618, %v3004
      %3006 = vmatprep.mubr.f32.mxu0 %v3005
      %v3007 = vand.u32 %v1528, 4294901760
      %v3008 = vsub.f32 %v1528, %v3007
      %3009 = vmatmul.mubr.f32.gmra.mxu0 %v3008
      %v3010 = vpop.f32.mrf.mxu0
      %v3011 = vadd.f32 %v2640, %v3010
      %v3012 = vpop.f32.mrf.mxu0
      %v3013 = vand.u32 %v1619, 4294901760
      %v3014 = vsub.f32 %v1619, %v3013
      %3015 = vmatprep.mubr.f32.mxu0 %v3014
      %v3016 = vand.u32 %v1529, 4294901760
      %v3017 = vsub.f32 %v1529, %v3016
      %3018 = vmatmul.mubr.f32.gmra.mxu0 %v3017
      %v3019 = vpop.f32.mrf.mxu0
      %v3020 = vadd.f32 %v2647, %v3019
      %v3021 = vpop.f32.mrf.mxu0
      %v3022 = vand.u32 %v1620, 4294901760
      %v3023 = vsub.f32 %v1620, %v3022
      %3024 = vmatprep.mubr.f32.mxu0 %v3023
      %v3025 = vand.u32 %v1530, 4294901760
      %v3026 = vsub.f32 %v1530, %v3025
      %3027 = vmatmul.mubr.f32.gmra.mxu0 %v3026
      %v3028 = vpop.f32.mrf.mxu0
      %v3029 = vadd.f32 %v2654, %v3028
      %v3030 = vpop.f32.mrf.mxu0
      %v3031 = vand.u32 %v1621, 4294901760
      %v3032 = vsub.f32 %v1621, %v3031
      %3033 = vmatprep.mubr.f32.mxu0 %v3032
      %v3034 = vand.u32 %v1531, 4294901760
      %v3035 = vsub.f32 %v1531, %v3034
      %3036 = vmatmul.mubr.f32.gmra.mxu0 %v3035
      %v3037 = vpop.f32.mrf.mxu0
      %v3038 = vadd.f32 %v2661, %v3037
      %v3039 = vpop.f32.mrf.mxu0
      %v3040 = vand.u32 %v1622, 4294901760
      %v3041 = vsub.f32 %v1622, %v3040
      %3042 = vmatprep.mubr.f32.mxu0 %v3041
      %v3043 = vand.u32 %v1532, 4294901760
      %v3044 = vsub.f32 %v1532, %v3043
      %3045 = vmatmul.mubr.f32.gmra.mxu0 %v3044
      %v3046 = vpop.f32.mrf.mxu0
      %v3047 = vadd.f32 %v2668, %v3046
      %v3048 = vpop.f32.mrf.mxu0
      %v3049 = vand.u32 %v1623, 4294901760
      %v3050 = vsub.f32 %v1623, %v3049
      %3051 = vmatprep.mubr.f32.mxu0 %v3050
      %v3052 = vand.u32 %v1533, 4294901760
      %v3053 = vsub.f32 %v1533, %v3052
      %3054 = vmatmul.mubr.f32.gmra.mxu0 %v3053
      %v3055 = vpop.f32.mrf.mxu0
      %v3056 = vadd.f32 %v2675, %v3055
      %v3057 = vpop.f32.mrf.mxu0
      %v3058 = vand.u32 %v1624, 4294901760
      %v3059 = vsub.f32 %v1624, %v3058
      %3060 = vmatprep.mubr.f32.mxu0 %v3059
      %v3061 = vand.u32 %v1534, 4294901760
      %v3062 = vsub.f32 %v1534, %v3061
      %3063 = vmatmul.mubr.f32.gmra.mxu0 %v3062
      %v3064 = vpop.f32.mrf.mxu0
      %v3065 = vadd.f32 %v2682, %v3064
      %v3066 = vpop.f32.mrf.mxu0
      %v3067 = vand.u32 %v1625, 4294901760
      %v3068 = vsub.f32 %v1625, %v3067
      %3069 = vmatprep.mubr.f32.mxu0 %v3068
      %v3070 = vand.u32 %v1535, 4294901760
      %v3071 = vsub.f32 %v1535, %v3070
      %3072 = vmatmul.mubr.f32.gmra.mxu0 %v3071
      %v3073 = vpop.f32.mrf.mxu0
      %v3074 = vadd.f32 %v2689, %v3073
      %v3075 = vpop.f32.mrf.mxu0
      %v3076 = vand.u32 %v1626, 4294901760
      %v3077 = vsub.f32 %v1626, %v3076
      %3078 = vmatprep.mubr.f32.mxu0 %v3077
      %v3079 = vand.u32 %v1536, 4294901760
      %v3080 = vsub.f32 %v1536, %v3079
      %3081 = vmatmul.mubr.f32.gmra.mxu0 %v3080
      %v3082 = vpop.f32.mrf.mxu0
      %v3083 = vadd.f32 %v2696, %v3082
      %v3084 = vpop.f32.mrf.mxu0
      %v3085 = vand.u32 %v1627, 4294901760
      %v3086 = vsub.f32 %v1627, %v3085
      %3087 = vmatprep.mubr.f32.mxu0 %v3086
      %v3088 = vand.u32 %v1537, 4294901760
      %v3089 = vsub.f32 %v1537, %v3088
      %3090 = vmatmul.mubr.f32.gmra.mxu0 %v3089
      %v3091 = vpop.f32.mrf.mxu0
      %v3092 = vadd.f32 %v2703, %v3091
      %v3093 = vpop.f32.mrf.mxu0
      %v3094 = vand.u32 %v1628, 4294901760
      %v3095 = vsub.f32 %v1628, %v3094
      %3096 = vmatprep.mubr.f32.mxu0 %v3095
      %v3097 = vand.u32 %v1538, 4294901760
      %v3098 = vsub.f32 %v1538, %v3097
      %3099 = vmatmul.mubr.f32.gmra.mxu0 %v3098
      %v3100 = vpop.f32.mrf.mxu0
      %v3101 = vadd.f32 %v2710, %v3100
      %v3102 = vpop.f32.mrf.mxu0
      %v3103 = vand.u32 %v1629, 4294901760
      %v3104 = vsub.f32 %v1629, %v3103
      %3105 = vmatprep.mubr.f32.mxu0 %v3104
      %v3106 = vand.u32 %v1539, 4294901760
      %v3107 = vsub.f32 %v1539, %v3106
      %3108 = vmatmul.mubr.f32.gmra.mxu0 %v3107
      %v3109 = vpop.f32.mrf.mxu0
      %v3110 = vadd.f32 %v2717, %v3109
      %v3111 = vpop.f32.mrf.mxu0
      %v3112 = vand.u32 %v1630, 4294901760
      %v3113 = vsub.f32 %v1630, %v3112
      %3114 = vmatprep.mubr.f32.mxu0 %v3113
      %v3115 = vand.u32 %v1540, 4294901760
      %v3116 = vsub.f32 %v1540, %v3115
      %3117 = vmatmul.mubr.f32.gmra.mxu0 %v3116
      %v3118 = vpop.f32.mrf.mxu0
      %v3119 = vadd.f32 %v2724, %v3118
      %v3120 = vpop.f32.mrf.mxu0
      %v3121 = vand.u32 %v1631, 4294901760
      %v3122 = vsub.f32 %v1631, %v3121
      %3123 = vmatprep.mubr.f32.mxu0 %v3122
      %v3124 = vand.u32 %v1541, 4294901760
      %v3125 = vsub.f32 %v1541, %v3124
      %3126 = vmatmul.mubr.f32.gmra.mxu0 %v3125
      %v3127 = vpop.f32.mrf.mxu0
      %v3128 = vadd.f32 %v2731, %v3127
      %v3129 = vpop.f32.mrf.mxu0
      %v3130 = vand.u32 %v1632, 4294901760
      %v3131 = vsub.f32 %v1632, %v3130
      %3132 = vmatprep.mubr.f32.mxu0 %v3131
      %v3133 = vand.u32 %v1542, 4294901760
      %v3134 = vsub.f32 %v1542, %v3133
      %3135 = vmatmul.mubr.f32.gmra.mxu0 %v3134
      %v3136 = vpop.f32.mrf.mxu0
      %v3137 = vadd.f32 %v2738, %v3136
      %v3138 = vpop.f32.mrf.mxu0
      %3139 = vdwg.mxu0
      %3140 = vmatprep.subr.mxu0 0.0
      %v3141 = vand.u32 %v1648, 4294901760
      %3142 = vmatpush1.msra.mxu0 %v3141
      %3143 = vmatprep.subr.mxu0 0.0
      %v3144 = vand.u32 %v1647, 4294901760
      %3145 = vmatpush1.msra.mxu0 %v3144
      %3146 = vmatprep.subr.mxu0 0.0
      %v3147 = vand.u32 %v1646, 4294901760
      %3148 = vmatpush1.msra.mxu0 %v3147
      %3149 = vmatprep.subr.mxu0 0.0
      %v3150 = vand.u32 %v1645, 4294901760
      %3151 = vmatpush1.msra.mxu0 %v3150
      %3152 = vmatprep.subr.mxu0 0.0
      %v3153 = vand.u32 %v1644, 4294901760
      %3154 = vmatpush1.msra.mxu0 %v3153
      %3155 = vmatprep.subr.mxu0 0.0
      %v3156 = vand.u32 %v1643, 4294901760
      %3157 = vmatpush1.msra.mxu0 %v3156
      %3158 = vmatprep.subr.mxu0 0.0
      %v3159 = vand.u32 %v1642, 4294901760
      %3160 = vmatpush1.msra.mxu0 %v3159
      %3161 = vmatprep.subr.mxu0 0.0
      %v3162 = vand.u32 %v1641, 4294901760
      %3163 = vmatpush1.msra.mxu0 %v3162
      %3164 = vmatprep.subr.mxu0 0.0
      %v3165 = vand.u32 %v1640, 4294901760
      %3166 = vmatpush1.msra.mxu0 %v3165
      %3167 = vmatprep.subr.mxu0 0.0
      %v3168 = vand.u32 %v1639, 4294901760
      %3169 = vmatpush1.msra.mxu0 %v3168
      %3170 = vmatprep.subr.mxu0 0.0
      %v3171 = vand.u32 %v1638, 4294901760
      %3172 = vmatpush1.msra.mxu0 %v3171
      %3173 = vmatprep.subr.mxu0 0.0
      %v3174 = vand.u32 %v1637, 4294901760
      %3175 = vmatpush1.msra.mxu0 %v3174
      %3176 = vmatprep.subr.mxu0 0.0
      %v3177 = vand.u32 %v1636, 4294901760
      %3178 = vmatpush1.msra.mxu0 %v3177
      %3179 = vmatprep.subr.mxu0 0.0
      %v3180 = vand.u32 %v1635, 4294901760
      %3181 = vmatpush1.msra.mxu0 %v3180
      %3182 = vmatprep.subr.mxu0 0.0
      %v3183 = vand.u32 %v1634, 4294901760
      %3184 = vmatpush1.msra.mxu0 %v3183
      %3185 = vmatprep.subr.mxu0 0.0
      %v3186 = vand.u32 %v1633, 4294901760
      %3187 = vmatpush1.msra.mxu0 %v3186
      %3188 = vmatprep.subr.mxu0 0.0
      %v3189 = vand.u32 %v1664, 4294901760
      %3190 = vmatpush2.msra.mxu0 %v3189
      %3191 = vmatprep.subr.mxu0 0.0
      %v3192 = vand.u32 %v1663, 4294901760
      %3193 = vmatpush2.msra.mxu0 %v3192
      %3194 = vmatprep.subr.mxu0 0.0
      %v3195 = vand.u32 %v1662, 4294901760
      %3196 = vmatpush2.msra.mxu0 %v3195
      %3197 = vmatprep.subr.mxu0 0.0
      %v3198 = vand.u32 %v1661, 4294901760
      %3199 = vmatpush2.msra.mxu0 %v3198
      %3200 = vmatprep.subr.mxu0 0.0
      %v3201 = vand.u32 %v1660, 4294901760
      %3202 = vmatpush2.msra.mxu0 %v3201
      %3203 = vmatprep.subr.mxu0 0.0
      %v3204 = vand.u32 %v1659, 4294901760
      %3205 = vmatpush2.msra.mxu0 %v3204
      %3206 = vmatprep.subr.mxu0 0.0
      %v3207 = vand.u32 %v1658, 4294901760
      %3208 = vmatpush2.msra.mxu0 %v3207
      %3209 = vmatprep.subr.mxu0 0.0
      %v3210 = vand.u32 %v1657, 4294901760
      %3211 = vmatpush2.msra.mxu0 %v3210
      %3212 = vmatprep.subr.mxu0 0.0
      %v3213 = vand.u32 %v1656, 4294901760
      %3214 = vmatpush2.msra.mxu0 %v3213
      %3215 = vmatprep.subr.mxu0 0.0
      %v3216 = vand.u32 %v1655, 4294901760
      %3217 = vmatpush2.msra.mxu0 %v3216
      %3218 = vmatprep.subr.mxu0 0.0
      %v3219 = vand.u32 %v1654, 4294901760
      %3220 = vmatpush2.msra.mxu0 %v3219
      %3221 = vmatprep.subr.mxu0 0.0
      %v3222 = vand.u32 %v1653, 4294901760
      %3223 = vmatpush2.msra.mxu0 %v3222
      %3224 = vmatprep.subr.mxu0 0.0
      %v3225 = vand.u32 %v1652, 4294901760
      %3226 = vmatpush2.msra.mxu0 %v3225
      %3227 = vmatprep.subr.mxu0 0.0
      %v3228 = vand.u32 %v1651, 4294901760
      %3229 = vmatpush2.msra.mxu0 %v3228
      %3230 = vmatprep.subr.mxu0 0.0
      %v3231 = vand.u32 %v1650, 4294901760
      %3232 = vmatpush2.msra.mxu0 %v3231
      %3233 = vmatprep.subr.mxu0 0.0
      %v3234 = vand.u32 %v1649, 4294901760
      %3235 = vmatpush2.msra.mxu0 %v3234
      %v3236 = vand.u32 %v1603, 4294901760
      %v3237 = vsub.f32 %v1603, %v3236
      %v3238 = vand.u32 %v3237, 4294901760
      %3239 = vmatprep.mubr.f32.mxu0 %v3238
      %v3240 = vand.u32 %v1513, 4294901760
      %v3241 = vsub.f32 %v1513, %v3240
      %v3242 = vand.u32 %v3241, 4294901760
      %3243 = vmatmul.mubr.f32.gmra.mxu0 %v3242
      %v3244 = vpop.f32.mrf.mxu0
      %v3245 = vadd.f32 %v2876, %v3244
      %v3246 = vpop.f32.mrf.mxu0
      %v3247 = vand.u32 %v1604, 4294901760
      %v3248 = vsub.f32 %v1604, %v3247
      %v3249 = vand.u32 %v3248, 4294901760
      %3250 = vmatprep.mubr.f32.mxu0 %v3249
      %v3251 = vand.u32 %v1514, 4294901760
      %v3252 = vsub.f32 %v1514, %v3251
      %v3253 = vand.u32 %v3252, 4294901760
      %3254 = vmatmul.mubr.f32.gmra.mxu0 %v3253
      %v3255 = vpop.f32.mrf.mxu0
      %v3256 = vadd.f32 %v2885, %v3255
      %v3257 = vpop.f32.mrf.mxu0
      %v3258 = vand.u32 %v1605, 4294901760
      %v3259 = vsub.f32 %v1605, %v3258
      %v3260 = vand.u32 %v3259, 4294901760
      %3261 = vmatprep.mubr.f32.mxu0 %v3260
      %v3262 = vand.u32 %v1515, 4294901760
      %v3263 = vsub.f32 %v1515, %v3262
      %v3264 = vand.u32 %v3263, 4294901760
      %3265 = vmatmul.mubr.f32.gmra.mxu0 %v3264
      %v3266 = vpop.f32.mrf.mxu0
      %v3267 = vadd.f32 %v2894, %v3266
      %v3268 = vpop.f32.mrf.mxu0
      %v3269 = vand.u32 %v1606, 4294901760
      %v3270 = vsub.f32 %v1606, %v3269
      %v3271 = vand.u32 %v3270, 4294901760
      %3272 = vmatprep.mubr.f32.mxu0 %v3271
      %v3273 = vand.u32 %v1516, 4294901760
      %v3274 = vsub.f32 %v1516, %v3273
      %v3275 = vand.u32 %v3274, 4294901760
      %3276 = vmatmul.mubr.f32.gmra.mxu0 %v3275
      %v3277 = vpop.f32.mrf.mxu0
      %v3278 = vadd.f32 %v2903, %v3277
      %v3279 = vpop.f32.mrf.mxu0
      %v3280 = vand.u32 %v1607, 4294901760
      %v3281 = vsub.f32 %v1607, %v3280
      %v3282 = vand.u32 %v3281, 4294901760
      %3283 = vmatprep.mubr.f32.mxu0 %v3282
      %v3284 = vand.u32 %v1517, 4294901760
      %v3285 = vsub.f32 %v1517, %v3284
      %v3286 = vand.u32 %v3285, 4294901760
      %3287 = vmatmul.mubr.f32.gmra.mxu0 %v3286
      %v3288 = vpop.f32.mrf.mxu0
      %v3289 = vadd.f32 %v2912, %v3288
      %v3290 = vpop.f32.mrf.mxu0
      %v3291 = vand.u32 %v1608, 4294901760
      %v3292 = vsub.f32 %v1608, %v3291
      %v3293 = vand.u32 %v3292, 4294901760
      %3294 = vmatprep.mubr.f32.mxu0 %v3293
      %v3295 = vand.u32 %v1518, 4294901760
      %v3296 = vsub.f32 %v1518, %v3295
      %v3297 = vand.u32 %v3296, 4294901760
      %3298 = vmatmul.mubr.f32.gmra.mxu0 %v3297
      %v3299 = vpop.f32.mrf.mxu0
      %v3300 = vadd.f32 %v2921, %v3299
      %v3301 = vpop.f32.mrf.mxu0
      %v3302 = vand.u32 %v1609, 4294901760
      %v3303 = vsub.f32 %v1609, %v3302
      %v3304 = vand.u32 %v3303, 4294901760
      %3305 = vmatprep.mubr.f32.mxu0 %v3304
      %v3306 = vand.u32 %v1519, 4294901760
      %v3307 = vsub.f32 %v1519, %v3306
      %v3308 = vand.u32 %v3307, 4294901760
      %3309 = vmatmul.mubr.f32.gmra.mxu0 %v3308
      %v3310 = vpop.f32.mrf.mxu0
      %v3311 = vadd.f32 %v2930, %v3310
      %v3312 = vpop.f32.mrf.mxu0
      %v3313 = vand.u32 %v1610, 4294901760
      %v3314 = vsub.f32 %v1610, %v3313
      %v3315 = vand.u32 %v3314, 4294901760
      %3316 = vmatprep.mubr.f32.mxu0 %v3315
      %v3317 = vand.u32 %v1520, 4294901760
      %v3318 = vsub.f32 %v1520, %v3317
      %v3319 = vand.u32 %v3318, 4294901760
      %3320 = vmatmul.mubr.f32.gmra.mxu0 %v3319
      %v3321 = vpop.f32.mrf.mxu0
      %v3322 = vadd.f32 %v2939, %v3321
      %v3323 = vpop.f32.mrf.mxu0
      %v3324 = vand.u32 %v1611, 4294901760
      %v3325 = vsub.f32 %v1611, %v3324
      %v3326 = vand.u32 %v3325, 4294901760
      %3327 = vmatprep.mubr.f32.mxu0 %v3326
      %v3328 = vand.u32 %v1521, 4294901760
      %v3329 = vsub.f32 %v1521, %v3328
      %v3330 = vand.u32 %v3329, 4294901760
      %3331 = vmatmul.mubr.f32.gmra.mxu0 %v3330
      %v3332 = vpop.f32.mrf.mxu0
      %v3333 = vadd.f32 %v2948, %v3332
      %v3334 = vpop.f32.mrf.mxu0
      %v3335 = vand.u32 %v1612, 4294901760
      %v3336 = vsub.f32 %v1612, %v3335
      %v3337 = vand.u32 %v3336, 4294901760
      %3338 = vmatprep.mubr.f32.mxu0 %v3337
      %v3339 = vand.u32 %v1522, 4294901760
      %v3340 = vsub.f32 %v1522, %v3339
      %v3341 = vand.u32 %v3340, 4294901760
      %3342 = vmatmul.mubr.f32.gmra.mxu0 %v3341
      %v3343 = vpop.f32.mrf.mxu0
      %v3344 = vadd.f32 %v2957, %v3343
      %v3345 = vpop.f32.mrf.mxu0
      %v3346 = vand.u32 %v1613, 4294901760
      %v3347 = vsub.f32 %v1613, %v3346
      %v3348 = vand.u32 %v3347, 4294901760
      %3349 = vmatprep.mubr.f32.mxu0 %v3348
      %v3350 = vand.u32 %v1523, 4294901760
      %v3351 = vsub.f32 %v1523, %v3350
      %v3352 = vand.u32 %v3351, 4294901760
      %3353 = vmatmul.mubr.f32.gmra.mxu0 %v3352
      %v3354 = vpop.f32.mrf.mxu0
      %v3355 = vadd.f32 %v2966, %v3354
      %v3356 = vpop.f32.mrf.mxu0
      %v3357 = vand.u32 %v1614, 4294901760
      %v3358 = vsub.f32 %v1614, %v3357
      %v3359 = vand.u32 %v3358, 4294901760
      %3360 = vmatprep.mubr.f32.mxu0 %v3359
      %v3361 = vand.u32 %v1524, 4294901760
      %v3362 = vsub.f32 %v1524, %v3361
      %v3363 = vand.u32 %v3362, 4294901760
      %3364 = vmatmul.mubr.f32.gmra.mxu0 %v3363
      %v3365 = vpop.f32.mrf.mxu0
      %v3366 = vadd.f32 %v2975, %v3365
      %v3367 = vpop.f32.mrf.mxu0
      %v3368 = vand.u32 %v1615, 4294901760
      %v3369 = vsub.f32 %v1615, %v3368
      %v3370 = vand.u32 %v3369, 4294901760
      %3371 = vmatprep.mubr.f32.mxu0 %v3370
      %v3372 = vand.u32 %v1525, 4294901760
      %v3373 = vsub.f32 %v1525, %v3372
      %v3374 = vand.u32 %v3373, 4294901760
      %3375 = vmatmul.mubr.f32.gmra.mxu0 %v3374
      %v3376 = vpop.f32.mrf.mxu0
      %v3377 = vadd.f32 %v2984, %v3376
      %v3378 = vpop.f32.mrf.mxu0
      %v3379 = vand.u32 %v1616, 4294901760
      %v3380 = vsub.f32 %v1616, %v3379
      %v3381 = vand.u32 %v3380, 4294901760
      %3382 = vmatprep.mubr.f32.mxu0 %v3381
      %v3383 = vand.u32 %v1526, 4294901760
      %v3384 = vsub.f32 %v1526, %v3383
      %v3385 = vand.u32 %v3384, 4294901760
      %3386 = vmatmul.mubr.f32.gmra.mxu0 %v3385
      %v3387 = vpop.f32.mrf.mxu0
      %v3388 = vadd.f32 %v2993, %v3387
      %v3389 = vpop.f32.mrf.mxu0
      %v3390 = vand.u32 %v1617, 4294901760
      %v3391 = vsub.f32 %v1617, %v3390
      %v3392 = vand.u32 %v3391, 4294901760
      %3393 = vmatprep.mubr.f32.mxu0 %v3392
      %v3394 = vand.u32 %v1527, 4294901760
      %v3395 = vsub.f32 %v1527, %v3394
      %v3396 = vand.u32 %v3395, 4294901760
      %3397 = vmatmul.mubr.f32.gmra.mxu0 %v3396
      %v3398 = vpop.f32.mrf.mxu0
      %v3399 = vadd.f32 %v3002, %v3398
      %v3400 = vpop.f32.mrf.mxu0
      %v3401 = vand.u32 %v1618, 4294901760
      %v3402 = vsub.f32 %v1618, %v3401
      %v3403 = vand.u32 %v3402, 4294901760
      %3404 = vmatprep.mubr.f32.mxu0 %v3403
      %v3405 = vand.u32 %v1528, 4294901760
      %v3406 = vsub.f32 %v1528, %v3405
      %v3407 = vand.u32 %v3406, 4294901760
      %3408 = vmatmul.mubr.f32.gmra.mxu0 %v3407
      %v3409 = vpop.f32.mrf.mxu0
      %v3410 = vadd.f32 %v3011, %v3409
      %v3411 = vpop.f32.mrf.mxu0
      %v3412 = vand.u32 %v1619, 4294901760
      %v3413 = vsub.f32 %v1619, %v3412
      %v3414 = vand.u32 %v3413, 4294901760
      %3415 = vmatprep.mubr.f32.mxu0 %v3414
      %v3416 = vand.u32 %v1529, 4294901760
      %v3417 = vsub.f32 %v1529, %v3416
      %v3418 = vand.u32 %v3417, 4294901760
      %3419 = vmatmul.mubr.f32.gmra.mxu0 %v3418
      %v3420 = vpop.f32.mrf.mxu0
      %v3421 = vadd.f32 %v3020, %v3420
      %v3422 = vpop.f32.mrf.mxu0
      %v3423 = vand.u32 %v1620, 4294901760
      %v3424 = vsub.f32 %v1620, %v3423
      %v3425 = vand.u32 %v3424, 4294901760
      %3426 = vmatprep.mubr.f32.mxu0 %v3425
      %v3427 = vand.u32 %v1530, 4294901760
      %v3428 = vsub.f32 %v1530, %v3427
      %v3429 = vand.u32 %v3428, 4294901760
      %3430 = vmatmul.mubr.f32.gmra.mxu0 %v3429
      %v3431 = vpop.f32.mrf.mxu0
      %v3432 = vadd.f32 %v3029, %v3431
      %v3433 = vpop.f32.mrf.mxu0
      %v3434 = vand.u32 %v1621, 4294901760
      %v3435 = vsub.f32 %v1621, %v3434
      %v3436 = vand.u32 %v3435, 4294901760
      %3437 = vmatprep.mubr.f32.mxu0 %v3436
      %v3438 = vand.u32 %v1531, 4294901760
      %v3439 = vsub.f32 %v1531, %v3438
      %v3440 = vand.u32 %v3439, 4294901760
      %3441 = vmatmul.mubr.f32.gmra.mxu0 %v3440
      %v3442 = vpop.f32.mrf.mxu0
      %v3443 = vadd.f32 %v3038, %v3442
      %v3444 = vpop.f32.mrf.mxu0
      %v3445 = vand.u32 %v1622, 4294901760
      %v3446 = vsub.f32 %v1622, %v3445
      %v3447 = vand.u32 %v3446, 4294901760
      %3448 = vmatprep.mubr.f32.mxu0 %v3447
      %v3449 = vand.u32 %v1532, 4294901760
      %v3450 = vsub.f32 %v1532, %v3449
      %v3451 = vand.u32 %v3450, 4294901760
      %3452 = vmatmul.mubr.f32.gmra.mxu0 %v3451
      %v3453 = vpop.f32.mrf.mxu0
      %v3454 = vadd.f32 %v3047, %v3453
      %v3455 = vpop.f32.mrf.mxu0
      %v3456 = vand.u32 %v1623, 4294901760
      %v3457 = vsub.f32 %v1623, %v3456
      %v3458 = vand.u32 %v3457, 4294901760
      %3459 = vmatprep.mubr.f32.mxu0 %v3458
      %v3460 = vand.u32 %v1533, 4294901760
      %v3461 = vsub.f32 %v1533, %v3460
      %v3462 = vand.u32 %v3461, 4294901760
      %3463 = vmatmul.mubr.f32.gmra.mxu0 %v3462
      %v3464 = vpop.f32.mrf.mxu0
      %v3465 = vadd.f32 %v3056, %v3464
      %v3466 = vpop.f32.mrf.mxu0
      %v3467 = vand.u32 %v1624, 4294901760
      %v3468 = vsub.f32 %v1624, %v3467
      %v3469 = vand.u32 %v3468, 4294901760
      %3470 = vmatprep.mubr.f32.mxu0 %v3469
      %v3471 = vand.u32 %v1534, 4294901760
      %v3472 = vsub.f32 %v1534, %v3471
      %v3473 = vand.u32 %v3472, 4294901760
      %3474 = vmatmul.mubr.f32.gmra.mxu0 %v3473
      %v3475 = vpop.f32.mrf.mxu0
      %v3476 = vadd.f32 %v3065, %v3475
      %v3477 = vpop.f32.mrf.mxu0
      %v3478 = vand.u32 %v1625, 4294901760
      %v3479 = vsub.f32 %v1625, %v3478
      %v3480 = vand.u32 %v3479, 4294901760
      %3481 = vmatprep.mubr.f32.mxu0 %v3480
      %v3482 = vand.u32 %v1535, 4294901760
      %v3483 = vsub.f32 %v1535, %v3482
      %v3484 = vand.u32 %v3483, 4294901760
      %3485 = vmatmul.mubr.f32.gmra.mxu0 %v3484
      %v3486 = vpop.f32.mrf.mxu0
      %v3487 = vadd.f32 %v3074, %v3486
      %v3488 = vpop.f32.mrf.mxu0
      %v3489 = vand.u32 %v1626, 4294901760
      %v3490 = vsub.f32 %v1626, %v3489
      %v3491 = vand.u32 %v3490, 4294901760
      %3492 = vmatprep.mubr.f32.mxu0 %v3491
      %v3493 = vand.u32 %v1536, 4294901760
      %v3494 = vsub.f32 %v1536, %v3493
      %v3495 = vand.u32 %v3494, 4294901760
      %3496 = vmatmul.mubr.f32.gmra.mxu0 %v3495
      %v3497 = vpop.f32.mrf.mxu0
      %v3498 = vadd.f32 %v3083, %v3497
      %v3499 = vpop.f32.mrf.mxu0
      %v3500 = vand.u32 %v1627, 4294901760
      %v3501 = vsub.f32 %v1627, %v3500
      %v3502 = vand.u32 %v3501, 4294901760
      %3503 = vmatprep.mubr.f32.mxu0 %v3502
      %v3504 = vand.u32 %v1537, 4294901760
      %v3505 = vsub.f32 %v1537, %v3504
      %v3506 = vand.u32 %v3505, 4294901760
      %3507 = vmatmul.mubr.f32.gmra.mxu0 %v3506
      %v3508 = vpop.f32.mrf.mxu0
      %v3509 = vadd.f32 %v3092, %v3508
      %v3510 = vpop.f32.mrf.mxu0
      %v3511 = vand.u32 %v1628, 4294901760
      %v3512 = vsub.f32 %v1628, %v3511
      %v3513 = vand.u32 %v3512, 4294901760
      %3514 = vmatprep.mubr.f32.mxu0 %v3513
      %v3515 = vand.u32 %v1538, 4294901760
      %v3516 = vsub.f32 %v1538, %v3515
      %v3517 = vand.u32 %v3516, 4294901760
      %3518 = vmatmul.mubr.f32.gmra.mxu0 %v3517
      %v3519 = vpop.f32.mrf.mxu0
      %v3520 = vadd.f32 %v3101, %v3519
      %v3521 = vpop.f32.mrf.mxu0
      %v3522 = vand.u32 %v1629, 4294901760
      %v3523 = vsub.f32 %v1629, %v3522
      %v3524 = vand.u32 %v3523, 4294901760
      %3525 = vmatprep.mubr.f32.mxu0 %v3524
      %v3526 = vand.u32 %v1539, 4294901760
      %v3527 = vsub.f32 %v1539, %v3526
      %v3528 = vand.u32 %v3527, 4294901760
      %3529 = vmatmul.mubr.f32.gmra.mxu0 %v3528
      %v3530 = vpop.f32.mrf.mxu0
      %v3531 = vadd.f32 %v3110, %v3530
      %v3532 = vpop.f32.mrf.mxu0
      %v3533 = vand.u32 %v1630, 4294901760
      %v3534 = vsub.f32 %v1630, %v3533
      %v3535 = vand.u32 %v3534, 4294901760
      %3536 = vmatprep.mubr.f32.mxu0 %v3535
      %v3537 = vand.u32 %v1540, 4294901760
      %v3538 = vsub.f32 %v1540, %v3537
      %v3539 = vand.u32 %v3538, 4294901760
      %3540 = vmatmul.mubr.f32.gmra.mxu0 %v3539
      %v3541 = vpop.f32.mrf.mxu0
      %v3542 = vadd.f32 %v3119, %v3541
      %v3543 = vpop.f32.mrf.mxu0
      %v3544 = vand.u32 %v1631, 4294901760
      %v3545 = vsub.f32 %v1631, %v3544
      %v3546 = vand.u32 %v3545, 4294901760
      %3547 = vmatprep.mubr.f32.mxu0 %v3546
      %v3548 = vand.u32 %v1541, 4294901760
      %v3549 = vsub.f32 %v1541, %v3548
      %v3550 = vand.u32 %v3549, 4294901760
      %3551 = vmatmul.mubr.f32.gmra.mxu0 %v3550
      %v3552 = vpop.f32.mrf.mxu0
      %v3553 = vadd.f32 %v3128, %v3552
      %v3554 = vpop.f32.mrf.mxu0
      %v3555 = vand.u32 %v1632, 4294901760
      %v3556 = vsub.f32 %v1632, %v3555
      %v3557 = vand.u32 %v3556, 4294901760
      %3558 = vmatprep.mubr.f32.mxu0 %v3557
      %v3559 = vand.u32 %v1542, 4294901760
      %v3560 = vsub.f32 %v1542, %v3559
      %v3561 = vand.u32 %v3560, 4294901760
      %3562 = vmatmul.mubr.f32.gmra.mxu0 %v3561
      %v3563 = vpop.f32.mrf.mxu0
      %v3564 = vadd.f32 %v3137, %v3563
      %v3565 = vpop.f32.mrf.mxu0
      %3566 = vdwg.mxu0
      %3567 = vmatprep.subr.mxu0 0.0
      %v3568 = vand.u32 %v1648, 4294901760
      %v3569 = vsub.f32 %v1648, %v3568
      %v3570 = vand.u32 %v3569, 4294901760
      %3571 = vmatpush1.msra.mxu0 %v3570
      %3572 = vmatprep.subr.mxu0 0.0
      %v3573 = vand.u32 %v1647, 4294901760
      %v3574 = vsub.f32 %v1647, %v3573
      %v3575 = vand.u32 %v3574, 4294901760
      %3576 = vmatpush1.msra.mxu0 %v3575
      %3577 = vmatprep.subr.mxu0 0.0
      %v3578 = vand.u32 %v1646, 4294901760
      %v3579 = vsub.f32 %v1646, %v3578
      %v3580 = vand.u32 %v3579, 4294901760
      %3581 = vmatpush1.msra.mxu0 %v3580
      %3582 = vmatprep.subr.mxu0 0.0
      %v3583 = vand.u32 %v1645, 4294901760
      %v3584 = vsub.f32 %v1645, %v3583
      %v3585 = vand.u32 %v3584, 4294901760
      %3586 = vmatpush1.msra.mxu0 %v3585
      %3587 = vmatprep.subr.mxu0 0.0
      %v3588 = vand.u32 %v1644, 4294901760
      %v3589 = vsub.f32 %v1644, %v3588
      %v3590 = vand.u32 %v3589, 4294901760
      %3591 = vmatpush1.msra.mxu0 %v3590
      %3592 = vmatprep.subr.mxu0 0.0
      %v3593 = vand.u32 %v1643, 4294901760
      %v3594 = vsub.f32 %v1643, %v3593
      %v3595 = vand.u32 %v3594, 4294901760
      %3596 = vmatpush1.msra.mxu0 %v3595
      %3597 = vmatprep.subr.mxu0 0.0
      %v3598 = vand.u32 %v1642, 4294901760
      %v3599 = vsub.f32 %v1642, %v3598
      %v3600 = vand.u32 %v3599, 4294901760
      %3601 = vmatpush1.msra.mxu0 %v3600
      %3602 = vmatprep.subr.mxu0 0.0
      %v3603 = vand.u32 %v1641, 4294901760
      %v3604 = vsub.f32 %v1641, %v3603
      %v3605 = vand.u32 %v3604, 4294901760
      %3606 = vmatpush1.msra.mxu0 %v3605
      %3607 = vmatprep.subr.mxu0 0.0
      %v3608 = vand.u32 %v1640, 4294901760
      %v3609 = vsub.f32 %v1640, %v3608
      %v3610 = vand.u32 %v3609, 4294901760
      %3611 = vmatpush1.msra.mxu0 %v3610
      %3612 = vmatprep.subr.mxu0 0.0
      %v3613 = vand.u32 %v1639, 4294901760
      %v3614 = vsub.f32 %v1639, %v3613
      %v3615 = vand.u32 %v3614, 4294901760
      %3616 = vmatpush1.msra.mxu0 %v3615
      %3617 = vmatprep.subr.mxu0 0.0
      %v3618 = vand.u32 %v1638, 4294901760
      %v3619 = vsub.f32 %v1638, %v3618
      %v3620 = vand.u32 %v3619, 4294901760
      %3621 = vmatpush1.msra.mxu0 %v3620
      %3622 = vmatprep.subr.mxu0 0.0
      %v3623 = vand.u32 %v1637, 4294901760
      %v3624 = vsub.f32 %v1637, %v3623
      %v3625 = vand.u32 %v3624, 4294901760
      %3626 = vmatpush1.msra.mxu0 %v3625
      %3627 = vmatprep.subr.mxu0 0.0
      %v3628 = vand.u32 %v1636, 4294901760
      %v3629 = vsub.f32 %v1636, %v3628
      %v3630 = vand.u32 %v3629, 4294901760
      %3631 = vmatpush1.msra.mxu0 %v3630
      %3632 = vmatprep.subr.mxu0 0.0
      %v3633 = vand.u32 %v1635, 4294901760
      %v3634 = vsub.f32 %v1635, %v3633
      %v3635 = vand.u32 %v3634, 4294901760
      %3636 = vmatpush1.msra.mxu0 %v3635
      %3637 = vmatprep.subr.mxu0 0.0
      %v3638 = vand.u32 %v1634, 4294901760
      %v3639 = vsub.f32 %v1634, %v3638
      %v3640 = vand.u32 %v3639, 4294901760
      %3641 = vmatpush1.msra.mxu0 %v3640
      %3642 = vmatprep.subr.mxu0 0.0
      %v3643 = vand.u32 %v1633, 4294901760
      %v3644 = vsub.f32 %v1633, %v3643
      %v3645 = vand.u32 %v3644, 4294901760
      %3646 = vmatpush1.msra.mxu0 %v3645
      %3647 = vmatprep.subr.mxu0 0.0
      %v3648 = vand.u32 %v1664, 4294901760
      %v3649 = vsub.f32 %v1664, %v3648
      %v3650 = vand.u32 %v3649, 4294901760
      %3651 = vmatpush2.msra.mxu0 %v3650
      %3652 = vmatprep.subr.mxu0 0.0
      %v3653 = vand.u32 %v1663, 4294901760
      %v3654 = vsub.f32 %v1663, %v3653
      %v3655 = vand.u32 %v3654, 4294901760
      %3656 = vmatpush2.msra.mxu0 %v3655
      %3657 = vmatprep.subr.mxu0 0.0
      %v3658 = vand.u32 %v1662, 4294901760
      %v3659 = vsub.f32 %v1662, %v3658
      %v3660 = vand.u32 %v3659, 4294901760
      %3661 = vmatpush2.msra.mxu0 %v3660
      %3662 = vmatprep.subr.mxu0 0.0
      %v3663 = vand.u32 %v1661, 4294901760
      %v3664 = vsub.f32 %v1661, %v3663
      %v3665 = vand.u32 %v3664, 4294901760
      %3666 = vmatpush2.msra.mxu0 %v3665
      %3667 = vmatprep.subr.mxu0 0.0
      %v3668 = vand.u32 %v1660, 4294901760
      %v3669 = vsub.f32 %v1660, %v3668
      %v3670 = vand.u32 %v3669, 4294901760
      %3671 = vmatpush2.msra.mxu0 %v3670
      %3672 = vmatprep.subr.mxu0 0.0
      %v3673 = vand.u32 %v1659, 4294901760
      %v3674 = vsub.f32 %v1659, %v3673
      %v3675 = vand.u32 %v3674, 4294901760
      %3676 = vmatpush2.msra.mxu0 %v3675
      %3677 = vmatprep.subr.mxu0 0.0
      %v3678 = vand.u32 %v1658, 4294901760
      %v3679 = vsub.f32 %v1658, %v3678
      %v3680 = vand.u32 %v3679, 4294901760
      %3681 = vmatpush2.msra.mxu0 %v3680
      %3682 = vmatprep.subr.mxu0 0.0
      %v3683 = vand.u32 %v1657, 4294901760
      %v3684 = vsub.f32 %v1657, %v3683
      %v3685 = vand.u32 %v3684, 4294901760
      %3686 = vmatpush2.msra.mxu0 %v3685
      %3687 = vmatprep.subr.mxu0 0.0
      %v3688 = vand.u32 %v1656, 4294901760
      %v3689 = vsub.f32 %v1656, %v3688
      %v3690 = vand.u32 %v3689, 4294901760
      %3691 = vmatpush2.msra.mxu0 %v3690
      %3692 = vmatprep.subr.mxu0 0.0
      %v3693 = vand.u32 %v1655, 4294901760
      %v3694 = vsub.f32 %v1655, %v3693
      %v3695 = vand.u32 %v3694, 4294901760
      %3696 = vmatpush2.msra.mxu0 %v3695
      %3697 = vmatprep.subr.mxu0 0.0
      %v3698 = vand.u32 %v1654, 4294901760
      %v3699 = vsub.f32 %v1654, %v3698
      %v3700 = vand.u32 %v3699, 4294901760
      %3701 = vmatpush2.msra.mxu0 %v3700
      %3702 = vmatprep.subr.mxu0 0.0
      %v3703 = vand.u32 %v1653, 4294901760
      %v3704 = vsub.f32 %v1653, %v3703
      %v3705 = vand.u32 %v3704, 4294901760
      %3706 = vmatpush2.msra.mxu0 %v3705
      %3707 = vmatprep.subr.mxu0 0.0
      %v3708 = vand.u32 %v1652, 4294901760
      %v3709 = vsub.f32 %v1652, %v3708
      %v3710 = vand.u32 %v3709, 4294901760
      %3711 = vmatpush2.msra.mxu0 %v3710
      %3712 = vmatprep.subr.mxu0 0.0
      %v3713 = vand.u32 %v1651, 4294901760
      %v3714 = vsub.f32 %v1651, %v3713
      %v3715 = vand.u32 %v3714, 4294901760
      %3716 = vmatpush2.msra.mxu0 %v3715
      %3717 = vmatprep.subr.mxu0 0.0
      %v3718 = vand.u32 %v1650, 4294901760
      %v3719 = vsub.f32 %v1650, %v3718
      %v3720 = vand.u32 %v3719, 4294901760
      %3721 = vmatpush2.msra.mxu0 %v3720
      %3722 = vmatprep.subr.mxu0 0.0
      %v3723 = vand.u32 %v1649, 4294901760
      %v3724 = vsub.f32 %v1649, %v3723
      %v3725 = vand.u32 %v3724, 4294901760
      %3726 = vmatpush2.msra.mxu0 %v3725
      %v3727 = vand.u32 %v1603, 4294901760
      %3728 = vmatprep.mubr.f32.mxu0 %v3727
      %v3729 = vand.u32 %v1513, 4294901760
      %3730 = vmatmul.mubr.f32.gmra.mxu0 %v3729
      %v3731 = vpop.f32.mrf.mxu0
      %v3732 = vadd.f32 %v3245, %v3731
      %v3733 = vpop.f32.mrf.mxu0
      %v3734 = vand.u32 %v1604, 4294901760
      %3735 = vmatprep.mubr.f32.mxu0 %v3734
      %v3736 = vand.u32 %v1514, 4294901760
      %3737 = vmatmul.mubr.f32.gmra.mxu0 %v3736
      %v3738 = vpop.f32.mrf.mxu0
      %v3739 = vadd.f32 %v3256, %v3738
      %v3740 = vpop.f32.mrf.mxu0
      %v3741 = vand.u32 %v1605, 4294901760
      %3742 = vmatprep.mubr.f32.mxu0 %v3741
      %v3743 = vand.u32 %v1515, 4294901760
      %3744 = vmatmul.mubr.f32.gmra.mxu0 %v3743
      %v3745 = vpop.f32.mrf.mxu0
      %v3746 = vadd.f32 %v3267, %v3745
      %v3747 = vpop.f32.mrf.mxu0
      %v3748 = vand.u32 %v1606, 4294901760
      %3749 = vmatprep.mubr.f32.mxu0 %v3748
      %v3750 = vand.u32 %v1516, 4294901760
      %3751 = vmatmul.mubr.f32.gmra.mxu0 %v3750
      %v3752 = vpop.f32.mrf.mxu0
      %v3753 = vadd.f32 %v3278, %v3752
      %v3754 = vpop.f32.mrf.mxu0
      %v3755 = vand.u32 %v1607, 4294901760
      %3756 = vmatprep.mubr.f32.mxu0 %v3755
      %v3757 = vand.u32 %v1517, 4294901760
      %3758 = vmatmul.mubr.f32.gmra.mxu0 %v3757
      %v3759 = vpop.f32.mrf.mxu0
      %v3760 = vadd.f32 %v3289, %v3759
      %v3761 = vpop.f32.mrf.mxu0
      %v3762 = vand.u32 %v1608, 4294901760
      %3763 = vmatprep.mubr.f32.mxu0 %v3762
      %v3764 = vand.u32 %v1518, 4294901760
      %3765 = vmatmul.mubr.f32.gmra.mxu0 %v3764
      %v3766 = vpop.f32.mrf.mxu0
      %v3767 = vadd.f32 %v3300, %v3766
      %v3768 = vpop.f32.mrf.mxu0
      %v3769 = vand.u32 %v1609, 4294901760
      %3770 = vmatprep.mubr.f32.mxu0 %v3769
      %v3771 = vand.u32 %v1519, 4294901760
      %3772 = vmatmul.mubr.f32.gmra.mxu0 %v3771
      %v3773 = vpop.f32.mrf.mxu0
      %v3774 = vadd.f32 %v3311, %v3773
      %v3775 = vpop.f32.mrf.mxu0
      %v3776 = vand.u32 %v1610, 4294901760
      %3777 = vmatprep.mubr.f32.mxu0 %v3776
      %v3778 = vand.u32 %v1520, 4294901760
      %3779 = vmatmul.mubr.f32.gmra.mxu0 %v3778
      %v3780 = vpop.f32.mrf.mxu0
      %v3781 = vadd.f32 %v3322, %v3780
      %v3782 = vpop.f32.mrf.mxu0
      %v3783 = vand.u32 %v1611, 4294901760
      %3784 = vmatprep.mubr.f32.mxu0 %v3783
      %v3785 = vand.u32 %v1521, 4294901760
      %3786 = vmatmul.mubr.f32.gmra.mxu0 %v3785
      %v3787 = vpop.f32.mrf.mxu0
      %v3788 = vadd.f32 %v3333, %v3787
      %v3789 = vpop.f32.mrf.mxu0
      %v3790 = vand.u32 %v1612, 4294901760
      %3791 = vmatprep.mubr.f32.mxu0 %v3790
      %v3792 = vand.u32 %v1522, 4294901760
      %3793 = vmatmul.mubr.f32.gmra.mxu0 %v3792
      %v3794 = vpop.f32.mrf.mxu0
      %v3795 = vadd.f32 %v3344, %v3794
      %v3796 = vpop.f32.mrf.mxu0
      %v3797 = vand.u32 %v1613, 4294901760
      %3798 = vmatprep.mubr.f32.mxu0 %v3797
      %v3799 = vand.u32 %v1523, 4294901760
      %3800 = vmatmul.mubr.f32.gmra.mxu0 %v3799
      %v3801 = vpop.f32.mrf.mxu0
      %v3802 = vadd.f32 %v3355, %v3801
      %v3803 = vpop.f32.mrf.mxu0
      %v3804 = vand.u32 %v1614, 4294901760
      %3805 = vmatprep.mubr.f32.mxu0 %v3804
      %v3806 = vand.u32 %v1524, 4294901760
      %3807 = vmatmul.mubr.f32.gmra.mxu0 %v3806
      %v3808 = vpop.f32.mrf.mxu0
      %v3809 = vadd.f32 %v3366, %v3808
      %v3810 = vpop.f32.mrf.mxu0
      %v3811 = vand.u32 %v1615, 4294901760
      %3812 = vmatprep.mubr.f32.mxu0 %v3811
      %v3813 = vand.u32 %v1525, 4294901760
      %3814 = vmatmul.mubr.f32.gmra.mxu0 %v3813
      %v3815 = vpop.f32.mrf.mxu0
      %v3816 = vadd.f32 %v3377, %v3815
      %v3817 = vpop.f32.mrf.mxu0
      %v3818 = vand.u32 %v1616, 4294901760
      %3819 = vmatprep.mubr.f32.mxu0 %v3818
      %v3820 = vand.u32 %v1526, 4294901760
      %3821 = vmatmul.mubr.f32.gmra.mxu0 %v3820
      %v3822 = vpop.f32.mrf.mxu0
      %v3823 = vadd.f32 %v3388, %v3822
      %v3824 = vpop.f32.mrf.mxu0
      %v3825 = vand.u32 %v1617, 4294901760
      %3826 = vmatprep.mubr.f32.mxu0 %v3825
      %v3827 = vand.u32 %v1527, 4294901760
      %3828 = vmatmul.mubr.f32.gmra.mxu0 %v3827
      %v3829 = vpop.f32.mrf.mxu0
      %v3830 = vadd.f32 %v3399, %v3829
      %v3831 = vpop.f32.mrf.mxu0
      %v3832 = vand.u32 %v1618, 4294901760
      %3833 = vmatprep.mubr.f32.mxu0 %v3832
      %v3834 = vand.u32 %v1528, 4294901760
      %3835 = vmatmul.mubr.f32.gmra.mxu0 %v3834
      %v3836 = vpop.f32.mrf.mxu0
      %v3837 = vadd.f32 %v3410, %v3836
      %v3838 = vpop.f32.mrf.mxu0
      %v3839 = vand.u32 %v1619, 4294901760
      %3840 = vmatprep.mubr.f32.mxu0 %v3839
      %v3841 = vand.u32 %v1529, 4294901760
      %3842 = vmatmul.mubr.f32.gmra.mxu0 %v3841
      %v3843 = vpop.f32.mrf.mxu0
      %v3844 = vadd.f32 %v3421, %v3843
      %v3845 = vpop.f32.mrf.mxu0
      %v3846 = vand.u32 %v1620, 4294901760
      %3847 = vmatprep.mubr.f32.mxu0 %v3846
      %v3848 = vand.u32 %v1530, 4294901760
      %3849 = vmatmul.mubr.f32.gmra.mxu0 %v3848
      %v3850 = vpop.f32.mrf.mxu0
      %v3851 = vadd.f32 %v3432, %v3850
      %v3852 = vpop.f32.mrf.mxu0
      %v3853 = vand.u32 %v1621, 4294901760
      %3854 = vmatprep.mubr.f32.mxu0 %v3853
      %v3855 = vand.u32 %v1531, 4294901760
      %3856 = vmatmul.mubr.f32.gmra.mxu0 %v3855
      %v3857 = vpop.f32.mrf.mxu0
      %v3858 = vadd.f32 %v3443, %v3857
      %v3859 = vpop.f32.mrf.mxu0
      %v3860 = vand.u32 %v1622, 4294901760
      %3861 = vmatprep.mubr.f32.mxu0 %v3860
      %v3862 = vand.u32 %v1532, 4294901760
      %3863 = vmatmul.mubr.f32.gmra.mxu0 %v3862
      %v3864 = vpop.f32.mrf.mxu0
      %v3865 = vadd.f32 %v3454, %v3864
      %v3866 = vpop.f32.mrf.mxu0
      %v3867 = vand.u32 %v1623, 4294901760
      %3868 = vmatprep.mubr.f32.mxu0 %v3867
      %v3869 = vand.u32 %v1533, 4294901760
      %3870 = vmatmul.mubr.f32.gmra.mxu0 %v3869
      %v3871 = vpop.f32.mrf.mxu0
      %v3872 = vadd.f32 %v3465, %v3871
      %v3873 = vpop.f32.mrf.mxu0
      %v3874 = vand.u32 %v1624, 4294901760
      %3875 = vmatprep.mubr.f32.mxu0 %v3874
      %v3876 = vand.u32 %v1534, 4294901760
      %3877 = vmatmul.mubr.f32.gmra.mxu0 %v3876
      %v3878 = vpop.f32.mrf.mxu0
      %v3879 = vadd.f32 %v3476, %v3878
      %v3880 = vpop.f32.mrf.mxu0
      %v3881 = vand.u32 %v1625, 4294901760
      %3882 = vmatprep.mubr.f32.mxu0 %v3881
      %v3883 = vand.u32 %v1535, 4294901760
      %3884 = vmatmul.mubr.f32.gmra.mxu0 %v3883
      %v3885 = vpop.f32.mrf.mxu0
      %v3886 = vadd.f32 %v3487, %v3885
      %v3887 = vpop.f32.mrf.mxu0
      %v3888 = vand.u32 %v1626, 4294901760
      %3889 = vmatprep.mubr.f32.mxu0 %v3888
      %v3890 = vand.u32 %v1536, 4294901760
      %3891 = vmatmul.mubr.f32.gmra.mxu0 %v3890
      %v3892 = vpop.f32.mrf.mxu0
      %v3893 = vadd.f32 %v3498, %v3892
      %v3894 = vpop.f32.mrf.mxu0
      %v3895 = vand.u32 %v1627, 4294901760
      %3896 = vmatprep.mubr.f32.mxu0 %v3895
      %v3897 = vand.u32 %v1537, 4294901760
      %3898 = vmatmul.mubr.f32.gmra.mxu0 %v3897
      %v3899 = vpop.f32.mrf.mxu0
      %v3900 = vadd.f32 %v3509, %v3899
      %v3901 = vpop.f32.mrf.mxu0
      %v3902 = vand.u32 %v1628, 4294901760
      %3903 = vmatprep.mubr.f32.mxu0 %v3902
      %v3904 = vand.u32 %v1538, 4294901760
      %3905 = vmatmul.mubr.f32.gmra.mxu0 %v3904
      %v3906 = vpop.f32.mrf.mxu0
      %v3907 = vadd.f32 %v3520, %v3906
      %v3908 = vpop.f32.mrf.mxu0
      %v3909 = vand.u32 %v1629, 4294901760
      %3910 = vmatprep.mubr.f32.mxu0 %v3909
      %v3911 = vand.u32 %v1539, 4294901760
      %3912 = vmatmul.mubr.f32.gmra.mxu0 %v3911
      %v3913 = vpop.f32.mrf.mxu0
      %v3914 = vadd.f32 %v3531, %v3913
      %v3915 = vpop.f32.mrf.mxu0
      %v3916 = vand.u32 %v1630, 4294901760
      %3917 = vmatprep.mubr.f32.mxu0 %v3916
      %v3918 = vand.u32 %v1540, 4294901760
      %3919 = vmatmul.mubr.f32.gmra.mxu0 %v3918
      %v3920 = vpop.f32.mrf.mxu0
      %v3921 = vadd.f32 %v3542, %v3920
      %v3922 = vpop.f32.mrf.mxu0
      %v3923 = vand.u32 %v1631, 4294901760
      %3924 = vmatprep.mubr.f32.mxu0 %v3923
      %v3925 = vand.u32 %v1541, 4294901760
      %3926 = vmatmul.mubr.f32.gmra.mxu0 %v3925
      %v3927 = vpop.f32.mrf.mxu0
      %v3928 = vadd.f32 %v3553, %v3927
      %v3929 = vpop.f32.mrf.mxu0
      %v3930 = vand.u32 %v1632, 4294901760
      %3931 = vmatprep.mubr.f32.mxu0 %v3930
      %v3932 = vand.u32 %v1542, 4294901760
      %3933 = vmatmul.mubr.f32.gmra.mxu0 %v3932
      %v3934 = vpop.f32.mrf.mxu0
      %v3935 = vadd.f32 %v3564, %v3934
      %v3936 = vpop.f32.mrf.mxu0
      %3937 = vdwg.mxu0
      %3938 = vmatprep.subr.mxu0 0.0
      %v3939 = vand.u32 %v1648, 4294901760
      %3940 = vmatpush1.msra.mxu0 %v3939
      %3941 = vmatprep.subr.mxu0 0.0
      %v3942 = vand.u32 %v1647, 4294901760
      %3943 = vmatpush1.msra.mxu0 %v3942
      %3944 = vmatprep.subr.mxu0 0.0
      %v3945 = vand.u32 %v1646, 4294901760
      %3946 = vmatpush1.msra.mxu0 %v3945
      %3947 = vmatprep.subr.mxu0 0.0
      %v3948 = vand.u32 %v1645, 4294901760
      %3949 = vmatpush1.msra.mxu0 %v3948
      %3950 = vmatprep.subr.mxu0 0.0
      %v3951 = vand.u32 %v1644, 4294901760
      %3952 = vmatpush1.msra.mxu0 %v3951
      %3953 = vmatprep.subr.mxu0 0.0
      %v3954 = vand.u32 %v1643, 4294901760
      %3955 = vmatpush1.msra.mxu0 %v3954
      %3956 = vmatprep.subr.mxu0 0.0
      %v3957 = vand.u32 %v1642, 4294901760
      %3958 = vmatpush1.msra.mxu0 %v3957
      %3959 = vmatprep.subr.mxu0 0.0
      %v3960 = vand.u32 %v1641, 4294901760
      %3961 = vmatpush1.msra.mxu0 %v3960
      %3962 = vmatprep.subr.mxu0 0.0
      %v3963 = vand.u32 %v1640, 4294901760
      %3964 = vmatpush1.msra.mxu0 %v3963
      %3965 = vmatprep.subr.mxu0 0.0
      %v3966 = vand.u32 %v1639, 4294901760
      %3967 = vmatpush1.msra.mxu0 %v3966
      %3968 = vmatprep.subr.mxu0 0.0
      %v3969 = vand.u32 %v1638, 4294901760
      %3970 = vmatpush1.msra.mxu0 %v3969
      %3971 = vmatprep.subr.mxu0 0.0
      %v3972 = vand.u32 %v1637, 4294901760
      %3973 = vmatpush1.msra.mxu0 %v3972
      %3974 = vmatprep.subr.mxu0 0.0
      %v3975 = vand.u32 %v1636, 4294901760
      %3976 = vmatpush1.msra.mxu0 %v3975
      %3977 = vmatprep.subr.mxu0 0.0
      %v3978 = vand.u32 %v1635, 4294901760
      %3979 = vmatpush1.msra.mxu0 %v3978
      %3980 = vmatprep.subr.mxu0 0.0
      %v3981 = vand.u32 %v1634, 4294901760
      %3982 = vmatpush1.msra.mxu0 %v3981
      %3983 = vmatprep.subr.mxu0 0.0
      %v3984 = vand.u32 %v1633, 4294901760
      %3985 = vmatpush1.msra.mxu0 %v3984
      %3986 = vmatprep.subr.mxu0 0.0
      %v3987 = vand.u32 %v1664, 4294901760
      %3988 = vmatpush2.msra.mxu0 %v3987
      %3989 = vmatprep.subr.mxu0 0.0
      %v3990 = vand.u32 %v1663, 4294901760
      %3991 = vmatpush2.msra.mxu0 %v3990
      %3992 = vmatprep.subr.mxu0 0.0
      %v3993 = vand.u32 %v1662, 4294901760
      %3994 = vmatpush2.msra.mxu0 %v3993
      %3995 = vmatprep.subr.mxu0 0.0
      %v3996 = vand.u32 %v1661, 4294901760
      %3997 = vmatpush2.msra.mxu0 %v3996
      %3998 = vmatprep.subr.mxu0 0.0
      %v3999 = vand.u32 %v1660, 4294901760
      %4000 = vmatpush2.msra.mxu0 %v3999
      %4001 = vmatprep.subr.mxu0 0.0
      %v4002 = vand.u32 %v1659, 4294901760
      %4003 = vmatpush2.msra.mxu0 %v4002
      %4004 = vmatprep.subr.mxu0 0.0
      %v4005 = vand.u32 %v1658, 4294901760
      %4006 = vmatpush2.msra.mxu0 %v4005
      %4007 = vmatprep.subr.mxu0 0.0
      %v4008 = vand.u32 %v1657, 4294901760
      %4009 = vmatpush2.msra.mxu0 %v4008
      %4010 = vmatprep.subr.mxu0 0.0
      %v4011 = vand.u32 %v1656, 4294901760
      %4012 = vmatpush2.msra.mxu0 %v4011
      %4013 = vmatprep.subr.mxu0 0.0
      %v4014 = vand.u32 %v1655, 4294901760
      %4015 = vmatpush2.msra.mxu0 %v4014
      %4016 = vmatprep.subr.mxu0 0.0
      %v4017 = vand.u32 %v1654, 4294901760
      %4018 = vmatpush2.msra.mxu0 %v4017
      %4019 = vmatprep.subr.mxu0 0.0
      %v4020 = vand.u32 %v1653, 4294901760
      %4021 = vmatpush2.msra.mxu0 %v4020
      %4022 = vmatprep.subr.mxu0 0.0
      %v4023 = vand.u32 %v1652, 4294901760
      %4024 = vmatpush2.msra.mxu0 %v4023
      %4025 = vmatprep.subr.mxu0 0.0
      %v4026 = vand.u32 %v1651, 4294901760
      %4027 = vmatpush2.msra.mxu0 %v4026
      %4028 = vmatprep.subr.mxu0 0.0
      %v4029 = vand.u32 %v1650, 4294901760
      %4030 = vmatpush2.msra.mxu0 %v4029
      %4031 = vmatprep.subr.mxu0 0.0
      %v4032 = vand.u32 %v1649, 4294901760
      %4033 = vmatpush2.msra.mxu0 %v4032
      %v4034 = vand.u32 %v1603, 4294901760
      %4035 = vmatprep.mubr.f32.mxu0 %v4034
      %v4036 = vand.u32 %v1513, 4294901760
      %4037 = vmatmul.mubr.f32.gmra.mxu0 %v4036
      %v4038 = vpop.f32.mrf.mxu0
      %v4039 = vadd.f32 %v3732, %v4038
      %v4040 = vpop.f32.mrf.mxu0
      %v4041 = vand.u32 %v1604, 4294901760
      %4042 = vmatprep.mubr.f32.mxu0 %v4041
      %v4043 = vand.u32 %v1514, 4294901760
      %4044 = vmatmul.mubr.f32.gmra.mxu0 %v4043
      %v4045 = vpop.f32.mrf.mxu0
      %v4046 = vadd.f32 %v3739, %v4045
      %v4047 = vpop.f32.mrf.mxu0
      %v4048 = vand.u32 %v1605, 4294901760
      %4049 = vmatprep.mubr.f32.mxu0 %v4048
      %v4050 = vand.u32 %v1515, 4294901760
      %4051 = vmatmul.mubr.f32.gmra.mxu0 %v4050
      %v4052 = vpop.f32.mrf.mxu0
      %v4053 = vadd.f32 %v3746, %v4052
      %v4054 = vpop.f32.mrf.mxu0
      %v4055 = vand.u32 %v1606, 4294901760
      %4056 = vmatprep.mubr.f32.mxu0 %v4055
      %v4057 = vand.u32 %v1516, 4294901760
      %4058 = vmatmul.mubr.f32.gmra.mxu0 %v4057
      %v4059 = vpop.f32.mrf.mxu0
      %v4060 = vadd.f32 %v3753, %v4059
      %v4061 = vpop.f32.mrf.mxu0
      %v4062 = vand.u32 %v1607, 4294901760
      %4063 = vmatprep.mubr.f32.mxu0 %v4062
      %v4064 = vand.u32 %v1517, 4294901760
      %4065 = vmatmul.mubr.f32.gmra.mxu0 %v4064
      %v4066 = vpop.f32.mrf.mxu0
      %v4067 = vadd.f32 %v3760, %v4066
      %v4068 = vpop.f32.mrf.mxu0
      %v4069 = vand.u32 %v1608, 4294901760
      %4070 = vmatprep.mubr.f32.mxu0 %v4069
      %v4071 = vand.u32 %v1518, 4294901760
      %4072 = vmatmul.mubr.f32.gmra.mxu0 %v4071
      %v4073 = vpop.f32.mrf.mxu0
      %v4074 = vadd.f32 %v3767, %v4073
      %v4075 = vpop.f32.mrf.mxu0
      %v4076 = vand.u32 %v1609, 4294901760
      %4077 = vmatprep.mubr.f32.mxu0 %v4076
      %v4078 = vand.u32 %v1519, 4294901760
      %4079 = vmatmul.mubr.f32.gmra.mxu0 %v4078
      %v4080 = vpop.f32.mrf.mxu0
      %v4081 = vadd.f32 %v3774, %v4080
      %v4082 = vpop.f32.mrf.mxu0
      %v4083 = vand.u32 %v1610, 4294901760
      %4084 = vmatprep.mubr.f32.mxu0 %v4083
      %v4085 = vand.u32 %v1520, 4294901760
      %4086 = vmatmul.mubr.f32.gmra.mxu0 %v4085
      %v4087 = vpop.f32.mrf.mxu0
      %v4088 = vadd.f32 %v3781, %v4087
      %v4089 = vpop.f32.mrf.mxu0
      %v4090 = vand.u32 %v1611, 4294901760
      %4091 = vmatprep.mubr.f32.mxu0 %v4090
      %v4092 = vand.u32 %v1521, 4294901760
      %4093 = vmatmul.mubr.f32.gmra.mxu0 %v4092
      %v4094 = vpop.f32.mrf.mxu0
      %v4095 = vadd.f32 %v3788, %v4094
      %v4096 = vpop.f32.mrf.mxu0
      %v4097 = vand.u32 %v1612, 4294901760
      %4098 = vmatprep.mubr.f32.mxu0 %v4097
      %v4099 = vand.u32 %v1522, 4294901760
      %4100 = vmatmul.mubr.f32.gmra.mxu0 %v4099
      %v4101 = vpop.f32.mrf.mxu0
      %v4102 = vadd.f32 %v3795, %v4101
      %v4103 = vpop.f32.mrf.mxu0
      %v4104 = vand.u32 %v1613, 4294901760
      %4105 = vmatprep.mubr.f32.mxu0 %v4104
      %v4106 = vand.u32 %v1523, 4294901760
      %4107 = vmatmul.mubr.f32.gmra.mxu0 %v4106
      %v4108 = vpop.f32.mrf.mxu0
      %v4109 = vadd.f32 %v3802, %v4108
      %v4110 = vpop.f32.mrf.mxu0
      %v4111 = vand.u32 %v1614, 4294901760
      %4112 = vmatprep.mubr.f32.mxu0 %v4111
      %v4113 = vand.u32 %v1524, 4294901760
      %4114 = vmatmul.mubr.f32.gmra.mxu0 %v4113
      %v4115 = vpop.f32.mrf.mxu0
      %v4116 = vadd.f32 %v3809, %v4115
      %v4117 = vpop.f32.mrf.mxu0
      %v4118 = vand.u32 %v1615, 4294901760
      %4119 = vmatprep.mubr.f32.mxu0 %v4118
      %v4120 = vand.u32 %v1525, 4294901760
      %4121 = vmatmul.mubr.f32.gmra.mxu0 %v4120
      %v4122 = vpop.f32.mrf.mxu0
      %v4123 = vadd.f32 %v3816, %v4122
      %v4124 = vpop.f32.mrf.mxu0
      %v4125 = vand.u32 %v1616, 4294901760
      %4126 = vmatprep.mubr.f32.mxu0 %v4125
      %v4127 = vand.u32 %v1526, 4294901760
      %4128 = vmatmul.mubr.f32.gmra.mxu0 %v4127
      %v4129 = vpop.f32.mrf.mxu0
      %v4130 = vadd.f32 %v3823, %v4129
      %v4131 = vpop.f32.mrf.mxu0
      %v4132 = vand.u32 %v1617, 4294901760
      %4133 = vmatprep.mubr.f32.mxu0 %v4132
      %v4134 = vand.u32 %v1527, 4294901760
      %4135 = vmatmul.mubr.f32.gmra.mxu0 %v4134
      %v4136 = vpop.f32.mrf.mxu0
      %v4137 = vadd.f32 %v3830, %v4136
      %v4138 = vpop.f32.mrf.mxu0
      %v4139 = vand.u32 %v1618, 4294901760
      %4140 = vmatprep.mubr.f32.mxu0 %v4139
      %v4141 = vand.u32 %v1528, 4294901760
      %4142 = vmatmul.mubr.f32.gmra.mxu0 %v4141
      %v4143 = vpop.f32.mrf.mxu0
      %v4144 = vadd.f32 %v3837, %v4143
      %v4145 = vpop.f32.mrf.mxu0
      %v4146 = vand.u32 %v1619, 4294901760
      %4147 = vmatprep.mubr.f32.mxu0 %v4146
      %v4148 = vand.u32 %v1529, 4294901760
      %4149 = vmatmul.mubr.f32.gmra.mxu0 %v4148
      %v4150 = vpop.f32.mrf.mxu0
      %v4151 = vadd.f32 %v3844, %v4150
      %v4152 = vpop.f32.mrf.mxu0
      %v4153 = vand.u32 %v1620, 4294901760
      %4154 = vmatprep.mubr.f32.mxu0 %v4153
      %v4155 = vand.u32 %v1530, 4294901760
      %4156 = vmatmul.mubr.f32.gmra.mxu0 %v4155
      %v4157 = vpop.f32.mrf.mxu0
      %v4158 = vadd.f32 %v3851, %v4157
      %v4159 = vpop.f32.mrf.mxu0
      %v4160 = vand.u32 %v1621, 4294901760
      %4161 = vmatprep.mubr.f32.mxu0 %v4160
      %v4162 = vand.u32 %v1531, 4294901760
      %4163 = vmatmul.mubr.f32.gmra.mxu0 %v4162
      %v4164 = vpop.f32.mrf.mxu0
      %v4165 = vadd.f32 %v3858, %v4164
      %v4166 = vpop.f32.mrf.mxu0
      %v4167 = vand.u32 %v1622, 4294901760
      %4168 = vmatprep.mubr.f32.mxu0 %v4167
      %v4169 = vand.u32 %v1532, 4294901760
      %4170 = vmatmul.mubr.f32.gmra.mxu0 %v4169
      %v4171 = vpop.f32.mrf.mxu0
      %v4172 = vadd.f32 %v3865, %v4171
      %v4173 = vpop.f32.mrf.mxu0
      %v4174 = vand.u32 %v1623, 4294901760
      %4175 = vmatprep.mubr.f32.mxu0 %v4174
      %v4176 = vand.u32 %v1533, 4294901760
      %4177 = vmatmul.mubr.f32.gmra.mxu0 %v4176
      %v4178 = vpop.f32.mrf.mxu0
      %v4179 = vadd.f32 %v3872, %v4178
      %v4180 = vpop.f32.mrf.mxu0
      %v4181 = vand.u32 %v1624, 4294901760
      %4182 = vmatprep.mubr.f32.mxu0 %v4181
      %v4183 = vand.u32 %v1534, 4294901760
      %4184 = vmatmul.mubr.f32.gmra.mxu0 %v4183
      %v4185 = vpop.f32.mrf.mxu0
      %v4186 = vadd.f32 %v3879, %v4185
      %v4187 = vpop.f32.mrf.mxu0
      %v4188 = vand.u32 %v1625, 4294901760
      %4189 = vmatprep.mubr.f32.mxu0 %v4188
      %v4190 = vand.u32 %v1535, 4294901760
      %4191 = vmatmul.mubr.f32.gmra.mxu0 %v4190
      %v4192 = vpop.f32.mrf.mxu0
      %v4193 = vadd.f32 %v3886, %v4192
      %v4194 = vpop.f32.mrf.mxu0
      %v4195 = vand.u32 %v1626, 4294901760
      %4196 = vmatprep.mubr.f32.mxu0 %v4195
      %v4197 = vand.u32 %v1536, 4294901760
      %4198 = vmatmul.mubr.f32.gmra.mxu0 %v4197
      %v4199 = vpop.f32.mrf.mxu0
      %v4200 = vadd.f32 %v3893, %v4199
      %v4201 = vpop.f32.mrf.mxu0
      %v4202 = vand.u32 %v1627, 4294901760
      %4203 = vmatprep.mubr.f32.mxu0 %v4202
      %v4204 = vand.u32 %v1537, 4294901760
      %4205 = vmatmul.mubr.f32.gmra.mxu0 %v4204
      %v4206 = vpop.f32.mrf.mxu0
      %v4207 = vadd.f32 %v3900, %v4206
      %v4208 = vpop.f32.mrf.mxu0
      %v4209 = vand.u32 %v1628, 4294901760
      %4210 = vmatprep.mubr.f32.mxu0 %v4209
      %v4211 = vand.u32 %v1538, 4294901760
      %4212 = vmatmul.mubr.f32.gmra.mxu0 %v4211
      %v4213 = vpop.f32.mrf.mxu0
      %v4214 = vadd.f32 %v3907, %v4213
      %v4215 = vpop.f32.mrf.mxu0
      %v4216 = vand.u32 %v1629, 4294901760
      %4217 = vmatprep.mubr.f32.mxu0 %v4216
      %v4218 = vand.u32 %v1539, 4294901760
      %4219 = vmatmul.mubr.f32.gmra.mxu0 %v4218
      %v4220 = vpop.f32.mrf.mxu0
      %v4221 = vadd.f32 %v3914, %v4220
      %v4222 = vpop.f32.mrf.mxu0
      %v4223 = vand.u32 %v1630, 4294901760
      %4224 = vmatprep.mubr.f32.mxu0 %v4223
      %v4225 = vand.u32 %v1540, 4294901760
      %4226 = vmatmul.mubr.f32.gmra.mxu0 %v4225
      %v4227 = vpop.f32.mrf.mxu0
      %v4228 = vadd.f32 %v3921, %v4227
      %v4229 = vpop.f32.mrf.mxu0
      %v4230 = vand.u32 %v1631, 4294901760
      %4231 = vmatprep.mubr.f32.mxu0 %v4230
      %v4232 = vand.u32 %v1541, 4294901760
      %4233 = vmatmul.mubr.f32.gmra.mxu0 %v4232
      %v4234 = vpop.f32.mrf.mxu0
      %v4235 = vadd.f32 %v3928, %v4234
      %v4236 = vpop.f32.mrf.mxu0
      %v4237 = vand.u32 %v1632, 4294901760
      %4238 = vmatprep.mubr.f32.mxu0 %v4237
      %v4239 = vand.u32 %v1542, 4294901760
      %4240 = vmatmul.mubr.f32.gmra.mxu0 %v4239
      %v4241 = vpop.f32.mrf.mxu0
      %v4242 = vadd.f32 %v3935, %v4241
      %v4243 = vpop.f32.mrf.mxu0
      %4244 = vdwg.mxu0
      %4245 = vmatprep.subr.mxu0 0.0
      %4246 = vmatpush1.msra.mxu0 0.0
      %4247 = vmatprep.subr.mxu0 0.0
      %4248 = vmatpush1.msra.mxu0 0.0
      %4249 = vmatprep.subr.mxu0 0.0
      %4250 = vmatpush1.msra.mxu0 0.0
      %4251 = vmatprep.subr.mxu0 0.0
      %4252 = vmatpush1.msra.mxu0 0.0
      %4253 = vmatprep.subr.mxu0 0.0
      %4254 = vmatpush1.msra.mxu0 0.0
      %4255 = vmatprep.subr.mxu0 0.0
      %4256 = vmatpush1.msra.mxu0 0.0
      %4257 = vmatprep.subr.mxu0 0.0
      %4258 = vmatpush1.msra.mxu0 0.0
      %4259 = vmatprep.subr.mxu0 0.0
      %4260 = vmatpush1.msra.mxu0 0.0
      %4261 = vmatprep.subr.mxu0 0.0
      %4262 = vmatpush1.msra.mxu0 0.0
      %4263 = vmatprep.subr.mxu0 0.0
      %4264 = vmatpush1.msra.mxu0 0.0
      %4265 = vmatprep.subr.mxu0 0.0
      %4266 = vmatpush1.msra.mxu0 0.0
      %4267 = vmatprep.subr.mxu0 0.0
      %4268 = vmatpush1.msra.mxu0 0.0
      %4269 = vmatprep.subr.mxu0 0.0
      %v4270 = vand.u32 %v1668, 4294901760
      %4271 = vmatpush1.msra.mxu0 %v4270
      %4272 = vmatprep.subr.mxu0 0.0
      %v4273 = vand.u32 %v1667, 4294901760
      %4274 = vmatpush1.msra.mxu0 %v4273
      %4275 = vmatprep.subr.mxu0 0.0
      %v4276 = vand.u32 %v1666, 4294901760
      %4277 = vmatpush1.msra.mxu0 %v4276
      %4278 = vmatprep.subr.mxu0 0.0
      %v4279 = vand.u32 %v1665, 4294901760
      %4280 = vmatpush1.msra.mxu0 %v4279
      %4281 = vmatprep.subr.mxu0 0.0
      %4282 = vmatpush2.msra.mxu0 0.0
      %4283 = vmatprep.subr.mxu0 0.0
      %4284 = vmatpush2.msra.mxu0 0.0
      %4285 = vmatprep.subr.mxu0 0.0
      %4286 = vmatpush2.msra.mxu0 0.0
      %4287 = vmatprep.subr.mxu0 0.0
      %4288 = vmatpush2.msra.mxu0 0.0
      %4289 = vmatprep.subr.mxu0 0.0
      %4290 = vmatpush2.msra.mxu0 0.0
      %4291 = vmatprep.subr.mxu0 0.0
      %4292 = vmatpush2.msra.mxu0 0.0
      %4293 = vmatprep.subr.mxu0 0.0
      %4294 = vmatpush2.msra.mxu0 0.0
      %4295 = vmatprep.subr.mxu0 0.0
      %4296 = vmatpush2.msra.mxu0 0.0
      %4297 = vmatprep.subr.mxu0 0.0
      %4298 = vmatpush2.msra.mxu0 0.0
      %4299 = vmatprep.subr.mxu0 0.0
      %4300 = vmatpush2.msra.mxu0 0.0
      %4301 = vmatprep.subr.mxu0 0.0
      %4302 = vmatpush2.msra.mxu0 0.0
      %4303 = vmatprep.subr.mxu0 0.0
      %4304 = vmatpush2.msra.mxu0 0.0
      %4305 = vmatprep.subr.mxu0 0.0
      %4306 = vmatpush2.msra.mxu0 0.0
      %4307 = vmatprep.subr.mxu0 0.0
      %4308 = vmatpush2.msra.mxu0 0.0
      %4309 = vmatprep.subr.mxu0 0.0
      %4310 = vmatpush2.msra.mxu0 0.0
      %4311 = vmatprep.subr.mxu0 0.0
      %4312 = vmatpush2.msra.mxu0 0.0
      %4313 = vmatprep.mubr.f32.mxu0 0.0
      %v4314 = vand.u32 %v1670, 4294901760
      %v4315 = vsub.f32 %v1670, %v4314
      %v4316 = vand.u32 %v4315, 4294901760
      %v4317 = vsub.f32 %v4315, %v4316
      %v4318 = vand.u32 %v4317, 4294901760
      %4319 = vmatmul.mubr.f32.gmra.mxu0 %v4318
      %v4320 = vpop.f32.mrf.mxu0
      %v4321 = vadd.f32 %v4039, %v4320
      %v4322 = vpop.f32.mrf.mxu0
      %4323 = vmatprep.mubr.f32.mxu0 0.0
      %v4324 = vand.u32 %v1673, 4294901760
      %v4325 = vsub.f32 %v1673, %v4324
      %v4326 = vand.u32 %v4325, 4294901760
      %v4327 = vsub.f32 %v4325, %v4326
      %v4328 = vand.u32 %v4327, 4294901760
      %4329 = vmatmul.mubr.f32.gmra.mxu0 %v4328
      %v4330 = vpop.f32.mrf.mxu0
      %v4331 = vadd.f32 %v4046, %v4330
      %v4332 = vpop.f32.mrf.mxu0
      %4333 = vmatprep.mubr.f32.mxu0 0.0
      %v4334 = vand.u32 %v1676, 4294901760
      %v4335 = vsub.f32 %v1676, %v4334
      %v4336 = vand.u32 %v4335, 4294901760
      %v4337 = vsub.f32 %v4335, %v4336
      %v4338 = vand.u32 %v4337, 4294901760
      %4339 = vmatmul.mubr.f32.gmra.mxu0 %v4338
      %v4340 = vpop.f32.mrf.mxu0
      %v4341 = vadd.f32 %v4053, %v4340
      %v4342 = vpop.f32.mrf.mxu0
      %4343 = vmatprep.mubr.f32.mxu0 0.0
      %v4344 = vand.u32 %v1679, 4294901760
      %v4345 = vsub.f32 %v1679, %v4344
      %v4346 = vand.u32 %v4345, 4294901760
      %v4347 = vsub.f32 %v4345, %v4346
      %v4348 = vand.u32 %v4347, 4294901760
      %4349 = vmatmul.mubr.f32.gmra.mxu0 %v4348
      %v4350 = vpop.f32.mrf.mxu0
      %v4351 = vadd.f32 %v4060, %v4350
      %v4352 = vpop.f32.mrf.mxu0
      %4353 = vmatprep.mubr.f32.mxu0 0.0
      %v4354 = vand.u32 %v1682, 4294901760
      %v4355 = vsub.f32 %v1682, %v4354
      %v4356 = vand.u32 %v4355, 4294901760
      %v4357 = vsub.f32 %v4355, %v4356
      %v4358 = vand.u32 %v4357, 4294901760
      %4359 = vmatmul.mubr.f32.gmra.mxu0 %v4358
      %v4360 = vpop.f32.mrf.mxu0
      %v4361 = vadd.f32 %v4067, %v4360
      %v4362 = vpop.f32.mrf.mxu0
      %4363 = vmatprep.mubr.f32.mxu0 0.0
      %v4364 = vand.u32 %v1685, 4294901760
      %v4365 = vsub.f32 %v1685, %v4364
      %v4366 = vand.u32 %v4365, 4294901760
      %v4367 = vsub.f32 %v4365, %v4366
      %v4368 = vand.u32 %v4367, 4294901760
      %4369 = vmatmul.mubr.f32.gmra.mxu0 %v4368
      %v4370 = vpop.f32.mrf.mxu0
      %v4371 = vadd.f32 %v4074, %v4370
      %v4372 = vpop.f32.mrf.mxu0
      %4373 = vmatprep.mubr.f32.mxu0 0.0
      %v4374 = vand.u32 %v1688, 4294901760
      %v4375 = vsub.f32 %v1688, %v4374
      %v4376 = vand.u32 %v4375, 4294901760
      %v4377 = vsub.f32 %v4375, %v4376
      %v4378 = vand.u32 %v4377, 4294901760
      %4379 = vmatmul.mubr.f32.gmra.mxu0 %v4378
      %v4380 = vpop.f32.mrf.mxu0
      %v4381 = vadd.f32 %v4081, %v4380
      %v4382 = vpop.f32.mrf.mxu0
      %4383 = vmatprep.mubr.f32.mxu0 0.0
      %v4384 = vand.u32 %v1691, 4294901760
      %v4385 = vsub.f32 %v1691, %v4384
      %v4386 = vand.u32 %v4385, 4294901760
      %v4387 = vsub.f32 %v4385, %v4386
      %v4388 = vand.u32 %v4387, 4294901760
      %4389 = vmatmul.mubr.f32.gmra.mxu0 %v4388
      %v4390 = vpop.f32.mrf.mxu0
      %v4391 = vadd.f32 %v4088, %v4390
      %v4392 = vpop.f32.mrf.mxu0
      %4393 = vmatprep.mubr.f32.mxu0 0.0
      %v4394 = vand.u32 %v1694, 4294901760
      %v4395 = vsub.f32 %v1694, %v4394
      %v4396 = vand.u32 %v4395, 4294901760
      %v4397 = vsub.f32 %v4395, %v4396
      %v4398 = vand.u32 %v4397, 4294901760
      %4399 = vmatmul.mubr.f32.gmra.mxu0 %v4398
      %v4400 = vpop.f32.mrf.mxu0
      %v4401 = vadd.f32 %v4095, %v4400
      %v4402 = vpop.f32.mrf.mxu0
      %4403 = vmatprep.mubr.f32.mxu0 0.0
      %v4404 = vand.u32 %v1697, 4294901760
      %v4405 = vsub.f32 %v1697, %v4404
      %v4406 = vand.u32 %v4405, 4294901760
      %v4407 = vsub.f32 %v4405, %v4406
      %v4408 = vand.u32 %v4407, 4294901760
      %4409 = vmatmul.mubr.f32.gmra.mxu0 %v4408
      %v4410 = vpop.f32.mrf.mxu0
      %v4411 = vadd.f32 %v4102, %v4410
      %v4412 = vpop.f32.mrf.mxu0
      %4413 = vmatprep.mubr.f32.mxu0 0.0
      %v4414 = vand.u32 %v1700, 4294901760
      %v4415 = vsub.f32 %v1700, %v4414
      %v4416 = vand.u32 %v4415, 4294901760
      %v4417 = vsub.f32 %v4415, %v4416
      %v4418 = vand.u32 %v4417, 4294901760
      %4419 = vmatmul.mubr.f32.gmra.mxu0 %v4418
      %v4420 = vpop.f32.mrf.mxu0
      %v4421 = vadd.f32 %v4109, %v4420
      %v4422 = vpop.f32.mrf.mxu0
      %4423 = vmatprep.mubr.f32.mxu0 0.0
      %v4424 = vand.u32 %v1703, 4294901760
      %v4425 = vsub.f32 %v1703, %v4424
      %v4426 = vand.u32 %v4425, 4294901760
      %v4427 = vsub.f32 %v4425, %v4426
      %v4428 = vand.u32 %v4427, 4294901760
      %4429 = vmatmul.mubr.f32.gmra.mxu0 %v4428
      %v4430 = vpop.f32.mrf.mxu0
      %v4431 = vadd.f32 %v4116, %v4430
      %v4432 = vpop.f32.mrf.mxu0
      %4433 = vmatprep.mubr.f32.mxu0 0.0
      %v4434 = vand.u32 %v1706, 4294901760
      %v4435 = vsub.f32 %v1706, %v4434
      %v4436 = vand.u32 %v4435, 4294901760
      %v4437 = vsub.f32 %v4435, %v4436
      %v4438 = vand.u32 %v4437, 4294901760
      %4439 = vmatmul.mubr.f32.gmra.mxu0 %v4438
      %v4440 = vpop.f32.mrf.mxu0
      %v4441 = vadd.f32 %v4123, %v4440
      %v4442 = vpop.f32.mrf.mxu0
      %4443 = vmatprep.mubr.f32.mxu0 0.0
      %v4444 = vand.u32 %v1709, 4294901760
      %v4445 = vsub.f32 %v1709, %v4444
      %v4446 = vand.u32 %v4445, 4294901760
      %v4447 = vsub.f32 %v4445, %v4446
      %v4448 = vand.u32 %v4447, 4294901760
      %4449 = vmatmul.mubr.f32.gmra.mxu0 %v4448
      %v4450 = vpop.f32.mrf.mxu0
      %v4451 = vadd.f32 %v4130, %v4450
      %v4452 = vpop.f32.mrf.mxu0
      %4453 = vmatprep.mubr.f32.mxu0 0.0
      %v4454 = vand.u32 %v1712, 4294901760
      %v4455 = vsub.f32 %v1712, %v4454
      %v4456 = vand.u32 %v4455, 4294901760
      %v4457 = vsub.f32 %v4455, %v4456
      %v4458 = vand.u32 %v4457, 4294901760
      %4459 = vmatmul.mubr.f32.gmra.mxu0 %v4458
      %v4460 = vpop.f32.mrf.mxu0
      %v4461 = vadd.f32 %v4137, %v4460
      %v4462 = vpop.f32.mrf.mxu0
      %4463 = vmatprep.mubr.f32.mxu0 0.0
      %v4464 = vand.u32 %v1715, 4294901760
      %v4465 = vsub.f32 %v1715, %v4464
      %v4466 = vand.u32 %v4465, 4294901760
      %v4467 = vsub.f32 %v4465, %v4466
      %v4468 = vand.u32 %v4467, 4294901760
      %4469 = vmatmul.mubr.f32.gmra.mxu0 %v4468
      %v4470 = vpop.f32.mrf.mxu0
      %v4471 = vadd.f32 %v4144, %v4470
      %v4472 = vpop.f32.mrf.mxu0
      %4473 = vmatprep.mubr.f32.mxu0 0.0
      %v4474 = vand.u32 %v1718, 4294901760
      %v4475 = vsub.f32 %v1718, %v4474
      %v4476 = vand.u32 %v4475, 4294901760
      %v4477 = vsub.f32 %v4475, %v4476
      %v4478 = vand.u32 %v4477, 4294901760
      %4479 = vmatmul.mubr.f32.gmra.mxu0 %v4478
      %v4480 = vpop.f32.mrf.mxu0
      %v4481 = vadd.f32 %v4151, %v4480
      %v4482 = vpop.f32.mrf.mxu0
      %4483 = vmatprep.mubr.f32.mxu0 0.0
      %v4484 = vand.u32 %v1721, 4294901760
      %v4485 = vsub.f32 %v1721, %v4484
      %v4486 = vand.u32 %v4485, 4294901760
      %v4487 = vsub.f32 %v4485, %v4486
      %v4488 = vand.u32 %v4487, 4294901760
      %4489 = vmatmul.mubr.f32.gmra.mxu0 %v4488
      %v4490 = vpop.f32.mrf.mxu0
      %v4491 = vadd.f32 %v4158, %v4490
      %v4492 = vpop.f32.mrf.mxu0
      %4493 = vmatprep.mubr.f32.mxu0 0.0
      %v4494 = vand.u32 %v1724, 4294901760
      %v4495 = vsub.f32 %v1724, %v4494
      %v4496 = vand.u32 %v4495, 4294901760
      %v4497 = vsub.f32 %v4495, %v4496
      %v4498 = vand.u32 %v4497, 4294901760
      %4499 = vmatmul.mubr.f32.gmra.mxu0 %v4498
      %v4500 = vpop.f32.mrf.mxu0
      %v4501 = vadd.f32 %v4165, %v4500
      %v4502 = vpop.f32.mrf.mxu0
      %4503 = vmatprep.mubr.f32.mxu0 0.0
      %v4504 = vand.u32 %v1727, 4294901760
      %v4505 = vsub.f32 %v1727, %v4504
      %v4506 = vand.u32 %v4505, 4294901760
      %v4507 = vsub.f32 %v4505, %v4506
      %v4508 = vand.u32 %v4507, 4294901760
      %4509 = vmatmul.mubr.f32.gmra.mxu0 %v4508
      %v4510 = vpop.f32.mrf.mxu0
      %v4511 = vadd.f32 %v4172, %v4510
      %v4512 = vpop.f32.mrf.mxu0
      %4513 = vmatprep.mubr.f32.mxu0 0.0
      %v4514 = vand.u32 %v1730, 4294901760
      %v4515 = vsub.f32 %v1730, %v4514
      %v4516 = vand.u32 %v4515, 4294901760
      %v4517 = vsub.f32 %v4515, %v4516
      %v4518 = vand.u32 %v4517, 4294901760
      %4519 = vmatmul.mubr.f32.gmra.mxu0 %v4518
      %v4520 = vpop.f32.mrf.mxu0
      %v4521 = vadd.f32 %v4179, %v4520
      %v4522 = vpop.f32.mrf.mxu0
      %4523 = vmatprep.mubr.f32.mxu0 0.0
      %v4524 = vand.u32 %v1733, 4294901760
      %v4525 = vsub.f32 %v1733, %v4524
      %v4526 = vand.u32 %v4525, 4294901760
      %v4527 = vsub.f32 %v4525, %v4526
      %v4528 = vand.u32 %v4527, 4294901760
      %4529 = vmatmul.mubr.f32.gmra.mxu0 %v4528
      %v4530 = vpop.f32.mrf.mxu0
      %v4531 = vadd.f32 %v4186, %v4530
      %v4532 = vpop.f32.mrf.mxu0
      %4533 = vmatprep.mubr.f32.mxu0 0.0
      %v4534 = vand.u32 %v1736, 4294901760
      %v4535 = vsub.f32 %v1736, %v4534
      %v4536 = vand.u32 %v4535, 4294901760
      %v4537 = vsub.f32 %v4535, %v4536
      %v4538 = vand.u32 %v4537, 4294901760
      %4539 = vmatmul.mubr.f32.gmra.mxu0 %v4538
      %v4540 = vpop.f32.mrf.mxu0
      %v4541 = vadd.f32 %v4193, %v4540
      %v4542 = vpop.f32.mrf.mxu0
      %4543 = vmatprep.mubr.f32.mxu0 0.0
      %v4544 = vand.u32 %v1739, 4294901760
      %v4545 = vsub.f32 %v1739, %v4544
      %v4546 = vand.u32 %v4545, 4294901760
      %v4547 = vsub.f32 %v4545, %v4546
      %v4548 = vand.u32 %v4547, 4294901760
      %4549 = vmatmul.mubr.f32.gmra.mxu0 %v4548
      %v4550 = vpop.f32.mrf.mxu0
      %v4551 = vadd.f32 %v4200, %v4550
      %v4552 = vpop.f32.mrf.mxu0
      %4553 = vmatprep.mubr.f32.mxu0 0.0
      %v4554 = vand.u32 %v1742, 4294901760
      %v4555 = vsub.f32 %v1742, %v4554
      %v4556 = vand.u32 %v4555, 4294901760
      %v4557 = vsub.f32 %v4555, %v4556
      %v4558 = vand.u32 %v4557, 4294901760
      %4559 = vmatmul.mubr.f32.gmra.mxu0 %v4558
      %v4560 = vpop.f32.mrf.mxu0
      %v4561 = vadd.f32 %v4207, %v4560
      %v4562 = vpop.f32.mrf.mxu0
      %4563 = vmatprep.mubr.f32.mxu0 0.0
      %v4564 = vand.u32 %v1745, 4294901760
      %v4565 = vsub.f32 %v1745, %v4564
      %v4566 = vand.u32 %v4565, 4294901760
      %v4567 = vsub.f32 %v4565, %v4566
      %v4568 = vand.u32 %v4567, 4294901760
      %4569 = vmatmul.mubr.f32.gmra.mxu0 %v4568
      %v4570 = vpop.f32.mrf.mxu0
      %v4571 = vadd.f32 %v4214, %v4570
      %v4572 = vpop.f32.mrf.mxu0
      %4573 = vmatprep.mubr.f32.mxu0 0.0
      %v4574 = vand.u32 %v1748, 4294901760
      %v4575 = vsub.f32 %v1748, %v4574
      %v4576 = vand.u32 %v4575, 4294901760
      %v4577 = vsub.f32 %v4575, %v4576
      %v4578 = vand.u32 %v4577, 4294901760
      %4579 = vmatmul.mubr.f32.gmra.mxu0 %v4578
      %v4580 = vpop.f32.mrf.mxu0
      %v4581 = vadd.f32 %v4221, %v4580
      %v4582 = vpop.f32.mrf.mxu0
      %4583 = vmatprep.mubr.f32.mxu0 0.0
      %v4584 = vand.u32 %v1751, 4294901760
      %v4585 = vsub.f32 %v1751, %v4584
      %v4586 = vand.u32 %v4585, 4294901760
      %v4587 = vsub.f32 %v4585, %v4586
      %v4588 = vand.u32 %v4587, 4294901760
      %4589 = vmatmul.mubr.f32.gmra.mxu0 %v4588
      %v4590 = vpop.f32.mrf.mxu0
      %v4591 = vadd.f32 %v4228, %v4590
      %v4592 = vpop.f32.mrf.mxu0
      %4593 = vmatprep.mubr.f32.mxu0 0.0
      %v4594 = vand.u32 %v1754, 4294901760
      %v4595 = vsub.f32 %v1754, %v4594
      %v4596 = vand.u32 %v4595, 4294901760
      %v4597 = vsub.f32 %v4595, %v4596
      %v4598 = vand.u32 %v4597, 4294901760
      %4599 = vmatmul.mubr.f32.gmra.mxu0 %v4598
      %v4600 = vpop.f32.mrf.mxu0
      %v4601 = vadd.f32 %v4235, %v4600
      %v4602 = vpop.f32.mrf.mxu0
      %4603 = vmatprep.mubr.f32.mxu0 0.0
      %v4604 = vand.u32 %v1757, 4294901760
      %v4605 = vsub.f32 %v1757, %v4604
      %v4606 = vand.u32 %v4605, 4294901760
      %v4607 = vsub.f32 %v4605, %v4606
      %v4608 = vand.u32 %v4607, 4294901760
      %4609 = vmatmul.mubr.f32.gmra.mxu0 %v4608
      %v4610 = vpop.f32.mrf.mxu0
      %v4611 = vadd.f32 %v4242, %v4610
      %v4612 = vpop.f32.mrf.mxu0
      %4613 = vdwg.mxu0
      %4614 = vmatprep.subr.mxu0 0.0
      %4615 = vmatpush1.msra.mxu0 0.0
      %4616 = vmatprep.subr.mxu0 0.0
      %4617 = vmatpush1.msra.mxu0 0.0
      %4618 = vmatprep.subr.mxu0 0.0
      %4619 = vmatpush1.msra.mxu0 0.0
      %4620 = vmatprep.subr.mxu0 0.0
      %4621 = vmatpush1.msra.mxu0 0.0
      %4622 = vmatprep.subr.mxu0 0.0
      %4623 = vmatpush1.msra.mxu0 0.0
      %4624 = vmatprep.subr.mxu0 0.0
      %4625 = vmatpush1.msra.mxu0 0.0
      %4626 = vmatprep.subr.mxu0 0.0
      %4627 = vmatpush1.msra.mxu0 0.0
      %4628 = vmatprep.subr.mxu0 0.0
      %4629 = vmatpush1.msra.mxu0 0.0
      %4630 = vmatprep.subr.mxu0 0.0
      %4631 = vmatpush1.msra.mxu0 0.0
      %4632 = vmatprep.subr.mxu0 0.0
      %4633 = vmatpush1.msra.mxu0 0.0
      %4634 = vmatprep.subr.mxu0 0.0
      %4635 = vmatpush1.msra.mxu0 0.0
      %4636 = vmatprep.subr.mxu0 0.0
      %4637 = vmatpush1.msra.mxu0 0.0
      %4638 = vmatprep.subr.mxu0 0.0
      %v4639 = vand.u32 %v1668, 4294901760
      %v4640 = vsub.f32 %v1668, %v4639
      %v4641 = vand.u32 %v4640, 4294901760
      %v4642 = vsub.f32 %v4640, %v4641
      %v4643 = vand.u32 %v4642, 4294901760
      %4644 = vmatpush1.msra.mxu0 %v4643
      %4645 = vmatprep.subr.mxu0 0.0
      %v4646 = vand.u32 %v1667, 4294901760
      %v4647 = vsub.f32 %v1667, %v4646
      %v4648 = vand.u32 %v4647, 4294901760
      %v4649 = vsub.f32 %v4647, %v4648
      %v4650 = vand.u32 %v4649, 4294901760
      %4651 = vmatpush1.msra.mxu0 %v4650
      %4652 = vmatprep.subr.mxu0 0.0
      %v4653 = vand.u32 %v1666, 4294901760
      %v4654 = vsub.f32 %v1666, %v4653
      %v4655 = vand.u32 %v4654, 4294901760
      %v4656 = vsub.f32 %v4654, %v4655
      %v4657 = vand.u32 %v4656, 4294901760
      %4658 = vmatpush1.msra.mxu0 %v4657
      %4659 = vmatprep.subr.mxu0 0.0
      %v4660 = vand.u32 %v1665, 4294901760
      %v4661 = vsub.f32 %v1665, %v4660
      %v4662 = vand.u32 %v4661, 4294901760
      %v4663 = vsub.f32 %v4661, %v4662
      %v4664 = vand.u32 %v4663, 4294901760
      %4665 = vmatpush1.msra.mxu0 %v4664
      %4666 = vmatprep.subr.mxu0 0.0
      %4667 = vmatpush2.msra.mxu0 0.0
      %4668 = vmatprep.subr.mxu0 0.0
      %4669 = vmatpush2.msra.mxu0 0.0
      %4670 = vmatprep.subr.mxu0 0.0
      %4671 = vmatpush2.msra.mxu0 0.0
      %4672 = vmatprep.subr.mxu0 0.0
      %4673 = vmatpush2.msra.mxu0 0.0
      %4674 = vmatprep.subr.mxu0 0.0
      %4675 = vmatpush2.msra.mxu0 0.0
      %4676 = vmatprep.subr.mxu0 0.0
      %4677 = vmatpush2.msra.mxu0 0.0
      %4678 = vmatprep.subr.mxu0 0.0
      %4679 = vmatpush2.msra.mxu0 0.0
      %4680 = vmatprep.subr.mxu0 0.0
      %4681 = vmatpush2.msra.mxu0 0.0
      %4682 = vmatprep.subr.mxu0 0.0
      %4683 = vmatpush2.msra.mxu0 0.0
      %4684 = vmatprep.subr.mxu0 0.0
      %4685 = vmatpush2.msra.mxu0 0.0
      %4686 = vmatprep.subr.mxu0 0.0
      %4687 = vmatpush2.msra.mxu0 0.0
      %4688 = vmatprep.subr.mxu0 0.0
      %4689 = vmatpush2.msra.mxu0 0.0
      %4690 = vmatprep.subr.mxu0 0.0
      %4691 = vmatpush2.msra.mxu0 0.0
      %4692 = vmatprep.subr.mxu0 0.0
      %4693 = vmatpush2.msra.mxu0 0.0
      %4694 = vmatprep.subr.mxu0 0.0
      %4695 = vmatpush2.msra.mxu0 0.0
      %4696 = vmatprep.subr.mxu0 0.0
      %4697 = vmatpush2.msra.mxu0 0.0
      %4698 = vmatprep.mubr.f32.mxu0 0.0
      %v4699 = vand.u32 %v1670, 4294901760
      %4700 = vmatmul.mubr.f32.gmra.mxu0 %v4699
      %v4701 = vpop.f32.mrf.mxu0
      %v4702 = vadd.f32 %v4321, %v4701
      %v4703 = vpop.f32.mrf.mxu0
      %4704 = vmatprep.mubr.f32.mxu0 0.0
      %v4705 = vand.u32 %v1673, 4294901760
      %4706 = vmatmul.mubr.f32.gmra.mxu0 %v4705
      %v4707 = vpop.f32.mrf.mxu0
      %v4708 = vadd.f32 %v4331, %v4707
      %v4709 = vpop.f32.mrf.mxu0
      %4710 = vmatprep.mubr.f32.mxu0 0.0
      %v4711 = vand.u32 %v1676, 4294901760
      %4712 = vmatmul.mubr.f32.gmra.mxu0 %v4711
      %v4713 = vpop.f32.mrf.mxu0
      %v4714 = vadd.f32 %v4341, %v4713
      %v4715 = vpop.f32.mrf.mxu0
      %4716 = vmatprep.mubr.f32.mxu0 0.0
      %v4717 = vand.u32 %v1679, 4294901760
      %4718 = vmatmul.mubr.f32.gmra.mxu0 %v4717
      %v4719 = vpop.f32.mrf.mxu0
      %v4720 = vadd.f32 %v4351, %v4719
      %v4721 = vpop.f32.mrf.mxu0
      %4722 = vmatprep.mubr.f32.mxu0 0.0
      %v4723 = vand.u32 %v1682, 4294901760
      %4724 = vmatmul.mubr.f32.gmra.mxu0 %v4723
      %v4725 = vpop.f32.mrf.mxu0
      %v4726 = vadd.f32 %v4361, %v4725
      %v4727 = vpop.f32.mrf.mxu0
      %4728 = vmatprep.mubr.f32.mxu0 0.0
      %v4729 = vand.u32 %v1685, 4294901760
      %4730 = vmatmul.mubr.f32.gmra.mxu0 %v4729
      %v4731 = vpop.f32.mrf.mxu0
      %v4732 = vadd.f32 %v4371, %v4731
      %v4733 = vpop.f32.mrf.mxu0
      %4734 = vmatprep.mubr.f32.mxu0 0.0
      %v4735 = vand.u32 %v1688, 4294901760
      %4736 = vmatmul.mubr.f32.gmra.mxu0 %v4735
      %v4737 = vpop.f32.mrf.mxu0
      %v4738 = vadd.f32 %v4381, %v4737
      %v4739 = vpop.f32.mrf.mxu0
      %4740 = vmatprep.mubr.f32.mxu0 0.0
      %v4741 = vand.u32 %v1691, 4294901760
      %4742 = vmatmul.mubr.f32.gmra.mxu0 %v4741
      %v4743 = vpop.f32.mrf.mxu0
      %v4744 = vadd.f32 %v4391, %v4743
      %v4745 = vpop.f32.mrf.mxu0
      %4746 = vmatprep.mubr.f32.mxu0 0.0
      %v4747 = vand.u32 %v1694, 4294901760
      %4748 = vmatmul.mubr.f32.gmra.mxu0 %v4747
      %v4749 = vpop.f32.mrf.mxu0
      %v4750 = vadd.f32 %v4401, %v4749
      %v4751 = vpop.f32.mrf.mxu0
      %4752 = vmatprep.mubr.f32.mxu0 0.0
      %v4753 = vand.u32 %v1697, 4294901760
      %4754 = vmatmul.mubr.f32.gmra.mxu0 %v4753
      %v4755 = vpop.f32.mrf.mxu0
      %v4756 = vadd.f32 %v4411, %v4755
      %v4757 = vpop.f32.mrf.mxu0
      %4758 = vmatprep.mubr.f32.mxu0 0.0
      %v4759 = vand.u32 %v1700, 4294901760
      %4760 = vmatmul.mubr.f32.gmra.mxu0 %v4759
      %v4761 = vpop.f32.mrf.mxu0
      %v4762 = vadd.f32 %v4421, %v4761
      %v4763 = vpop.f32.mrf.mxu0
      %4764 = vmatprep.mubr.f32.mxu0 0.0
      %v4765 = vand.u32 %v1703, 4294901760
      %4766 = vmatmul.mubr.f32.gmra.mxu0 %v4765
      %v4767 = vpop.f32.mrf.mxu0
      %v4768 = vadd.f32 %v4431, %v4767
      %v4769 = vpop.f32.mrf.mxu0
      %4770 = vmatprep.mubr.f32.mxu0 0.0
      %v4771 = vand.u32 %v1706, 4294901760
      %4772 = vmatmul.mubr.f32.gmra.mxu0 %v4771
      %v4773 = vpop.f32.mrf.mxu0
      %v4774 = vadd.f32 %v4441, %v4773
      %v4775 = vpop.f32.mrf.mxu0
      %4776 = vmatprep.mubr.f32.mxu0 0.0
      %v4777 = vand.u32 %v1709, 4294901760
      %4778 = vmatmul.mubr.f32.gmra.mxu0 %v4777
      %v4779 = vpop.f32.mrf.mxu0
      %v4780 = vadd.f32 %v4451, %v4779
      %v4781 = vpop.f32.mrf.mxu0
      %4782 = vmatprep.mubr.f32.mxu0 0.0
      %v4783 = vand.u32 %v1712, 4294901760
      %4784 = vmatmul.mubr.f32.gmra.mxu0 %v4783
      %v4785 = vpop.f32.mrf.mxu0
      %v4786 = vadd.f32 %v4461, %v4785
      %v4787 = vpop.f32.mrf.mxu0
      %4788 = vmatprep.mubr.f32.mxu0 0.0
      %v4789 = vand.u32 %v1715, 4294901760
      %4790 = vmatmul.mubr.f32.gmra.mxu0 %v4789
      %v4791 = vpop.f32.mrf.mxu0
      %v4792 = vadd.f32 %v4471, %v4791
      %v4793 = vpop.f32.mrf.mxu0
      %4794 = vmatprep.mubr.f32.mxu0 0.0
      %v4795 = vand.u32 %v1718, 4294901760
      %4796 = vmatmul.mubr.f32.gmra.mxu0 %v4795
      %v4797 = vpop.f32.mrf.mxu0
      %v4798 = vadd.f32 %v4481, %v4797
      %v4799 = vpop.f32.mrf.mxu0
      %4800 = vmatprep.mubr.f32.mxu0 0.0
      %v4801 = vand.u32 %v1721, 4294901760
      %4802 = vmatmul.mubr.f32.gmra.mxu0 %v4801
      %v4803 = vpop.f32.mrf.mxu0
      %v4804 = vadd.f32 %v4491, %v4803
      %v4805 = vpop.f32.mrf.mxu0
      %4806 = vmatprep.mubr.f32.mxu0 0.0
      %v4807 = vand.u32 %v1724, 4294901760
      %4808 = vmatmul.mubr.f32.gmra.mxu0 %v4807
      %v4809 = vpop.f32.mrf.mxu0
      %v4810 = vadd.f32 %v4501, %v4809
      %v4811 = vpop.f32.mrf.mxu0
      %4812 = vmatprep.mubr.f32.mxu0 0.0
      %v4813 = vand.u32 %v1727, 4294901760
      %4814 = vmatmul.mubr.f32.gmra.mxu0 %v4813
      %v4815 = vpop.f32.mrf.mxu0
      %v4816 = vadd.f32 %v4511, %v4815
      %v4817 = vpop.f32.mrf.mxu0
      %4818 = vmatprep.mubr.f32.mxu0 0.0
      %v4819 = vand.u32 %v1730, 4294901760
      %4820 = vmatmul.mubr.f32.gmra.mxu0 %v4819
      %v4821 = vpop.f32.mrf.mxu0
      %v4822 = vadd.f32 %v4521, %v4821
      %v4823 = vpop.f32.mrf.mxu0
      %4824 = vmatprep.mubr.f32.mxu0 0.0
      %v4825 = vand.u32 %v1733, 4294901760
      %4826 = vmatmul.mubr.f32.gmra.mxu0 %v4825
      %v4827 = vpop.f32.mrf.mxu0
      %v4828 = vadd.f32 %v4531, %v4827
      %v4829 = vpop.f32.mrf.mxu0
      %4830 = vmatprep.mubr.f32.mxu0 0.0
      %v4831 = vand.u32 %v1736, 4294901760
      %4832 = vmatmul.mubr.f32.gmra.mxu0 %v4831
      %v4833 = vpop.f32.mrf.mxu0
      %v4834 = vadd.f32 %v4541, %v4833
      %v4835 = vpop.f32.mrf.mxu0
      %4836 = vmatprep.mubr.f32.mxu0 0.0
      %v4837 = vand.u32 %v1739, 4294901760
      %4838 = vmatmul.mubr.f32.gmra.mxu0 %v4837
      %v4839 = vpop.f32.mrf.mxu0
      %v4840 = vadd.f32 %v4551, %v4839
      %v4841 = vpop.f32.mrf.mxu0
      %4842 = vmatprep.mubr.f32.mxu0 0.0
      %v4843 = vand.u32 %v1742, 4294901760
      %4844 = vmatmul.mubr.f32.gmra.mxu0 %v4843
      %v4845 = vpop.f32.mrf.mxu0
      %v4846 = vadd.f32 %v4561, %v4845
      %v4847 = vpop.f32.mrf.mxu0
      %4848 = vmatprep.mubr.f32.mxu0 0.0
      %v4849 = vand.u32 %v1745, 4294901760
      %4850 = vmatmul.mubr.f32.gmra.mxu0 %v4849
      %v4851 = vpop.f32.mrf.mxu0
      %v4852 = vadd.f32 %v4571, %v4851
      %v4853 = vpop.f32.mrf.mxu0
      %4854 = vmatprep.mubr.f32.mxu0 0.0
      %v4855 = vand.u32 %v1748, 4294901760
      %4856 = vmatmul.mubr.f32.gmra.mxu0 %v4855
      %v4857 = vpop.f32.mrf.mxu0
      %v4858 = vadd.f32 %v4581, %v4857
      %v4859 = vpop.f32.mrf.mxu0
      %4860 = vmatprep.mubr.f32.mxu0 0.0
      %v4861 = vand.u32 %v1751, 4294901760
      %4862 = vmatmul.mubr.f32.gmra.mxu0 %v4861
      %v4863 = vpop.f32.mrf.mxu0
      %v4864 = vadd.f32 %v4591, %v4863
      %v4865 = vpop.f32.mrf.mxu0
      %4866 = vmatprep.mubr.f32.mxu0 0.0
      %v4867 = vand.u32 %v1754, 4294901760
      %4868 = vmatmul.mubr.f32.gmra.mxu0 %v4867
      %v4869 = vpop.f32.mrf.mxu0
      %v4870 = vadd.f32 %v4601, %v4869
      %v4871 = vpop.f32.mrf.mxu0
      %4872 = vmatprep.mubr.f32.mxu0 0.0
      %v4873 = vand.u32 %v1757, 4294901760
      %4874 = vmatmul.mubr.f32.gmra.mxu0 %v4873
      %v4875 = vpop.f32.mrf.mxu0
      %v4876 = vadd.f32 %v4611, %v4875
      %v4877 = vpop.f32.mrf.mxu0
      %4878 = vdwg.mxu0
      %4879 = vmatprep.subr.mxu0 0.0
      %4880 = vmatpush1.msra.mxu0 0.0
      %4881 = vmatprep.subr.mxu0 0.0
      %4882 = vmatpush1.msra.mxu0 0.0
      %4883 = vmatprep.subr.mxu0 0.0
      %4884 = vmatpush1.msra.mxu0 0.0
      %4885 = vmatprep.subr.mxu0 0.0
      %4886 = vmatpush1.msra.mxu0 0.0
      %4887 = vmatprep.subr.mxu0 0.0
      %4888 = vmatpush1.msra.mxu0 0.0
      %4889 = vmatprep.subr.mxu0 0.0
      %4890 = vmatpush1.msra.mxu0 0.0
      %4891 = vmatprep.subr.mxu0 0.0
      %4892 = vmatpush1.msra.mxu0 0.0
      %4893 = vmatprep.subr.mxu0 0.0
      %4894 = vmatpush1.msra.mxu0 0.0
      %4895 = vmatprep.subr.mxu0 0.0
      %4896 = vmatpush1.msra.mxu0 0.0
      %4897 = vmatprep.subr.mxu0 0.0
      %4898 = vmatpush1.msra.mxu0 0.0
      %4899 = vmatprep.subr.mxu0 0.0
      %4900 = vmatpush1.msra.mxu0 0.0
      %4901 = vmatprep.subr.mxu0 0.0
      %4902 = vmatpush1.msra.mxu0 0.0
      %4903 = vmatprep.subr.mxu0 0.0
      %v4904 = vand.u32 %v1668, 4294901760
      %v4905 = vsub.f32 %v1668, %v4904
      %4906 = vmatpush1.msra.mxu0 %v4905
      %4907 = vmatprep.subr.mxu0 0.0
      %v4908 = vand.u32 %v1667, 4294901760
      %v4909 = vsub.f32 %v1667, %v4908
      %4910 = vmatpush1.msra.mxu0 %v4909
      %4911 = vmatprep.subr.mxu0 0.0
      %v4912 = vand.u32 %v1666, 4294901760
      %v4913 = vsub.f32 %v1666, %v4912
      %4914 = vmatpush1.msra.mxu0 %v4913
      %4915 = vmatprep.subr.mxu0 0.0
      %v4916 = vand.u32 %v1665, 4294901760
      %v4917 = vsub.f32 %v1665, %v4916
      %4918 = vmatpush1.msra.mxu0 %v4917
      %4919 = vmatprep.subr.mxu0 0.0
      %4920 = vmatpush2.msra.mxu0 0.0
      %4921 = vmatprep.subr.mxu0 0.0
      %4922 = vmatpush2.msra.mxu0 0.0
      %4923 = vmatprep.subr.mxu0 0.0
      %4924 = vmatpush2.msra.mxu0 0.0
      %4925 = vmatprep.subr.mxu0 0.0
      %4926 = vmatpush2.msra.mxu0 0.0
      %4927 = vmatprep.subr.mxu0 0.0
      %4928 = vmatpush2.msra.mxu0 0.0
      %4929 = vmatprep.subr.mxu0 0.0
      %4930 = vmatpush2.msra.mxu0 0.0
      %4931 = vmatprep.subr.mxu0 0.0
      %4932 = vmatpush2.msra.mxu0 0.0
      %4933 = vmatprep.subr.mxu0 0.0
      %4934 = vmatpush2.msra.mxu0 0.0
      %4935 = vmatprep.subr.mxu0 0.0
      %4936 = vmatpush2.msra.mxu0 0.0
      %4937 = vmatprep.subr.mxu0 0.0
      %4938 = vmatpush2.msra.mxu0 0.0
      %4939 = vmatprep.subr.mxu0 0.0
      %4940 = vmatpush2.msra.mxu0 0.0
      %4941 = vmatprep.subr.mxu0 0.0
      %4942 = vmatpush2.msra.mxu0 0.0
      %4943 = vmatprep.subr.mxu0 0.0
      %4944 = vmatpush2.msra.mxu0 0.0
      %4945 = vmatprep.subr.mxu0 0.0
      %4946 = vmatpush2.msra.mxu0 0.0
      %4947 = vmatprep.subr.mxu0 0.0
      %4948 = vmatpush2.msra.mxu0 0.0
      %4949 = vmatprep.subr.mxu0 0.0
      %4950 = vmatpush2.msra.mxu0 0.0
      %4951 = vmatprep.mubr.f32.mxu0 0.0
      %v4952 = vand.u32 %v1670, 4294901760
      %v4953 = vsub.f32 %v1670, %v4952
      %4954 = vmatmul.mubr.f32.gmra.mxu0 %v4953
      %v4955 = vpop.f32.mrf.mxu0
      %v4956 = vadd.f32 %v4702, %v4955
      %v4957 = vpop.f32.mrf.mxu0
      %4958 = vmatprep.mubr.f32.mxu0 0.0
      %v4959 = vand.u32 %v1673, 4294901760
      %v4960 = vsub.f32 %v1673, %v4959
      %4961 = vmatmul.mubr.f32.gmra.mxu0 %v4960
      %v4962 = vpop.f32.mrf.mxu0
      %v4963 = vadd.f32 %v4708, %v4962
      %v4964 = vpop.f32.mrf.mxu0
      %4965 = vmatprep.mubr.f32.mxu0 0.0
      %v4966 = vand.u32 %v1676, 4294901760
      %v4967 = vsub.f32 %v1676, %v4966
      %4968 = vmatmul.mubr.f32.gmra.mxu0 %v4967
      %v4969 = vpop.f32.mrf.mxu0
      %v4970 = vadd.f32 %v4714, %v4969
      %v4971 = vpop.f32.mrf.mxu0
      %4972 = vmatprep.mubr.f32.mxu0 0.0
      %v4973 = vand.u32 %v1679, 4294901760
      %v4974 = vsub.f32 %v1679, %v4973
      %4975 = vmatmul.mubr.f32.gmra.mxu0 %v4974
      %v4976 = vpop.f32.mrf.mxu0
      %v4977 = vadd.f32 %v4720, %v4976
      %v4978 = vpop.f32.mrf.mxu0
      %4979 = vmatprep.mubr.f32.mxu0 0.0
      %v4980 = vand.u32 %v1682, 4294901760
      %v4981 = vsub.f32 %v1682, %v4980
      %4982 = vmatmul.mubr.f32.gmra.mxu0 %v4981
      %v4983 = vpop.f32.mrf.mxu0
      %v4984 = vadd.f32 %v4726, %v4983
      %v4985 = vpop.f32.mrf.mxu0
      %4986 = vmatprep.mubr.f32.mxu0 0.0
      %v4987 = vand.u32 %v1685, 4294901760
      %v4988 = vsub.f32 %v1685, %v4987
      %4989 = vmatmul.mubr.f32.gmra.mxu0 %v4988
      %v4990 = vpop.f32.mrf.mxu0
      %v4991 = vadd.f32 %v4732, %v4990
      %v4992 = vpop.f32.mrf.mxu0
      %4993 = vmatprep.mubr.f32.mxu0 0.0
      %v4994 = vand.u32 %v1688, 4294901760
      %v4995 = vsub.f32 %v1688, %v4994
      %4996 = vmatmul.mubr.f32.gmra.mxu0 %v4995
      %v4997 = vpop.f32.mrf.mxu0
      %v4998 = vadd.f32 %v4738, %v4997
      %v4999 = vpop.f32.mrf.mxu0
      %5000 = vmatprep.mubr.f32.mxu0 0.0
      %v5001 = vand.u32 %v1691, 4294901760
      %v5002 = vsub.f32 %v1691, %v5001
      %5003 = vmatmul.mubr.f32.gmra.mxu0 %v5002
      %v5004 = vpop.f32.mrf.mxu0
      %v5005 = vadd.f32 %v4744, %v5004
      %v5006 = vpop.f32.mrf.mxu0
      %5007 = vmatprep.mubr.f32.mxu0 0.0
      %v5008 = vand.u32 %v1694, 4294901760
      %v5009 = vsub.f32 %v1694, %v5008
      %5010 = vmatmul.mubr.f32.gmra.mxu0 %v5009
      %v5011 = vpop.f32.mrf.mxu0
      %v5012 = vadd.f32 %v4750, %v5011
      %v5013 = vpop.f32.mrf.mxu0
      %5014 = vmatprep.mubr.f32.mxu0 0.0
      %v5015 = vand.u32 %v1697, 4294901760
      %v5016 = vsub.f32 %v1697, %v5015
      %5017 = vmatmul.mubr.f32.gmra.mxu0 %v5016
      %v5018 = vpop.f32.mrf.mxu0
      %v5019 = vadd.f32 %v4756, %v5018
      %v5020 = vpop.f32.mrf.mxu0
      %5021 = vmatprep.mubr.f32.mxu0 0.0
      %v5022 = vand.u32 %v1700, 4294901760
      %v5023 = vsub.f32 %v1700, %v5022
      %5024 = vmatmul.mubr.f32.gmra.mxu0 %v5023
      %v5025 = vpop.f32.mrf.mxu0
      %v5026 = vadd.f32 %v4762, %v5025
      %v5027 = vpop.f32.mrf.mxu0
      %5028 = vmatprep.mubr.f32.mxu0 0.0
      %v5029 = vand.u32 %v1703, 4294901760
      %v5030 = vsub.f32 %v1703, %v5029
      %5031 = vmatmul.mubr.f32.gmra.mxu0 %v5030
      %v5032 = vpop.f32.mrf.mxu0
      %v5033 = vadd.f32 %v4768, %v5032
      %v5034 = vpop.f32.mrf.mxu0
      %5035 = vmatprep.mubr.f32.mxu0 0.0
      %v5036 = vand.u32 %v1706, 4294901760
      %v5037 = vsub.f32 %v1706, %v5036
      %5038 = vmatmul.mubr.f32.gmra.mxu0 %v5037
      %v5039 = vpop.f32.mrf.mxu0
      %v5040 = vadd.f32 %v4774, %v5039
      %v5041 = vpop.f32.mrf.mxu0
      %5042 = vmatprep.mubr.f32.mxu0 0.0
      %v5043 = vand.u32 %v1709, 4294901760
      %v5044 = vsub.f32 %v1709, %v5043
      %5045 = vmatmul.mubr.f32.gmra.mxu0 %v5044
      %v5046 = vpop.f32.mrf.mxu0
      %v5047 = vadd.f32 %v4780, %v5046
      %v5048 = vpop.f32.mrf.mxu0
      %5049 = vmatprep.mubr.f32.mxu0 0.0
      %v5050 = vand.u32 %v1712, 4294901760
      %v5051 = vsub.f32 %v1712, %v5050
      %5052 = vmatmul.mubr.f32.gmra.mxu0 %v5051
      %v5053 = vpop.f32.mrf.mxu0
      %v5054 = vadd.f32 %v4786, %v5053
      %v5055 = vpop.f32.mrf.mxu0
      %5056 = vmatprep.mubr.f32.mxu0 0.0
      %v5057 = vand.u32 %v1715, 4294901760
      %v5058 = vsub.f32 %v1715, %v5057
      %5059 = vmatmul.mubr.f32.gmra.mxu0 %v5058
      %v5060 = vpop.f32.mrf.mxu0
      %v5061 = vadd.f32 %v4792, %v5060
      %v5062 = vpop.f32.mrf.mxu0
      %5063 = vmatprep.mubr.f32.mxu0 0.0
      %v5064 = vand.u32 %v1718, 4294901760
      %v5065 = vsub.f32 %v1718, %v5064
      %5066 = vmatmul.mubr.f32.gmra.mxu0 %v5065
      %v5067 = vpop.f32.mrf.mxu0
      %v5068 = vadd.f32 %v4798, %v5067
      %v5069 = vpop.f32.mrf.mxu0
      %5070 = vmatprep.mubr.f32.mxu0 0.0
      %v5071 = vand.u32 %v1721, 4294901760
      %v5072 = vsub.f32 %v1721, %v5071
      %5073 = vmatmul.mubr.f32.gmra.mxu0 %v5072
      %v5074 = vpop.f32.mrf.mxu0
      %v5075 = vadd.f32 %v4804, %v5074
      %v5076 = vpop.f32.mrf.mxu0
      %5077 = vmatprep.mubr.f32.mxu0 0.0
      %v5078 = vand.u32 %v1724, 4294901760
      %v5079 = vsub.f32 %v1724, %v5078
      %5080 = vmatmul.mubr.f32.gmra.mxu0 %v5079
      %v5081 = vpop.f32.mrf.mxu0
      %v5082 = vadd.f32 %v4810, %v5081
      %v5083 = vpop.f32.mrf.mxu0
      %5084 = vmatprep.mubr.f32.mxu0 0.0
      %v5085 = vand.u32 %v1727, 4294901760
      %v5086 = vsub.f32 %v1727, %v5085
      %5087 = vmatmul.mubr.f32.gmra.mxu0 %v5086
      %v5088 = vpop.f32.mrf.mxu0
      %v5089 = vadd.f32 %v4816, %v5088
      %v5090 = vpop.f32.mrf.mxu0
      %5091 = vmatprep.mubr.f32.mxu0 0.0
      %v5092 = vand.u32 %v1730, 4294901760
      %v5093 = vsub.f32 %v1730, %v5092
      %5094 = vmatmul.mubr.f32.gmra.mxu0 %v5093
      %v5095 = vpop.f32.mrf.mxu0
      %v5096 = vadd.f32 %v4822, %v5095
      %v5097 = vpop.f32.mrf.mxu0
      %5098 = vmatprep.mubr.f32.mxu0 0.0
      %v5099 = vand.u32 %v1733, 4294901760
      %v5100 = vsub.f32 %v1733, %v5099
      %5101 = vmatmul.mubr.f32.gmra.mxu0 %v5100
      %v5102 = vpop.f32.mrf.mxu0
      %v5103 = vadd.f32 %v4828, %v5102
      %v5104 = vpop.f32.mrf.mxu0
      %5105 = vmatprep.mubr.f32.mxu0 0.0
      %v5106 = vand.u32 %v1736, 4294901760
      %v5107 = vsub.f32 %v1736, %v5106
      %5108 = vmatmul.mubr.f32.gmra.mxu0 %v5107
      %v5109 = vpop.f32.mrf.mxu0
      %v5110 = vadd.f32 %v4834, %v5109
      %v5111 = vpop.f32.mrf.mxu0
      %5112 = vmatprep.mubr.f32.mxu0 0.0
      %v5113 = vand.u32 %v1739, 4294901760
      %v5114 = vsub.f32 %v1739, %v5113
      %5115 = vmatmul.mubr.f32.gmra.mxu0 %v5114
      %v5116 = vpop.f32.mrf.mxu0
      %v5117 = vadd.f32 %v4840, %v5116
      %v5118 = vpop.f32.mrf.mxu0
      %5119 = vmatprep.mubr.f32.mxu0 0.0
      %v5120 = vand.u32 %v1742, 4294901760
      %v5121 = vsub.f32 %v1742, %v5120
      %5122 = vmatmul.mubr.f32.gmra.mxu0 %v5121
      %v5123 = vpop.f32.mrf.mxu0
      %v5124 = vadd.f32 %v4846, %v5123
      %v5125 = vpop.f32.mrf.mxu0
      %5126 = vmatprep.mubr.f32.mxu0 0.0
      %v5127 = vand.u32 %v1745, 4294901760
      %v5128 = vsub.f32 %v1745, %v5127
      %5129 = vmatmul.mubr.f32.gmra.mxu0 %v5128
      %v5130 = vpop.f32.mrf.mxu0
      %v5131 = vadd.f32 %v4852, %v5130
      %v5132 = vpop.f32.mrf.mxu0
      %5133 = vmatprep.mubr.f32.mxu0 0.0
      %v5134 = vand.u32 %v1748, 4294901760
      %v5135 = vsub.f32 %v1748, %v5134
      %5136 = vmatmul.mubr.f32.gmra.mxu0 %v5135
      %v5137 = vpop.f32.mrf.mxu0
      %v5138 = vadd.f32 %v4858, %v5137
      %v5139 = vpop.f32.mrf.mxu0
      %5140 = vmatprep.mubr.f32.mxu0 0.0
      %v5141 = vand.u32 %v1751, 4294901760
      %v5142 = vsub.f32 %v1751, %v5141
      %5143 = vmatmul.mubr.f32.gmra.mxu0 %v5142
      %v5144 = vpop.f32.mrf.mxu0
      %v5145 = vadd.f32 %v4864, %v5144
      %v5146 = vpop.f32.mrf.mxu0
      %5147 = vmatprep.mubr.f32.mxu0 0.0
      %v5148 = vand.u32 %v1754, 4294901760
      %v5149 = vsub.f32 %v1754, %v5148
      %5150 = vmatmul.mubr.f32.gmra.mxu0 %v5149
      %v5151 = vpop.f32.mrf.mxu0
      %v5152 = vadd.f32 %v4870, %v5151
      %v5153 = vpop.f32.mrf.mxu0
      %5154 = vmatprep.mubr.f32.mxu0 0.0
      %v5155 = vand.u32 %v1757, 4294901760
      %v5156 = vsub.f32 %v1757, %v5155
      %5157 = vmatmul.mubr.f32.gmra.mxu0 %v5156
      %v5158 = vpop.f32.mrf.mxu0
      %v5159 = vadd.f32 %v4876, %v5158
      %v5160 = vpop.f32.mrf.mxu0
      %5161 = vdwg.mxu0
      %5162 = vmatprep.subr.mxu0 0.0
      %5163 = vmatpush1.msra.mxu0 0.0
      %5164 = vmatprep.subr.mxu0 0.0
      %5165 = vmatpush1.msra.mxu0 0.0
      %5166 = vmatprep.subr.mxu0 0.0
      %5167 = vmatpush1.msra.mxu0 0.0
      %5168 = vmatprep.subr.mxu0 0.0
      %5169 = vmatpush1.msra.mxu0 0.0
      %5170 = vmatprep.subr.mxu0 0.0
      %5171 = vmatpush1.msra.mxu0 0.0
      %5172 = vmatprep.subr.mxu0 0.0
      %5173 = vmatpush1.msra.mxu0 0.0
      %5174 = vmatprep.subr.mxu0 0.0
      %5175 = vmatpush1.msra.mxu0 0.0
      %5176 = vmatprep.subr.mxu0 0.0
      %5177 = vmatpush1.msra.mxu0 0.0
      %5178 = vmatprep.subr.mxu0 0.0
      %5179 = vmatpush1.msra.mxu0 0.0
      %5180 = vmatprep.subr.mxu0 0.0
      %5181 = vmatpush1.msra.mxu0 0.0
      %5182 = vmatprep.subr.mxu0 0.0
      %5183 = vmatpush1.msra.mxu0 0.0
      %5184 = vmatprep.subr.mxu0 0.0
      %5185 = vmatpush1.msra.mxu0 0.0
      %5186 = vmatprep.subr.mxu0 0.0
      %v5187 = vand.u32 %v1668, 4294901760
      %5188 = vmatpush1.msra.mxu0 %v5187
      %5189 = vmatprep.subr.mxu0 0.0
      %v5190 = vand.u32 %v1667, 4294901760
      %5191 = vmatpush1.msra.mxu0 %v5190
      %5192 = vmatprep.subr.mxu0 0.0
      %v5193 = vand.u32 %v1666, 4294901760
      %5194 = vmatpush1.msra.mxu0 %v5193
      %5195 = vmatprep.subr.mxu0 0.0
      %v5196 = vand.u32 %v1665, 4294901760
      %5197 = vmatpush1.msra.mxu0 %v5196
      %5198 = vmatprep.subr.mxu0 0.0
      %5199 = vmatpush2.msra.mxu0 0.0
      %5200 = vmatprep.subr.mxu0 0.0
      %5201 = vmatpush2.msra.mxu0 0.0
      %5202 = vmatprep.subr.mxu0 0.0
      %5203 = vmatpush2.msra.mxu0 0.0
      %5204 = vmatprep.subr.mxu0 0.0
      %5205 = vmatpush2.msra.mxu0 0.0
      %5206 = vmatprep.subr.mxu0 0.0
      %5207 = vmatpush2.msra.mxu0 0.0
      %5208 = vmatprep.subr.mxu0 0.0
      %5209 = vmatpush2.msra.mxu0 0.0
      %5210 = vmatprep.subr.mxu0 0.0
      %5211 = vmatpush2.msra.mxu0 0.0
      %5212 = vmatprep.subr.mxu0 0.0
      %5213 = vmatpush2.msra.mxu0 0.0
      %5214 = vmatprep.subr.mxu0 0.0
      %5215 = vmatpush2.msra.mxu0 0.0
      %5216 = vmatprep.subr.mxu0 0.0
      %5217 = vmatpush2.msra.mxu0 0.0
      %5218 = vmatprep.subr.mxu0 0.0
      %5219 = vmatpush2.msra.mxu0 0.0
      %5220 = vmatprep.subr.mxu0 0.0
      %5221 = vmatpush2.msra.mxu0 0.0
      %5222 = vmatprep.subr.mxu0 0.0
      %5223 = vmatpush2.msra.mxu0 0.0
      %5224 = vmatprep.subr.mxu0 0.0
      %5225 = vmatpush2.msra.mxu0 0.0
      %5226 = vmatprep.subr.mxu0 0.0
      %5227 = vmatpush2.msra.mxu0 0.0
      %5228 = vmatprep.subr.mxu0 0.0
      %5229 = vmatpush2.msra.mxu0 0.0
      %5230 = vmatprep.mubr.f32.mxu0 0.0
      %v5231 = vand.u32 %v1670, 4294901760
      %v5232 = vsub.f32 %v1670, %v5231
      %v5233 = vand.u32 %v5232, 4294901760
      %5234 = vmatmul.mubr.f32.gmra.mxu0 %v5233
      %v5235 = vpop.f32.mrf.mxu0
      %v5236 = vadd.f32 %v4956, %v5235
      %v5237 = vpop.f32.mrf.mxu0
      %5238 = vmatprep.mubr.f32.mxu0 0.0
      %v5239 = vand.u32 %v1673, 4294901760
      %v5240 = vsub.f32 %v1673, %v5239
      %v5241 = vand.u32 %v5240, 4294901760
      %5242 = vmatmul.mubr.f32.gmra.mxu0 %v5241
      %v5243 = vpop.f32.mrf.mxu0
      %v5244 = vadd.f32 %v4963, %v5243
      %v5245 = vpop.f32.mrf.mxu0
      %5246 = vmatprep.mubr.f32.mxu0 0.0
      %v5247 = vand.u32 %v1676, 4294901760
      %v5248 = vsub.f32 %v1676, %v5247
      %v5249 = vand.u32 %v5248, 4294901760
      %5250 = vmatmul.mubr.f32.gmra.mxu0 %v5249
      %v5251 = vpop.f32.mrf.mxu0
      %v5252 = vadd.f32 %v4970, %v5251
      %v5253 = vpop.f32.mrf.mxu0
      %5254 = vmatprep.mubr.f32.mxu0 0.0
      %v5255 = vand.u32 %v1679, 4294901760
      %v5256 = vsub.f32 %v1679, %v5255
      %v5257 = vand.u32 %v5256, 4294901760
      %5258 = vmatmul.mubr.f32.gmra.mxu0 %v5257
      %v5259 = vpop.f32.mrf.mxu0
      %v5260 = vadd.f32 %v4977, %v5259
      %v5261 = vpop.f32.mrf.mxu0
      %5262 = vmatprep.mubr.f32.mxu0 0.0
      %v5263 = vand.u32 %v1682, 4294901760
      %v5264 = vsub.f32 %v1682, %v5263
      %v5265 = vand.u32 %v5264, 4294901760
      %5266 = vmatmul.mubr.f32.gmra.mxu0 %v5265
      %v5267 = vpop.f32.mrf.mxu0
      %v5268 = vadd.f32 %v4984, %v5267
      %v5269 = vpop.f32.mrf.mxu0
      %5270 = vmatprep.mubr.f32.mxu0 0.0
      %v5271 = vand.u32 %v1685, 4294901760
      %v5272 = vsub.f32 %v1685, %v5271
      %v5273 = vand.u32 %v5272, 4294901760
      %5274 = vmatmul.mubr.f32.gmra.mxu0 %v5273
      %v5275 = vpop.f32.mrf.mxu0
      %v5276 = vadd.f32 %v4991, %v5275
      %v5277 = vpop.f32.mrf.mxu0
      %5278 = vmatprep.mubr.f32.mxu0 0.0
      %v5279 = vand.u32 %v1688, 4294901760
      %v5280 = vsub.f32 %v1688, %v5279
      %v5281 = vand.u32 %v5280, 4294901760
      %5282 = vmatmul.mubr.f32.gmra.mxu0 %v5281
      %v5283 = vpop.f32.mrf.mxu0
      %v5284 = vadd.f32 %v4998, %v5283
      %v5285 = vpop.f32.mrf.mxu0
      %5286 = vmatprep.mubr.f32.mxu0 0.0
      %v5287 = vand.u32 %v1691, 4294901760
      %v5288 = vsub.f32 %v1691, %v5287
      %v5289 = vand.u32 %v5288, 4294901760
      %5290 = vmatmul.mubr.f32.gmra.mxu0 %v5289
      %v5291 = vpop.f32.mrf.mxu0
      %v5292 = vadd.f32 %v5005, %v5291
      %v5293 = vpop.f32.mrf.mxu0
      %5294 = vmatprep.mubr.f32.mxu0 0.0
      %v5295 = vand.u32 %v1694, 4294901760
      %v5296 = vsub.f32 %v1694, %v5295
      %v5297 = vand.u32 %v5296, 4294901760
      %5298 = vmatmul.mubr.f32.gmra.mxu0 %v5297
      %v5299 = vpop.f32.mrf.mxu0
      %v5300 = vadd.f32 %v5012, %v5299
      %v5301 = vpop.f32.mrf.mxu0
      %5302 = vmatprep.mubr.f32.mxu0 0.0
      %v5303 = vand.u32 %v1697, 4294901760
      %v5304 = vsub.f32 %v1697, %v5303
      %v5305 = vand.u32 %v5304, 4294901760
      %5306 = vmatmul.mubr.f32.gmra.mxu0 %v5305
      %v5307 = vpop.f32.mrf.mxu0
      %v5308 = vadd.f32 %v5019, %v5307
      %v5309 = vpop.f32.mrf.mxu0
      %5310 = vmatprep.mubr.f32.mxu0 0.0
      %v5311 = vand.u32 %v1700, 4294901760
      %v5312 = vsub.f32 %v1700, %v5311
      %v5313 = vand.u32 %v5312, 4294901760
      %5314 = vmatmul.mubr.f32.gmra.mxu0 %v5313
      %v5315 = vpop.f32.mrf.mxu0
      %v5316 = vadd.f32 %v5026, %v5315
      %v5317 = vpop.f32.mrf.mxu0
      %5318 = vmatprep.mubr.f32.mxu0 0.0
      %v5319 = vand.u32 %v1703, 4294901760
      %v5320 = vsub.f32 %v1703, %v5319
      %v5321 = vand.u32 %v5320, 4294901760
      %5322 = vmatmul.mubr.f32.gmra.mxu0 %v5321
      %v5323 = vpop.f32.mrf.mxu0
      %v5324 = vadd.f32 %v5033, %v5323
      %v5325 = vpop.f32.mrf.mxu0
      %5326 = vmatprep.mubr.f32.mxu0 0.0
      %v5327 = vand.u32 %v1706, 4294901760
      %v5328 = vsub.f32 %v1706, %v5327
      %v5329 = vand.u32 %v5328, 4294901760
      %5330 = vmatmul.mubr.f32.gmra.mxu0 %v5329
      %v5331 = vpop.f32.mrf.mxu0
      %v5332 = vadd.f32 %v5040, %v5331
      %v5333 = vpop.f32.mrf.mxu0
      %5334 = vmatprep.mubr.f32.mxu0 0.0
      %v5335 = vand.u32 %v1709, 4294901760
      %v5336 = vsub.f32 %v1709, %v5335
      %v5337 = vand.u32 %v5336, 4294901760
      %5338 = vmatmul.mubr.f32.gmra.mxu0 %v5337
      %v5339 = vpop.f32.mrf.mxu0
      %v5340 = vadd.f32 %v5047, %v5339
      %v5341 = vpop.f32.mrf.mxu0
      %5342 = vmatprep.mubr.f32.mxu0 0.0
      %v5343 = vand.u32 %v1712, 4294901760
      %v5344 = vsub.f32 %v1712, %v5343
      %v5345 = vand.u32 %v5344, 4294901760
      %5346 = vmatmul.mubr.f32.gmra.mxu0 %v5345
      %v5347 = vpop.f32.mrf.mxu0
      %v5348 = vadd.f32 %v5054, %v5347
      %v5349 = vpop.f32.mrf.mxu0
      %5350 = vmatprep.mubr.f32.mxu0 0.0
      %v5351 = vand.u32 %v1715, 4294901760
      %v5352 = vsub.f32 %v1715, %v5351
      %v5353 = vand.u32 %v5352, 4294901760
      %5354 = vmatmul.mubr.f32.gmra.mxu0 %v5353
      %v5355 = vpop.f32.mrf.mxu0
      %v5356 = vadd.f32 %v5061, %v5355
      %v5357 = vpop.f32.mrf.mxu0
      %5358 = vmatprep.mubr.f32.mxu0 0.0
      %v5359 = vand.u32 %v1718, 4294901760
      %v5360 = vsub.f32 %v1718, %v5359
      %v5361 = vand.u32 %v5360, 4294901760
      %5362 = vmatmul.mubr.f32.gmra.mxu0 %v5361
      %v5363 = vpop.f32.mrf.mxu0
      %v5364 = vadd.f32 %v5068, %v5363
      %v5365 = vpop.f32.mrf.mxu0
      %5366 = vmatprep.mubr.f32.mxu0 0.0
      %v5367 = vand.u32 %v1721, 4294901760
      %v5368 = vsub.f32 %v1721, %v5367
      %v5369 = vand.u32 %v5368, 4294901760
      %5370 = vmatmul.mubr.f32.gmra.mxu0 %v5369
      %v5371 = vpop.f32.mrf.mxu0
      %v5372 = vadd.f32 %v5075, %v5371
      %v5373 = vpop.f32.mrf.mxu0
      %5374 = vmatprep.mubr.f32.mxu0 0.0
      %v5375 = vand.u32 %v1724, 4294901760
      %v5376 = vsub.f32 %v1724, %v5375
      %v5377 = vand.u32 %v5376, 4294901760
      %5378 = vmatmul.mubr.f32.gmra.mxu0 %v5377
      %v5379 = vpop.f32.mrf.mxu0
      %v5380 = vadd.f32 %v5082, %v5379
      %v5381 = vpop.f32.mrf.mxu0
      %5382 = vmatprep.mubr.f32.mxu0 0.0
      %v5383 = vand.u32 %v1727, 4294901760
      %v5384 = vsub.f32 %v1727, %v5383
      %v5385 = vand.u32 %v5384, 4294901760
      %5386 = vmatmul.mubr.f32.gmra.mxu0 %v5385
      %v5387 = vpop.f32.mrf.mxu0
      %v5388 = vadd.f32 %v5089, %v5387
      %v5389 = vpop.f32.mrf.mxu0
      %5390 = vmatprep.mubr.f32.mxu0 0.0
      %v5391 = vand.u32 %v1730, 4294901760
      %v5392 = vsub.f32 %v1730, %v5391
      %v5393 = vand.u32 %v5392, 4294901760
      %5394 = vmatmul.mubr.f32.gmra.mxu0 %v5393
      %v5395 = vpop.f32.mrf.mxu0
      %v5396 = vadd.f32 %v5096, %v5395
      %v5397 = vpop.f32.mrf.mxu0
      %5398 = vmatprep.mubr.f32.mxu0 0.0
      %v5399 = vand.u32 %v1733, 4294901760
      %v5400 = vsub.f32 %v1733, %v5399
      %v5401 = vand.u32 %v5400, 4294901760
      %5402 = vmatmul.mubr.f32.gmra.mxu0 %v5401
      %v5403 = vpop.f32.mrf.mxu0
      %v5404 = vadd.f32 %v5103, %v5403
      %v5405 = vpop.f32.mrf.mxu0
      %5406 = vmatprep.mubr.f32.mxu0 0.0
      %v5407 = vand.u32 %v1736, 4294901760
      %v5408 = vsub.f32 %v1736, %v5407
      %v5409 = vand.u32 %v5408, 4294901760
      %5410 = vmatmul.mubr.f32.gmra.mxu0 %v5409
      %v5411 = vpop.f32.mrf.mxu0
      %v5412 = vadd.f32 %v5110, %v5411
      %v5413 = vpop.f32.mrf.mxu0
      %5414 = vmatprep.mubr.f32.mxu0 0.0
      %v5415 = vand.u32 %v1739, 4294901760
      %v5416 = vsub.f32 %v1739, %v5415
      %v5417 = vand.u32 %v5416, 4294901760
      %5418 = vmatmul.mubr.f32.gmra.mxu0 %v5417
      %v5419 = vpop.f32.mrf.mxu0
      %v5420 = vadd.f32 %v5117, %v5419
      %v5421 = vpop.f32.mrf.mxu0
      %5422 = vmatprep.mubr.f32.mxu0 0.0
      %v5423 = vand.u32 %v1742, 4294901760
      %v5424 = vsub.f32 %v1742, %v5423
      %v5425 = vand.u32 %v5424, 4294901760
      %5426 = vmatmul.mubr.f32.gmra.mxu0 %v5425
      %v5427 = vpop.f32.mrf.mxu0
      %v5428 = vadd.f32 %v5124, %v5427
      %v5429 = vpop.f32.mrf.mxu0
      %5430 = vmatprep.mubr.f32.mxu0 0.0
      %v5431 = vand.u32 %v1745, 4294901760
      %v5432 = vsub.f32 %v1745, %v5431
      %v5433 = vand.u32 %v5432, 4294901760
      %5434 = vmatmul.mubr.f32.gmra.mxu0 %v5433
      %v5435 = vpop.f32.mrf.mxu0
      %v5436 = vadd.f32 %v5131, %v5435
      %v5437 = vpop.f32.mrf.mxu0
      %5438 = vmatprep.mubr.f32.mxu0 0.0
      %v5439 = vand.u32 %v1748, 4294901760
      %v5440 = vsub.f32 %v1748, %v5439
      %v5441 = vand.u32 %v5440, 4294901760
      %5442 = vmatmul.mubr.f32.gmra.mxu0 %v5441
      %v5443 = vpop.f32.mrf.mxu0
      %v5444 = vadd.f32 %v5138, %v5443
      %v5445 = vpop.f32.mrf.mxu0
      %5446 = vmatprep.mubr.f32.mxu0 0.0
      %v5447 = vand.u32 %v1751, 4294901760
      %v5448 = vsub.f32 %v1751, %v5447
      %v5449 = vand.u32 %v5448, 4294901760
      %5450 = vmatmul.mubr.f32.gmra.mxu0 %v5449
      %v5451 = vpop.f32.mrf.mxu0
      %v5452 = vadd.f32 %v5145, %v5451
      %v5453 = vpop.f32.mrf.mxu0
      %5454 = vmatprep.mubr.f32.mxu0 0.0
      %v5455 = vand.u32 %v1754, 4294901760
      %v5456 = vsub.f32 %v1754, %v5455
      %v5457 = vand.u32 %v5456, 4294901760
      %5458 = vmatmul.mubr.f32.gmra.mxu0 %v5457
      %v5459 = vpop.f32.mrf.mxu0
      %v5460 = vadd.f32 %v5152, %v5459
      %v5461 = vpop.f32.mrf.mxu0
      %5462 = vmatprep.mubr.f32.mxu0 0.0
      %v5463 = vand.u32 %v1757, 4294901760
      %v5464 = vsub.f32 %v1757, %v5463
      %v5465 = vand.u32 %v5464, 4294901760
      %5466 = vmatmul.mubr.f32.gmra.mxu0 %v5465
      %v5467 = vpop.f32.mrf.mxu0
      %v5468 = vadd.f32 %v5159, %v5467
      %v5469 = vpop.f32.mrf.mxu0
      %5470 = vdwg.mxu0
      %5471 = vmatprep.subr.mxu0 0.0
      %5472 = vmatpush1.msra.mxu0 0.0
      %5473 = vmatprep.subr.mxu0 0.0
      %5474 = vmatpush1.msra.mxu0 0.0
      %5475 = vmatprep.subr.mxu0 0.0
      %5476 = vmatpush1.msra.mxu0 0.0
      %5477 = vmatprep.subr.mxu0 0.0
      %5478 = vmatpush1.msra.mxu0 0.0
      %5479 = vmatprep.subr.mxu0 0.0
      %5480 = vmatpush1.msra.mxu0 0.0
      %5481 = vmatprep.subr.mxu0 0.0
      %5482 = vmatpush1.msra.mxu0 0.0
      %5483 = vmatprep.subr.mxu0 0.0
      %5484 = vmatpush1.msra.mxu0 0.0
      %5485 = vmatprep.subr.mxu0 0.0
      %5486 = vmatpush1.msra.mxu0 0.0
      %5487 = vmatprep.subr.mxu0 0.0
      %5488 = vmatpush1.msra.mxu0 0.0
      %5489 = vmatprep.subr.mxu0 0.0
      %5490 = vmatpush1.msra.mxu0 0.0
      %5491 = vmatprep.subr.mxu0 0.0
      %5492 = vmatpush1.msra.mxu0 0.0
      %5493 = vmatprep.subr.mxu0 0.0
      %5494 = vmatpush1.msra.mxu0 0.0
      %5495 = vmatprep.subr.mxu0 0.0
      %v5496 = vand.u32 %v1668, 4294901760
      %v5497 = vsub.f32 %v1668, %v5496
      %v5498 = vand.u32 %v5497, 4294901760
      %5499 = vmatpush1.msra.mxu0 %v5498
      %5500 = vmatprep.subr.mxu0 0.0
      %v5501 = vand.u32 %v1667, 4294901760
      %v5502 = vsub.f32 %v1667, %v5501
      %v5503 = vand.u32 %v5502, 4294901760
      %5504 = vmatpush1.msra.mxu0 %v5503
      %5505 = vmatprep.subr.mxu0 0.0
      %v5506 = vand.u32 %v1666, 4294901760
      %v5507 = vsub.f32 %v1666, %v5506
      %v5508 = vand.u32 %v5507, 4294901760
      %5509 = vmatpush1.msra.mxu0 %v5508
      %5510 = vmatprep.subr.mxu0 0.0
      %v5511 = vand.u32 %v1665, 4294901760
      %v5512 = vsub.f32 %v1665, %v5511
      %v5513 = vand.u32 %v5512, 4294901760
      %5514 = vmatpush1.msra.mxu0 %v5513
      %5515 = vmatprep.subr.mxu0 0.0
      %5516 = vmatpush2.msra.mxu0 0.0
      %5517 = vmatprep.subr.mxu0 0.0
      %5518 = vmatpush2.msra.mxu0 0.0
      %5519 = vmatprep.subr.mxu0 0.0
      %5520 = vmatpush2.msra.mxu0 0.0
      %5521 = vmatprep.subr.mxu0 0.0
      %5522 = vmatpush2.msra.mxu0 0.0
      %5523 = vmatprep.subr.mxu0 0.0
      %5524 = vmatpush2.msra.mxu0 0.0
      %5525 = vmatprep.subr.mxu0 0.0
      %5526 = vmatpush2.msra.mxu0 0.0
      %5527 = vmatprep.subr.mxu0 0.0
      %5528 = vmatpush2.msra.mxu0 0.0
      %5529 = vmatprep.subr.mxu0 0.0
      %5530 = vmatpush2.msra.mxu0 0.0
      %5531 = vmatprep.subr.mxu0 0.0
      %5532 = vmatpush2.msra.mxu0 0.0
      %5533 = vmatprep.subr.mxu0 0.0
      %5534 = vmatpush2.msra.mxu0 0.0
      %5535 = vmatprep.subr.mxu0 0.0
      %5536 = vmatpush2.msra.mxu0 0.0
      %5537 = vmatprep.subr.mxu0 0.0
      %5538 = vmatpush2.msra.mxu0 0.0
      %5539 = vmatprep.subr.mxu0 0.0
      %5540 = vmatpush2.msra.mxu0 0.0
      %5541 = vmatprep.subr.mxu0 0.0
      %5542 = vmatpush2.msra.mxu0 0.0
      %5543 = vmatprep.subr.mxu0 0.0
      %5544 = vmatpush2.msra.mxu0 0.0
      %5545 = vmatprep.subr.mxu0 0.0
      %5546 = vmatpush2.msra.mxu0 0.0
      %5547 = vmatprep.mubr.f32.mxu0 0.0
      %v5548 = vand.u32 %v1670, 4294901760
      %5549 = vmatmul.mubr.f32.gmra.mxu0 %v5548
      %v5550 = vpop.f32.mrf.mxu0
      %v5551 = vadd.f32 %v5236, %v5550
      %v5552 = vpop.f32.mrf.mxu0
      %5553 = vmatprep.mubr.f32.mxu0 0.0
      %v5554 = vand.u32 %v1673, 4294901760
      %5555 = vmatmul.mubr.f32.gmra.mxu0 %v5554
      %v5556 = vpop.f32.mrf.mxu0
      %v5557 = vadd.f32 %v5244, %v5556
      %v5558 = vpop.f32.mrf.mxu0
      %5559 = vmatprep.mubr.f32.mxu0 0.0
      %v5560 = vand.u32 %v1676, 4294901760
      %5561 = vmatmul.mubr.f32.gmra.mxu0 %v5560
      %v5562 = vpop.f32.mrf.mxu0
      %v5563 = vadd.f32 %v5252, %v5562
      %v5564 = vpop.f32.mrf.mxu0
      %5565 = vmatprep.mubr.f32.mxu0 0.0
      %v5566 = vand.u32 %v1679, 4294901760
      %5567 = vmatmul.mubr.f32.gmra.mxu0 %v5566
      %v5568 = vpop.f32.mrf.mxu0
      %v5569 = vadd.f32 %v5260, %v5568
      %v5570 = vpop.f32.mrf.mxu0
      %5571 = vmatprep.mubr.f32.mxu0 0.0
      %v5572 = vand.u32 %v1682, 4294901760
      %5573 = vmatmul.mubr.f32.gmra.mxu0 %v5572
      %v5574 = vpop.f32.mrf.mxu0
      %v5575 = vadd.f32 %v5268, %v5574
      %v5576 = vpop.f32.mrf.mxu0
      %5577 = vmatprep.mubr.f32.mxu0 0.0
      %v5578 = vand.u32 %v1685, 4294901760
      %5579 = vmatmul.mubr.f32.gmra.mxu0 %v5578
      %v5580 = vpop.f32.mrf.mxu0
      %v5581 = vadd.f32 %v5276, %v5580
      %v5582 = vpop.f32.mrf.mxu0
      %5583 = vmatprep.mubr.f32.mxu0 0.0
      %v5584 = vand.u32 %v1688, 4294901760
      %5585 = vmatmul.mubr.f32.gmra.mxu0 %v5584
      %v5586 = vpop.f32.mrf.mxu0
      %v5587 = vadd.f32 %v5284, %v5586
      %v5588 = vpop.f32.mrf.mxu0
      %5589 = vmatprep.mubr.f32.mxu0 0.0
      %v5590 = vand.u32 %v1691, 4294901760
      %5591 = vmatmul.mubr.f32.gmra.mxu0 %v5590
      %v5592 = vpop.f32.mrf.mxu0
      %v5593 = vadd.f32 %v5292, %v5592
      %v5594 = vpop.f32.mrf.mxu0
      %5595 = vmatprep.mubr.f32.mxu0 0.0
      %v5596 = vand.u32 %v1694, 4294901760
      %5597 = vmatmul.mubr.f32.gmra.mxu0 %v5596
      %v5598 = vpop.f32.mrf.mxu0
      %v5599 = vadd.f32 %v5300, %v5598
      %v5600 = vpop.f32.mrf.mxu0
      %5601 = vmatprep.mubr.f32.mxu0 0.0
      %v5602 = vand.u32 %v1697, 4294901760
      %5603 = vmatmul.mubr.f32.gmra.mxu0 %v5602
      %v5604 = vpop.f32.mrf.mxu0
      %v5605 = vadd.f32 %v5308, %v5604
      %v5606 = vpop.f32.mrf.mxu0
      %5607 = vmatprep.mubr.f32.mxu0 0.0
      %v5608 = vand.u32 %v1700, 4294901760
      %5609 = vmatmul.mubr.f32.gmra.mxu0 %v5608
      %v5610 = vpop.f32.mrf.mxu0
      %v5611 = vadd.f32 %v5316, %v5610
      %v5612 = vpop.f32.mrf.mxu0
      %5613 = vmatprep.mubr.f32.mxu0 0.0
      %v5614 = vand.u32 %v1703, 4294901760
      %5615 = vmatmul.mubr.f32.gmra.mxu0 %v5614
      %v5616 = vpop.f32.mrf.mxu0
      %v5617 = vadd.f32 %v5324, %v5616
      %v5618 = vpop.f32.mrf.mxu0
      %5619 = vmatprep.mubr.f32.mxu0 0.0
      %v5620 = vand.u32 %v1706, 4294901760
      %5621 = vmatmul.mubr.f32.gmra.mxu0 %v5620
      %v5622 = vpop.f32.mrf.mxu0
      %v5623 = vadd.f32 %v5332, %v5622
      %v5624 = vpop.f32.mrf.mxu0
      %5625 = vmatprep.mubr.f32.mxu0 0.0
      %v5626 = vand.u32 %v1709, 4294901760
      %5627 = vmatmul.mubr.f32.gmra.mxu0 %v5626
      %v5628 = vpop.f32.mrf.mxu0
      %v5629 = vadd.f32 %v5340, %v5628
      %v5630 = vpop.f32.mrf.mxu0
      %5631 = vmatprep.mubr.f32.mxu0 0.0
      %v5632 = vand.u32 %v1712, 4294901760
      %5633 = vmatmul.mubr.f32.gmra.mxu0 %v5632
      %v5634 = vpop.f32.mrf.mxu0
      %v5635 = vadd.f32 %v5348, %v5634
      %v5636 = vpop.f32.mrf.mxu0
      %5637 = vmatprep.mubr.f32.mxu0 0.0
      %v5638 = vand.u32 %v1715, 4294901760
      %5639 = vmatmul.mubr.f32.gmra.mxu0 %v5638
      %v5640 = vpop.f32.mrf.mxu0
      %v5641 = vadd.f32 %v5356, %v5640
      %v5642 = vpop.f32.mrf.mxu0
      %5643 = vmatprep.mubr.f32.mxu0 0.0
      %v5644 = vand.u32 %v1718, 4294901760
      %5645 = vmatmul.mubr.f32.gmra.mxu0 %v5644
      %v5646 = vpop.f32.mrf.mxu0
      %v5647 = vadd.f32 %v5364, %v5646
      %v5648 = vpop.f32.mrf.mxu0
      %5649 = vmatprep.mubr.f32.mxu0 0.0
      %v5650 = vand.u32 %v1721, 4294901760
      %5651 = vmatmul.mubr.f32.gmra.mxu0 %v5650
      %v5652 = vpop.f32.mrf.mxu0
      %v5653 = vadd.f32 %v5372, %v5652
      %v5654 = vpop.f32.mrf.mxu0
      %5655 = vmatprep.mubr.f32.mxu0 0.0
      %v5656 = vand.u32 %v1724, 4294901760
      %5657 = vmatmul.mubr.f32.gmra.mxu0 %v5656
      %v5658 = vpop.f32.mrf.mxu0
      %v5659 = vadd.f32 %v5380, %v5658
      %v5660 = vpop.f32.mrf.mxu0
      %5661 = vmatprep.mubr.f32.mxu0 0.0
      %v5662 = vand.u32 %v1727, 4294901760
      %5663 = vmatmul.mubr.f32.gmra.mxu0 %v5662
      %v5664 = vpop.f32.mrf.mxu0
      %v5665 = vadd.f32 %v5388, %v5664
      %v5666 = vpop.f32.mrf.mxu0
      %5667 = vmatprep.mubr.f32.mxu0 0.0
      %v5668 = vand.u32 %v1730, 4294901760
      %5669 = vmatmul.mubr.f32.gmra.mxu0 %v5668
      %v5670 = vpop.f32.mrf.mxu0
      %v5671 = vadd.f32 %v5396, %v5670
      %v5672 = vpop.f32.mrf.mxu0
      %5673 = vmatprep.mubr.f32.mxu0 0.0
      %v5674 = vand.u32 %v1733, 4294901760
      %5675 = vmatmul.mubr.f32.gmra.mxu0 %v5674
      %v5676 = vpop.f32.mrf.mxu0
      %v5677 = vadd.f32 %v5404, %v5676
      %v5678 = vpop.f32.mrf.mxu0
      %5679 = vmatprep.mubr.f32.mxu0 0.0
      %v5680 = vand.u32 %v1736, 4294901760
      %5681 = vmatmul.mubr.f32.gmra.mxu0 %v5680
      %v5682 = vpop.f32.mrf.mxu0
      %v5683 = vadd.f32 %v5412, %v5682
      %v5684 = vpop.f32.mrf.mxu0
      %5685 = vmatprep.mubr.f32.mxu0 0.0
      %v5686 = vand.u32 %v1739, 4294901760
      %5687 = vmatmul.mubr.f32.gmra.mxu0 %v5686
      %v5688 = vpop.f32.mrf.mxu0
      %v5689 = vadd.f32 %v5420, %v5688
      %v5690 = vpop.f32.mrf.mxu0
      %5691 = vmatprep.mubr.f32.mxu0 0.0
      %v5692 = vand.u32 %v1742, 4294901760
      %5693 = vmatmul.mubr.f32.gmra.mxu0 %v5692
      %v5694 = vpop.f32.mrf.mxu0
      %v5695 = vadd.f32 %v5428, %v5694
      %v5696 = vpop.f32.mrf.mxu0
      %5697 = vmatprep.mubr.f32.mxu0 0.0
      %v5698 = vand.u32 %v1745, 4294901760
      %5699 = vmatmul.mubr.f32.gmra.mxu0 %v5698
      %v5700 = vpop.f32.mrf.mxu0
      %v5701 = vadd.f32 %v5436, %v5700
      %v5702 = vpop.f32.mrf.mxu0
      %5703 = vmatprep.mubr.f32.mxu0 0.0
      %v5704 = vand.u32 %v1748, 4294901760
      %5705 = vmatmul.mubr.f32.gmra.mxu0 %v5704
      %v5706 = vpop.f32.mrf.mxu0
      %v5707 = vadd.f32 %v5444, %v5706
      %v5708 = vpop.f32.mrf.mxu0
      %5709 = vmatprep.mubr.f32.mxu0 0.0
      %v5710 = vand.u32 %v1751, 4294901760
      %5711 = vmatmul.mubr.f32.gmra.mxu0 %v5710
      %v5712 = vpop.f32.mrf.mxu0
      %v5713 = vadd.f32 %v5452, %v5712
      %v5714 = vpop.f32.mrf.mxu0
      %5715 = vmatprep.mubr.f32.mxu0 0.0
      %v5716 = vand.u32 %v1754, 4294901760
      %5717 = vmatmul.mubr.f32.gmra.mxu0 %v5716
      %v5718 = vpop.f32.mrf.mxu0
      %v5719 = vadd.f32 %v5460, %v5718
      %v5720 = vpop.f32.mrf.mxu0
      %5721 = vmatprep.mubr.f32.mxu0 0.0
      %v5722 = vand.u32 %v1757, 4294901760
      %5723 = vmatmul.mubr.f32.gmra.mxu0 %v5722
      %v5724 = vpop.f32.mrf.mxu0
      %v5725 = vadd.f32 %v5468, %v5724
      %v5726 = vpop.f32.mrf.mxu0
      %5727 = vdwg.mxu0
      %5728 = vmatprep.subr.mxu0 0.0
      %5729 = vmatpush1.msra.mxu0 0.0
      %5730 = vmatprep.subr.mxu0 0.0
      %5731 = vmatpush1.msra.mxu0 0.0
      %5732 = vmatprep.subr.mxu0 0.0
      %5733 = vmatpush1.msra.mxu0 0.0
      %5734 = vmatprep.subr.mxu0 0.0
      %5735 = vmatpush1.msra.mxu0 0.0
      %5736 = vmatprep.subr.mxu0 0.0
      %5737 = vmatpush1.msra.mxu0 0.0
      %5738 = vmatprep.subr.mxu0 0.0
      %5739 = vmatpush1.msra.mxu0 0.0
      %5740 = vmatprep.subr.mxu0 0.0
      %5741 = vmatpush1.msra.mxu0 0.0
      %5742 = vmatprep.subr.mxu0 0.0
      %5743 = vmatpush1.msra.mxu0 0.0
      %5744 = vmatprep.subr.mxu0 0.0
      %5745 = vmatpush1.msra.mxu0 0.0
      %5746 = vmatprep.subr.mxu0 0.0
      %5747 = vmatpush1.msra.mxu0 0.0
      %5748 = vmatprep.subr.mxu0 0.0
      %5749 = vmatpush1.msra.mxu0 0.0
      %5750 = vmatprep.subr.mxu0 0.0
      %5751 = vmatpush1.msra.mxu0 0.0
      %5752 = vmatprep.subr.mxu0 0.0
      %v5753 = vand.u32 %v1668, 4294901760
      %5754 = vmatpush1.msra.mxu0 %v5753
      %5755 = vmatprep.subr.mxu0 0.0
      %v5756 = vand.u32 %v1667, 4294901760
      %5757 = vmatpush1.msra.mxu0 %v5756
      %5758 = vmatprep.subr.mxu0 0.0
      %v5759 = vand.u32 %v1666, 4294901760
      %5760 = vmatpush1.msra.mxu0 %v5759
      %5761 = vmatprep.subr.mxu0 0.0
      %v5762 = vand.u32 %v1665, 4294901760
      %5763 = vmatpush1.msra.mxu0 %v5762
      %5764 = vmatprep.subr.mxu0 0.0
      %5765 = vmatpush2.msra.mxu0 0.0
      %5766 = vmatprep.subr.mxu0 0.0
      %5767 = vmatpush2.msra.mxu0 0.0
      %5768 = vmatprep.subr.mxu0 0.0
      %5769 = vmatpush2.msra.mxu0 0.0
      %5770 = vmatprep.subr.mxu0 0.0
      %5771 = vmatpush2.msra.mxu0 0.0
      %5772 = vmatprep.subr.mxu0 0.0
      %5773 = vmatpush2.msra.mxu0 0.0
      %5774 = vmatprep.subr.mxu0 0.0
      %5775 = vmatpush2.msra.mxu0 0.0
      %5776 = vmatprep.subr.mxu0 0.0
      %5777 = vmatpush2.msra.mxu0 0.0
      %5778 = vmatprep.subr.mxu0 0.0
      %5779 = vmatpush2.msra.mxu0 0.0
      %5780 = vmatprep.subr.mxu0 0.0
      %5781 = vmatpush2.msra.mxu0 0.0
      %5782 = vmatprep.subr.mxu0 0.0
      %5783 = vmatpush2.msra.mxu0 0.0
      %5784 = vmatprep.subr.mxu0 0.0
      %5785 = vmatpush2.msra.mxu0 0.0
      %5786 = vmatprep.subr.mxu0 0.0
      %5787 = vmatpush2.msra.mxu0 0.0
      %5788 = vmatprep.subr.mxu0 0.0
      %5789 = vmatpush2.msra.mxu0 0.0
      %5790 = vmatprep.subr.mxu0 0.0
      %5791 = vmatpush2.msra.mxu0 0.0
      %5792 = vmatprep.subr.mxu0 0.0
      %5793 = vmatpush2.msra.mxu0 0.0
      %5794 = vmatprep.subr.mxu0 0.0
      %5795 = vmatpush2.msra.mxu0 0.0
      %5796 = vmatprep.mubr.f32.mxu0 0.0
      %v5797 = vand.u32 %v1670, 4294901760
      %5798 = vmatmul.mubr.f32.gmra.mxu0 %v5797
      %v5799 = vpop.f32.mrf.mxu0
      %v5800 = vadd.f32 %v5551, %v5799
      %v5801 = vpop.f32.mrf.mxu0
      %5802 = vmatprep.mubr.f32.mxu0 0.0
      %v5803 = vand.u32 %v1673, 4294901760
      %5804 = vmatmul.mubr.f32.gmra.mxu0 %v5803
      %v5805 = vpop.f32.mrf.mxu0
      %v5806 = vadd.f32 %v5557, %v5805
      %v5807 = vpop.f32.mrf.mxu0
      %5808 = vmatprep.mubr.f32.mxu0 0.0
      %v5809 = vand.u32 %v1676, 4294901760
      %5810 = vmatmul.mubr.f32.gmra.mxu0 %v5809
      %v5811 = vpop.f32.mrf.mxu0
      %v5812 = vadd.f32 %v5563, %v5811
      %v5813 = vpop.f32.mrf.mxu0
      %5814 = vmatprep.mubr.f32.mxu0 0.0
      %v5815 = vand.u32 %v1679, 4294901760
      %5816 = vmatmul.mubr.f32.gmra.mxu0 %v5815
      %v5817 = vpop.f32.mrf.mxu0
      %v5818 = vadd.f32 %v5569, %v5817
      %v5819 = vpop.f32.mrf.mxu0
      %5820 = vmatprep.mubr.f32.mxu0 0.0
      %v5821 = vand.u32 %v1682, 4294901760
      %5822 = vmatmul.mubr.f32.gmra.mxu0 %v5821
      %v5823 = vpop.f32.mrf.mxu0
      %v5824 = vadd.f32 %v5575, %v5823
      %v5825 = vpop.f32.mrf.mxu0
      %5826 = vmatprep.mubr.f32.mxu0 0.0
      %v5827 = vand.u32 %v1685, 4294901760
      %5828 = vmatmul.mubr.f32.gmra.mxu0 %v5827
      %v5829 = vpop.f32.mrf.mxu0
      %v5830 = vadd.f32 %v5581, %v5829
      %v5831 = vpop.f32.mrf.mxu0
      %5832 = vmatprep.mubr.f32.mxu0 0.0
      %v5833 = vand.u32 %v1688, 4294901760
      %5834 = vmatmul.mubr.f32.gmra.mxu0 %v5833
      %v5835 = vpop.f32.mrf.mxu0
      %v5836 = vadd.f32 %v5587, %v5835
      %v5837 = vpop.f32.mrf.mxu0
      %5838 = vmatprep.mubr.f32.mxu0 0.0
      %v5839 = vand.u32 %v1691, 4294901760
      %5840 = vmatmul.mubr.f32.gmra.mxu0 %v5839
      %v5841 = vpop.f32.mrf.mxu0
      %v5842 = vadd.f32 %v5593, %v5841
      %v5843 = vpop.f32.mrf.mxu0
      %5844 = vmatprep.mubr.f32.mxu0 0.0
      %v5845 = vand.u32 %v1694, 4294901760
      %5846 = vmatmul.mubr.f32.gmra.mxu0 %v5845
      %v5847 = vpop.f32.mrf.mxu0
      %v5848 = vadd.f32 %v5599, %v5847
      %v5849 = vpop.f32.mrf.mxu0
      %5850 = vmatprep.mubr.f32.mxu0 0.0
      %v5851 = vand.u32 %v1697, 4294901760
      %5852 = vmatmul.mubr.f32.gmra.mxu0 %v5851
      %v5853 = vpop.f32.mrf.mxu0
      %v5854 = vadd.f32 %v5605, %v5853
      %v5855 = vpop.f32.mrf.mxu0
      %5856 = vmatprep.mubr.f32.mxu0 0.0
      %v5857 = vand.u32 %v1700, 4294901760
      %5858 = vmatmul.mubr.f32.gmra.mxu0 %v5857
      %v5859 = vpop.f32.mrf.mxu0
      %v5860 = vadd.f32 %v5611, %v5859
      %v5861 = vpop.f32.mrf.mxu0
      %5862 = vmatprep.mubr.f32.mxu0 0.0
      %v5863 = vand.u32 %v1703, 4294901760
      %5864 = vmatmul.mubr.f32.gmra.mxu0 %v5863
      %v5865 = vpop.f32.mrf.mxu0
      %v5866 = vadd.f32 %v5617, %v5865
      %v5867 = vpop.f32.mrf.mxu0
      %5868 = vmatprep.mubr.f32.mxu0 0.0
      %v5869 = vand.u32 %v1706, 4294901760
      %5870 = vmatmul.mubr.f32.gmra.mxu0 %v5869
      %v5871 = vpop.f32.mrf.mxu0
      %v5872 = vadd.f32 %v5623, %v5871
      %v5873 = vpop.f32.mrf.mxu0
      %5874 = vmatprep.mubr.f32.mxu0 0.0
      %v5875 = vand.u32 %v1709, 4294901760
      %5876 = vmatmul.mubr.f32.gmra.mxu0 %v5875
      %v5877 = vpop.f32.mrf.mxu0
      %v5878 = vadd.f32 %v5629, %v5877
      %v5879 = vpop.f32.mrf.mxu0
      %5880 = vmatprep.mubr.f32.mxu0 0.0
      %v5881 = vand.u32 %v1712, 4294901760
      %5882 = vmatmul.mubr.f32.gmra.mxu0 %v5881
      %v5883 = vpop.f32.mrf.mxu0
      %v5884 = vadd.f32 %v5635, %v5883
      %v5885 = vpop.f32.mrf.mxu0
      %5886 = vmatprep.mubr.f32.mxu0 0.0
      %v5887 = vand.u32 %v1715, 4294901760
      %5888 = vmatmul.mubr.f32.gmra.mxu0 %v5887
      %v5889 = vpop.f32.mrf.mxu0
      %v5890 = vadd.f32 %v5641, %v5889
      %v5891 = vpop.f32.mrf.mxu0
      %5892 = vmatprep.mubr.f32.mxu0 0.0
      %v5893 = vand.u32 %v1718, 4294901760
      %5894 = vmatmul.mubr.f32.gmra.mxu0 %v5893
      %v5895 = vpop.f32.mrf.mxu0
      %v5896 = vadd.f32 %v5647, %v5895
      %v5897 = vpop.f32.mrf.mxu0
      %5898 = vmatprep.mubr.f32.mxu0 0.0
      %v5899 = vand.u32 %v1721, 4294901760
      %5900 = vmatmul.mubr.f32.gmra.mxu0 %v5899
      %v5901 = vpop.f32.mrf.mxu0
      %v5902 = vadd.f32 %v5653, %v5901
      %v5903 = vpop.f32.mrf.mxu0
      %5904 = vmatprep.mubr.f32.mxu0 0.0
      %v5905 = vand.u32 %v1724, 4294901760
      %5906 = vmatmul.mubr.f32.gmra.mxu0 %v5905
      %v5907 = vpop.f32.mrf.mxu0
      %v5908 = vadd.f32 %v5659, %v5907
      %v5909 = vpop.f32.mrf.mxu0
      %5910 = vmatprep.mubr.f32.mxu0 0.0
      %v5911 = vand.u32 %v1727, 4294901760
      %5912 = vmatmul.mubr.f32.gmra.mxu0 %v5911
      %v5913 = vpop.f32.mrf.mxu0
      %v5914 = vadd.f32 %v5665, %v5913
      %v5915 = vpop.f32.mrf.mxu0
      %5916 = vmatprep.mubr.f32.mxu0 0.0
      %v5917 = vand.u32 %v1730, 4294901760
      %5918 = vmatmul.mubr.f32.gmra.mxu0 %v5917
      %v5919 = vpop.f32.mrf.mxu0
      %v5920 = vadd.f32 %v5671, %v5919
      %v5921 = vpop.f32.mrf.mxu0
      %5922 = vmatprep.mubr.f32.mxu0 0.0
      %v5923 = vand.u32 %v1733, 4294901760
      %5924 = vmatmul.mubr.f32.gmra.mxu0 %v5923
      %v5925 = vpop.f32.mrf.mxu0
      %v5926 = vadd.f32 %v5677, %v5925
      %v5927 = vpop.f32.mrf.mxu0
      %5928 = vmatprep.mubr.f32.mxu0 0.0
      %v5929 = vand.u32 %v1736, 4294901760
      %5930 = vmatmul.mubr.f32.gmra.mxu0 %v5929
      %v5931 = vpop.f32.mrf.mxu0
      %v5932 = vadd.f32 %v5683, %v5931
      %v5933 = vpop.f32.mrf.mxu0
      %5934 = vmatprep.mubr.f32.mxu0 0.0
      %v5935 = vand.u32 %v1739, 4294901760
      %5936 = vmatmul.mubr.f32.gmra.mxu0 %v5935
      %v5937 = vpop.f32.mrf.mxu0
      %v5938 = vadd.f32 %v5689, %v5937
      %v5939 = vpop.f32.mrf.mxu0
      %5940 = vmatprep.mubr.f32.mxu0 0.0
      %v5941 = vand.u32 %v1742, 4294901760
      %5942 = vmatmul.mubr.f32.gmra.mxu0 %v5941
      %v5943 = vpop.f32.mrf.mxu0
      %v5944 = vadd.f32 %v5695, %v5943
      %v5945 = vpop.f32.mrf.mxu0
      %5946 = vmatprep.mubr.f32.mxu0 0.0
      %v5947 = vand.u32 %v1745, 4294901760
      %5948 = vmatmul.mubr.f32.gmra.mxu0 %v5947
      %v5949 = vpop.f32.mrf.mxu0
      %v5950 = vadd.f32 %v5701, %v5949
      %v5951 = vpop.f32.mrf.mxu0
      %5952 = vmatprep.mubr.f32.mxu0 0.0
      %v5953 = vand.u32 %v1748, 4294901760
      %5954 = vmatmul.mubr.f32.gmra.mxu0 %v5953
      %v5955 = vpop.f32.mrf.mxu0
      %v5956 = vadd.f32 %v5707, %v5955
      %v5957 = vpop.f32.mrf.mxu0
      %5958 = vmatprep.mubr.f32.mxu0 0.0
      %v5959 = vand.u32 %v1751, 4294901760
      %5960 = vmatmul.mubr.f32.gmra.mxu0 %v5959
      %v5961 = vpop.f32.mrf.mxu0
      %v5962 = vadd.f32 %v5713, %v5961
      %v5963 = vpop.f32.mrf.mxu0
      %5964 = vmatprep.mubr.f32.mxu0 0.0
      %v5965 = vand.u32 %v1754, 4294901760
      %5966 = vmatmul.mubr.f32.gmra.mxu0 %v5965
      %v5967 = vpop.f32.mrf.mxu0
      %v5968 = vadd.f32 %v5719, %v5967
      %v5969 = vpop.f32.mrf.mxu0
      %5970 = vmatprep.mubr.f32.mxu0 0.0
      %v5971 = vand.u32 %v1757, 4294901760
      %5972 = vmatmul.mubr.f32.gmra.mxu0 %v5971
      %v5973 = vpop.f32.mrf.mxu0
      %v5974 = vadd.f32 %v5725, %v5973
      %v5975 = vpop.f32.mrf.mxu0
      %5976 = vdwg.mxu0
      %5977 = vst [vmem:[%s234] sm:$0xff] %v5800
      %5978 = vst [vmem:[%s234 + $0x8] sm:$0x7f] %v5806
      %5979 = vst [vmem:[%s234 + $0x10] sm:$0xff] %v5812
      %5980 = vst [vmem:[%s234 + $0x18] sm:$0x7f] %v5818
      %5981 = vst [vmem:[%s234 + $0x20] sm:$0xff] %v5824
      %5982 = vst [vmem:[%s234 + $0x28] sm:$0x7f] %v5830
      %5983 = vst [vmem:[%s234 + $0x30] sm:$0xff] %v5836
      %5984 = vst [vmem:[%s234 + $0x38] sm:$0x7f] %v5842
      %5985 = vst [vmem:[%s234 + $0x40] sm:$0xff] %v5848
      %5986 = vst [vmem:[%s234 + $0x48] sm:$0x7f] %v5854
      %5987 = vst [vmem:[%s234 + $0x50] sm:$0xff] %v5860
      %5988 = vst [vmem:[%s234 + $0x58] sm:$0x7f] %v5866
      %5989 = vst [vmem:[%s234 + $0x60] sm:$0xff] %v5872
      %5990 = vst [vmem:[%s234 + $0x68] sm:$0x7f] %v5878
      %5991 = vst [vmem:[%s234 + $0x70] sm:$0xff] %v5884
      %5992 = vst [vmem:[%s234 + $0x78] sm:$0x7f] %v5890
      %5993 = vst [vmem:[%s234 + $0x80] sm:$0xff] %v5896
      %5994 = vst [vmem:[%s234 + $0x88] sm:$0x7f] %v5902
      %5995 = vst [vmem:[%s234 + $0x90] sm:$0xff] %v5908
      %5996 = vst [vmem:[%s234 + $0x98] sm:$0x7f] %v5914
      %5997 = vst [vmem:[%s234 + $0xa0] sm:$0xff] %v5920
      %5998 = vst [vmem:[%s234 + $0xa8] sm:$0x7f] %v5926
      %5999 = vst [vmem:[%s234 + $0xb0] sm:$0xff] %v5932
      %6000 = vst [vmem:[%s234 + $0xb8] sm:$0x7f] %v5938
      %6001 = vst [vmem:[%s234 + $0xc0] sm:$0xff] %v5944
      %6002 = vst [vmem:[%s234 + $0xc8] sm:$0x7f] %v5950
      %6003 = vst [vmem:[%s234 + $0xd0] sm:$0xff] %v5956
      %6004 = vst [vmem:[%s234 + $0xd8] sm:$0x7f] %v5962
      %6005 = vst [vmem:[%s234 + $0xe0] sm:$0xff] %v5968
      %6006 = vst [vmem:[%s234 + $0xe8] sm:$0x7f] %v5974
      %p6007 = scmp.lt.s32.totalorder %s19, 1
      %s6008 = scalar_select %p6007, %s19, 1
      %p6009 = scmp.lt.s32.totalorder %s20, 0
      %s6010 = scalar_select %p6009, %s20, 0
      %s6011 = smul.addr %s6008, 30
      %s6012 = sadd.s32 %s6010, %s6011
      %s6013 = smul.addr %s6012, 8
      %s6014 = scalar_lea.vmem %s4, %s6013
      // Predicated region
      $region41: #{tpu_custom_call.1} parent=35 // pred_check
        %p6015 = pneg %p141
      $region42: #{tpu_custom_call.1} parent=35 // pred_check_branch
        %6017 = sbr.rel (%p6015) target = $region44
      $region43: #{tpu_custom_call.1} parent=35 // pred_region
        _
      $region44: #{tpu_custom_call.1} parent=35 // pred_fallthru
        _
    $region36: #{tpu_custom_call.1} parent=5 // pred_fallthru
      _
    %p6018 = scmp.le.s32.totalorder 2, %s10
    // Predicated region
    $region45: #{tpu_custom_call.1} parent=5 // pred_check
      %p6019 = pneg %p6018
    $region46: #{tpu_custom_call.1} parent=5 // pred_check_branch
      %6021 = sbr.rel (%p6019) target = $region48
    $region47: #{tpu_custom_call.1} parent=5 // pred_region
      %s6022 = ssub.s32 %s10, 2
      // Predicated region
      $region49: #{tpu_custom_call.1} parent=47 // pred_check
        %p6023 = pneg %p147
      $region50: #{tpu_custom_call.1} parent=47 // pred_check_branch
        %6025 = sbr.rel (%p6023) target = $region52
      $region51: #{tpu_custom_call.1} parent=47 // pred_region
        %p6026 = scmp.lt.s32.totalorder %s21, 1
        %s6027 = scalar_select %p6026, %s21, 1
        %p6028 = scmp.lt.s32.totalorder %s22, 0
        %s6029 = scalar_select %p6028, %s22, 0
        %s6030 = smul.addr %s6027, 30
        %s6031 = sadd.s32 %s6029, %s6030
        %s6032 = smul.addr %s6031, 8
        %s6033 = scalar_lea.vmem %s4, %s6032
      $region52: #{tpu_custom_call.1} parent=47 // pred_fallthru
        _
    $region48: #{tpu_custom_call.1} parent=5 // pred_fallthru
      _
  $region6: #{tpu_custom_call.1} parent=0 // loop_footer
    %s14 = sadd.s32 1, %s10
  $region7: #{tpu_custom_call.1} parent=0 // loop_footer_branch
    %9 = sbr.rel target = $region3
  $region8: #{tpu_custom_call.1} parent=0 // loop_exit
    _

</llo_original>
